<compile_context>
chip_gen: v5e
topology: v5e:2x2
jax: 0.10.0
libtpu: 0.0.40
codegen_flags: <defaults>
</compile_context>

<pallas_src>
import functools

import jax
import jax.numpy as jnp
from jax.experimental import pallas as pl
from jax.experimental.pallas import tpu as pltpu

EPS = 1e-5
SLOPE = 0.1
LANE = 128


def _leaky(x):
    return jnp.where(x > 0, x, SLOPE * x)


def _rup(x, m=LANE):
    return ((x + m - 1) // m) * m


def _pad_to(a, shape):
    pads = [(0, t - s) for s, t in zip(a.shape, shape)]
    if all(p == (0, 0) for p in pads):
        return a
    return jnp.pad(a, pads)


def _vmem_limit_bytes():
    """~3/4 of physical VMEM: ~96 MiB on v5e/v6e (128 MiB), ~48 MiB on v7x."""
    try:
        cap = pltpu.get_tpu_info().vmem_capacity_bytes
    except Exception:
        cap = 64 * 1024 * 1024
    return int(min(cap * 3 // 4, 96 * 1024 * 1024))


def _row_tile(m, target):
    """Row tile for the streaming 1x1 stages (multiple of 16, <= m)."""
    t = max(16, min(int(target), int(m)))
    t -= t % 16
    return max(t, 16)


def _strip_rows(h, target):
    """Largest divisor of h that is <= target (stage-2 spatial strip height)."""
    t = max(1, min(int(target), int(h)))
    while h % t != 0:
        t -= 1
    return t


# --------------------------------------------------------------------------
# Kernels
# --------------------------------------------------------------------------
def stage1_kernel(x_ref, w1_ref, y1_ref, sum_ref, sq_ref, *, m_total):
    """conv1 (1x1) on a row tile + partial per-channel sum / sum-of-squares."""
    tm = x_ref.shape[0]
    feed = w1_ref.dtype
    y = jnp.dot(x_ref[...].astype(feed), w1_ref[...],
                preferred_element_type=jnp.float32)
    y1_ref[...] = y.astype(y1_ref.dtype)
    if m_total % tm != 0:  # static branch: mask padded tail rows out of stats
        row = (pl.program_id(0) * tm
               + jax.lax.broadcasted_iota(jnp.int32, (tm, 1), 0))
        y = jnp.where(row < m_total, y, 0.0)
    sum_ref[...] = jnp.sum(y, axis=0, keepdims=True).reshape(1, 1, -1)
    sq_ref[...] = jnp.sum(y * y, axis=0, keepdims=True).reshape(1, 1, -1)


def stage2_kernel(mid_ref, top_ref, bot_ref, s1_ref, t1_ref, w2_ref,
                  y2_ref, sum_ref, sq_ref):
    """bn1-affine + leaky, 3x3 conv on a row strip as 3 K=3*Pp matmuls."""
    _, tr, W, Pp = mid_ref.shape
    feed = w2_ref.dtype
    r = pl.program_id(1)
    nr = pl.num_programs(1)

    s = s1_ref[...]                                   # (1, Pp) f32
    t = t1_ref[...]

    a_mid = _leaky(mid_ref[...][0].astype(jnp.float32) * s + t)   # (tr,W,Pp)
    a_top = _leaky(top_ref[...][0].astype(jnp.float32) * s + t)   # (1,W,Pp)
    a_bot = _leaky(bot_ref[...][0].astype(jnp.float32) * s + t)   # (1,W,Pp)
    # Halo rows outside the image are zero-padding of the conv2 *input*.
    a_top = a_top * (r > 0).astype(jnp.float32)
    a_bot = a_bot * (r < nr - 1).astype(jnp.float32)

    strip = jnp.concatenate([a_top, a_mid, a_bot], axis=0).astype(feed)
    zcol = jnp.zeros((tr + 2, 1, Pp), feed)
    strip = jnp.concatenate([zcol, strip, zcol], axis=1)          # (tr+2,W+2,Pp)

    acc = jnp.zeros((tr * W, Pp), jnp.float32)
    for dy in range(3):                                           # 3 matmuls,
        slab = strip[dy:dy + tr]                                  # K = 3*Pp
        cols = jnp.concatenate(
            [slab[:, dx:dx + W, :] for dx in range(3)], axis=-1)
        acc = acc + jnp.dot(cols.reshape(tr * W, 3 * Pp), w2_ref[dy],
                            preferred_element_type=jnp.float32)

    y2_ref[...] = acc.reshape(1, tr, W, Pp).astype(y2_ref.dtype)
    sum_ref[...] = jnp.sum(acc, axis=0, keepdims=True).reshape(1, 1, 1, -1)
    sq_ref[...] = jnp.sum(acc * acc, axis=0, keepdims=True).reshape(1, 1, 1, -1)


def stage3_kernel(y2_ref, s2_ref, t2_ref, w3_ref, y3_ref, sum_ref, sq_ref, *,
                  m_total):
    """bn2-affine + leaky, conv3 (1x1) on a row tile + partial stats."""
    tm = y2_ref.shape[0]
    feed = w3_ref.dtype
    a = _leaky(y2_ref[...].astype(jnp.float32) * s2_ref[...] + t2_ref[...])
    y = jnp.dot(a.astype(feed), w3_ref[...], preferred_element_type=jnp.float32)
    y3_ref[...] = y.astype(y3_ref.dtype)
    if m_total % tm != 0:
        row = (pl.program_id(0) * tm
               + jax.lax.broadcasted_iota(jnp.int32, (tm, 1), 0))
        y = jnp.where(row < m_total, y, 0.0)
    sum_ref[...] = jnp.sum(y, axis=0, keepdims=True).reshape(1, 1, -1)
    sq_ref[...] = jnp.sum(y * y, axis=0, keepdims=True).reshape(1, 1, -1)


def stage4_kernel(y3_ref, x_ref, s3_ref, t3_ref, out_ref):
    """bn3-affine + residual + leaky (output aliases the x buffer)."""
    out_ref[...] = _leaky(y3_ref[...].astype(jnp.float32) * s3_ref[...]
                          + t3_ref[...] + x_ref[...])


# --------------------------------------------------------------------------
# Host-side glue
# --------------------------------------------------------------------------
def _bn_affine(ssum, ssq, gamma, beta, count):
    """Combine per-tile (sum, sumsq) partials -> per-channel scale/shift."""
    s = jnp.sum(ssum.reshape(-1, ssum.shape[-1]), axis=0)
    ss = jnp.sum(ssq.reshape(-1, ssq.shape[-1]), axis=0)
    mean = s / count
    var = jnp.maximum(ss / count - mean * mean, 0.0)
    inv = jax.lax.rsqrt(var + EPS)
    scale = gamma[0] * inv
    shift = beta[0] - mean * scale
    return scale.reshape(1, -1), shift.reshape(1, -1)


def bottleneck_forward_nhwc(x_nhwc, params, *, row_tile=None, strip_rows=None,
                            io_dtype=jnp.bfloat16):
    """x_nhwc: (N, H, W, Cin) f32 -> (N, H, W, Cin) f32."""
    N, H, W, Cin = x_nhwc.shape
    P = params["w1"].shape[1]
    Cp, Pp = _rup(Cin), _rup(P)
    M = N * H * W

    vmem_limit = _vmem_limit_bytes()
    cp1 = pltpu.CompilerParams(dimension_semantics=("parallel",),
                               vmem_limit_bytes=vmem_limit)
    cp2 = pltpu.CompilerParams(dimension_semantics=("parallel", "parallel"),
                               vmem_limit_bytes=vmem_limit)

    if row_tile is None:
        # Streaming stages are HBM-bound: big tiles, ~budgeted against VMEM.
        row_tile = max(512, min(4096, vmem_limit // (8 * max(Cp, Pp) * 4)))
    tm = _row_tile(M, row_tile)
    nt = -(-M // tm)

    if strip_rows is None:
        strip_rows = max(8, min(H, (2 * 1024 * 1024) // (W * Pp * 4)))
    tr = _strip_rows(H, strip_rows)
    nr = H // tr

    # NHWC, channels zero-padded to a multiple of 128 lanes. x/out stay f32.
    x2d = _pad_to(x_nhwc.astype(jnp.float32), (N, H, W, Cp)).reshape(M, Cp)

    w1p = _pad_to(params["w1"], (Cp, Pp)).astype(io_dtype)
    w2p = _pad_to(params["w2"], (3, 3, Pp, Pp)).reshape(3, 3 * Pp, Pp)
    w2p = w2p.astype(io_dtype)                       # K order = (dx, p)
    w3p = _pad_to(params["w3"], (Pp, Cp)).astype(io_dtype)
    g1p = _pad_to(params["g1"], (1, Pp)); b1p = _pad_to(params["b1"], (1, Pp))
    g2p = _pad_to(params["g2"], (1, Pp)); b2p = _pad_to(params["b2"], (1, Pp))
    g3p = _pad_to(params["g3"], (1, Cp)); b3p = _pad_to(params["b3"], (1, Cp))

    # ---- stage 1: conv1 + bn1 partial stats ---------------------------------
    y1, s1sum, s1sq = pl.pallas_call(
        functools.partial(stage1_kernel, m_total=M),
        out_shape=(jax.ShapeDtypeStruct((M, Pp), io_dtype),
                   jax.ShapeDtypeStruct((nt, 1, Pp), jnp.float32),
                   jax.ShapeDtypeStruct((nt, 1, Pp), jnp.float32)),
        grid=(nt,),
        in_specs=[pl.BlockSpec((tm, Cp), lambda i: (i, 0)),
                  pl.BlockSpec((Cp, Pp), lambda i: (0, 0))],
        out_specs=(pl.BlockSpec((tm, Pp), lambda i: (i, 0)),
                   pl.BlockSpec((1, 1, Pp), lambda i: (i, 0, 0)),
                   pl.BlockSpec((1, 1, Pp), lambda i: (i, 0, 0))),
        compiler_params=cp1,
    )(x2d, w1p)
    s1, t1 = _bn_affine(s1sum, s1sq, g1p, b1p, M)

    # ---- stage 2: bn1 + leaky + conv2 (3x3, row strips) + bn2 stats ---------
    y1_img = y1.reshape(N, H, W, Pp)
    y2, s2sum, s2sq = pl.pallas_call(
        stage2_kernel,
        out_shape=(jax.ShapeDtypeStruct((N, H, W, Pp), io_dtype),
                   jax.ShapeDtypeStruct((N, nr, 1, Pp), jnp.float32),
                   jax.ShapeDtypeStruct((N, nr, 1, Pp), jnp.float32)),
        grid=(N, nr),
        in_specs=[
            # current strip
            pl.BlockSpec((1, tr, W, Pp), lambda n, r: (n, r, 0, 0)),
            # 1-row halo above / below (clamped; zeroed in-kernel at borders)
            pl.BlockSpec((1, 1, W, Pp),
                         lambda n, r: (n, jnp.maximum(r * tr - 1, 0), 0, 0)),
            pl.BlockSpec((1, 1, W, Pp),
                         lambda n, r: (n, jnp.minimum(r * tr + tr, H - 1), 0, 0)),
            pl.BlockSpec((1, Pp), lambda n, r: (0, 0)),
            pl.BlockSpec((1, Pp), lambda n, r: (0, 0)),
            pl.BlockSpec((3, 3 * Pp, Pp), lambda n, r: (0, 0, 0)),
        ],
        out_specs=(pl.BlockSpec((1, tr, W, Pp), lambda n, r: (n, r, 0, 0)),
                   pl.BlockSpec((1, 1, 1, Pp), lambda n, r: (n, r, 0, 0)),
                   pl.BlockSpec((1, 1, 1, Pp), lambda n, r: (n, r, 0, 0))),
        compiler_params=cp2,
    )(y1_img, y1_img, y1_img, s1, t1, w2p)
    s2, t2 = _bn_affine(s2sum, s2sq, g2p, b2p, M)

    # ---- stage 3: bn2 + leaky + conv3 + bn3 partial stats -------------------
    y2_2d = y2.reshape(M, Pp)
    y3, s3sum, s3sq = pl.pallas_call(
        functools.partial(stage3_kernel, m_total=M),
        out_shape=(jax.ShapeDtypeStruct((M, Cp), io_dtype),
                   jax.ShapeDtypeStruct((nt, 1, Cp), jnp.float32),
                   jax.ShapeDtypeStruct((nt, 1, Cp), jnp.float32)),
        grid=(nt,),
        in_specs=[pl.BlockSpec((tm, Pp), lambda i: (i, 0)),
                  pl.BlockSpec((1, Pp), lambda i: (0, 0)),
                  pl.BlockSpec((1, Pp), lambda i: (0, 0)),
                  pl.BlockSpec((Pp, Cp), lambda i: (0, 0))],
        out_specs=(pl.BlockSpec((tm, Cp), lambda i: (i, 0)),
                   pl.BlockSpec((1, 1, Cp), lambda i: (i, 0, 0)),
                   pl.BlockSpec((1, 1, Cp), lambda i: (i, 0, 0))),
        compiler_params=cp1,
    )(y2_2d, s2, t2, w3p)
    s3, t3 = _bn_affine(s3sum, s3sq, g3p, b3p, M)

    # ---- stage 4: bn3 + residual + leaky (x2d aliased to the output) --------
    # x2d is always an internally derived temp here; if a caller's array were
    # passed directly XLA would insert a copy to honor the alias (safe).
    out2d = pl.pallas_call(
        stage4_kernel,
        out_shape=jax.ShapeDtypeStruct((M, Cp), jnp.float32),
        grid=(nt,),
        in_specs=[pl.BlockSpec((tm, Cp), lambda i: (i, 0)),
                  pl.BlockSpec((tm, Cp), lambda i: (i, 0)),
                  pl.BlockSpec((1, Cp), lambda i: (0, 0)),
                  pl.BlockSpec((1, Cp), lambda i: (0, 0))],
        out_specs=pl.BlockSpec((tm, Cp), lambda i: (i, 0)),
        input_output_aliases={1: 0},
        compiler_params=cp1,
    )(y3, x2d, s3, t3)

    out = out2d.reshape(N, H, W, Cp)
    if Cp != Cin:
        out = out[..., :Cin]
    return out


def bottleneck_forward(x_nchw, params, **kwargs):
    """Torch-layout wrapper: (N, Cin, H, W) f32 -> (N, Cin, H, W) f32."""
    x_nhwc = jnp.transpose(x_nchw, (0, 2, 3, 1))
    out = bottleneck_forward_nhwc(x_nhwc, params, **kwargs)
    return jnp.transpose(out, (0, 3, 1, 2))


# --------------------------------------------------------------------------
# Params + plain-JAX reference
# --------------------------------------------------------------------------
def make_params(key, inplanes, planes):
    ks = jax.random.split(key, 9)
    return {
        "w1": 0.1 * jax.random.normal(ks[0], (inplanes, planes), jnp.float32),
        "w2": 0.1 * jax.random.normal(ks[1], (3, 3, planes, planes), jnp.float32),
        "w3": 0.1 * jax.random.normal(ks[2], (planes, inplanes), jnp.float32),
        "g1": 1.0 + 0.1 * jax.random.normal(ks[3], (1, planes), jnp.float32),
        "b1": 0.1 * jax.random.normal(ks[4], (1, planes), jnp.float32),
        "g2": 1.0 + 0.1 * jax.random.normal(ks[5], (1, planes), jnp.float32),
        "b2": 0.1 * jax.random.normal(ks[6], (1, planes), jnp.float32),
        "g3": 1.0 + 0.1 * jax.random.normal(ks[7], (1, inplanes), jnp.float32),
        "b3": 0.1 * jax.random.normal(ks[8], (1, inplanes), jnp.float32),
    }


def reference_nhwc(x, p):
    """Plain-JAX f32 reference in NHWC, same math as the torch forward."""
    def bn(t, g, b):
        mean = t.mean(axis=(0, 1, 2), keepdims=True)
        var = ((t - mean) ** 2).mean(axis=(0, 1, 2), keepdims=True)
        return (t - mean) * jax.lax.rsqrt(var + EPS) * g[0] + b[0]

    N, H, W, Cin = x.shape
    o = jnp.einsum("nhwc,cp->nhwp", x, p["w1"])
    o = _leaky(bn(o, p["g1"], p["b1"]))
    op = jnp.pad(o, ((0, 0), (1, 1), (1, 1), (0, 0)))
    o2 = jnp.zeros_like(o)
    for dy in range(3):
        for dx in range(3):
            o2 = o2 + jnp.einsum("nhwc,cp->nhwp",
                                 op[:, dy:dy + H, dx:dx + W, :], p["w2"][dy, dx])
    o2 = _leaky(bn(o2, p["g2"], p["b2"]))
    o3 = jnp.einsum("nhwc,cp->nhwp", o2, p["w3"])
    o3 = bn(o3, p["g3"], p["b3"]) + x
    return _leaky(o3)


if __name__ == "__main__":
    N, INPLANES, PLANES, H, W = 2, 8, 4, 16, 16

    key = jax.random.PRNGKey(0)
    kx, kp = jax.random.split(key)
    x_nchw = jax.random.normal(kx, (N, INPLANES, H, W), jnp.float32)
    params = make_params(kp, INPLANES, PLANES)

    ref = reference_nhwc(jnp.transpose(x_nchw, (0, 2, 3, 1)), params)
    ref = jnp.transpose(ref, (0, 3, 1, 2))

    # 1) f32 datapath: tight numerical check against the plain-JAX reference.
    #    row_tile=128 -> 4 row tiles; strip_rows=8 -> 2 strips per image.
    fwd32 = jax.jit(lambda t: bottleneck_forward(
        t, params, row_tile=128, strip_rows=8, io_dtype=jnp.float32))
    out32 = jax.block_until_ready(fwd32(x_nchw))
    assert out32.shape == x_nchw.shape
    err32 = float(jnp.max(jnp.abs(out32 - ref)))
    assert err32 < 2e-3, err32

    # 2) bf16 intermediates / MXU feed (the performance configuration).
    #    row_tile=96 deliberately does NOT divide M=512 so the masked-tail
    #    path is exercised; strip_rows=4 -> 4 strips per image.  Looser
    #    tolerance only reflects the bf16 storage of y1/y2/y3.
    fwd16 = jax.jit(lambda t: bottleneck_forward(
        t, params, row_tile=96, strip_rows=4, io_dtype=jnp.bfloat16))
    out16 = jax.block_until_ready(fwd16(x_nchw))
    assert out16.shape == x_nchw.shape
    err16 = float(jnp.max(jnp.abs(out16 - ref)))
    assert err16 < 1e-1, err16

    print("KERNEL_OK")
</pallas_src>

<mosaic_0001>
module attributes {stable_mosaic.version = 11 : i64} {
  func.func @stage1_kernel(%arg0: i32, %arg1: memref<128x128xf32, #tpu.memory_space<vmem>>, %arg2: memref<128x128xf32, #tpu.memory_space<vmem>>, %arg3: memref<128x128xf32, #tpu.memory_space<vmem>>, %arg4: memref<1x1x128xf32, #tpu.memory_space<vmem>>, %arg5: memref<1x1x128xf32, #tpu.memory_space<vmem>>) attributes {dimension_semantics = [#tpu.dimension_semantics<parallel>], iteration_bounds = array<i64: 4>, scalar_prefetch = 0 : i64, scratch_operands = 0 : i64, tpu.core_type = #tpu.core_type<tc>, window_params = [{transform_indices = @transform_0, window_bounds = array<i64: 128, 128>}, {pipeline_mode = #tpu.pipeline_mode<synchronous>, transform_indices = @transform_1, window_bounds = array<i64: 128, 128>}, {transform_indices = @transform_2, window_bounds = array<i64: 128, 128>}, {transform_indices = @transform_3, window_bounds = array<i64: 1, 1, 128>}, {transform_indices = @transform_4, window_bounds = array<i64: 1, 1, 128>}]} {
    %c0 = arith.constant 0 : index
    %c0_0 = arith.constant 0 : index
    %0 = vector.load %arg1[%c0, %c0_0] : memref<128x128xf32, #tpu.memory_space<vmem>>, vector<128x128xf32>
    %c0_1 = arith.constant 0 : index
    %c0_2 = arith.constant 0 : index
    %1 = vector.load %arg2[%c0_1, %c0_2] : memref<128x128xf32, #tpu.memory_space<vmem>>, vector<128x128xf32>
    %cst = arith.constant dense<0.000000e+00> : vector<128x128xf32>
    %2 = tpu.matmul %0, %1, %cst {dimension_numbers = #tpu.dot_dimension_numbers<[1], [0], [0], [1], [0, 0, 1, 1], [], []>} : vector<128x128xf32>, vector<128x128xf32>, vector<128x128xf32> -> vector<128x128xf32>
    %c0_3 = arith.constant 0 : index
    %c0_4 = arith.constant 0 : index
    %3 = vector.load %arg3[%c0_3, %c0_4] : memref<128x128xf32, #tpu.memory_space<vmem>>, vector<128x128xf32>
    tpu.vector_store %arg3[%c0_3, %c0_4], %2 {strides = array<i32>} : memref<128x128xf32, #tpu.memory_space<vmem>>, vector<128x128xf32>,
    %cst_5 = arith.constant dense<0.000000e+00> : vector<128xf32>
    %4 = vector.multi_reduction <add>, %2, %cst_5 [0] : vector<128x128xf32> to vector<128xf32>
    %5 = vector.shape_cast %4 : vector<128xf32> to vector<1x128xf32>
    %6 = vector.shape_cast %5 : vector<1x128xf32> to vector<1x1x128xf32>
    %c0_6 = arith.constant 0 : index
    %c0_7 = arith.constant 0 : index
    %c0_8 = arith.constant 0 : index
    %7 = vector.load %arg4[%c0_6, %c0_7, %c0_8] : memref<1x1x128xf32, #tpu.memory_space<vmem>>, vector<1x1x128xf32>
    tpu.vector_store %arg4[%c0_6, %c0_7, %c0_8], %6 {strides = array<i32>} : memref<1x1x128xf32, #tpu.memory_space<vmem>>, vector<1x1x128xf32>,
    %8 = arith.mulf %2, %2 : vector<128x128xf32>
    %cst_9 = arith.constant dense<0.000000e+00> : vector<128xf32>
    %9 = vector.multi_reduction <add>, %8, %cst_9 [0] : vector<128x128xf32> to vector<128xf32>
    %10 = vector.shape_cast %9 : vector<128xf32> to vector<1x128xf32>
    %11 = vector.shape_cast %10 : vector<1x128xf32> to vector<1x1x128xf32>
    %c0_10 = arith.constant 0 : index
    %c0_11 = arith.constant 0 : index
    %c0_12 = arith.constant 0 : index
    %12 = vector.load %arg5[%c0_10, %c0_11, %c0_12] : memref<1x1x128xf32, #tpu.memory_space<vmem>>, vector<1x1x128xf32>
    tpu.vector_store %arg5[%c0_10, %c0_11, %c0_12], %11 {strides = array<i32>} : memref<1x1x128xf32, #tpu.memory_space<vmem>>, vector<1x1x128xf32>,
    return
  }
  func.func @transform_0(%arg0: i32) -> (i32, i32) {
    %c0_i32 = arith.constant 0 : i32
    %c0_i32_0 = arith.constant 0 : i32
    return %arg0, %c0_i32 : i32, i32
  }
  func.func @transform_1(%arg0: i32) -> (i32, i32) {
    %c0_i32 = arith.constant 0 : i32
    %c0_i32_0 = arith.constant 0 : i32
    %c0_i32_1 = arith.constant 0 : i32
    return %c0_i32, %c0_i32_0 : i32, i32
  }
  func.func @transform_2(%arg0: i32) -> (i32, i32) {
    %c0_i32 = arith.constant 0 : i32
    %c0_i32_0 = arith.constant 0 : i32
    return %arg0, %c0_i32 : i32, i32
  }
  func.func @transform_3(%arg0: i32) -> (i32, i32, i32) {
    %c0_i32 = arith.constant 0 : i32
    %c0_i32_0 = arith.constant 0 : i32
    %c0_i32_1 = arith.constant 0 : i32
    return %arg0, %c0_i32, %c0_i32_0 : i32, i32, i32
  }
  func.func @transform_4(%arg0: i32) -> (i32, i32, i32) {
    %c0_i32 = arith.constant 0 : i32
    %c0_i32_0 = arith.constant 0 : i32
    %c0_i32_1 = arith.constant 0 : i32
    return %arg0, %c0_i32, %c0_i32_0 : i32, i32, i32
  }
}

module attributes {stable_mosaic.version = 11 : i64} {
  func.func @stage3_kernel(%arg0: i32, %arg1: memref<128x128xf32, #tpu.memory_space<vmem>>, %arg2: memref<1x128xf32, #tpu.memory_space<vmem>>, %arg3: memref<1x128xf32, #tpu.memory_space<vmem>>, %arg4: memref<128x128xf32, #tpu.memory_space<vmem>>, %arg5: memref<128x128xf32, #tpu.memory_space<vmem>>, %arg6: memref<1x1x128xf32, #tpu.memory_space<vmem>>, %arg7: memref<1x1x128xf32, #tpu.memory_space<vmem>>) attributes {dimension_semantics = [#tpu.dimension_semantics<parallel>], iteration_bounds = array<i64: 4>, scalar_prefetch = 0 : i64, scratch_operands = 0 : i64, tpu.core_type = #tpu.core_type<tc>, window_params = [{transform_indices = @transform_0, window_bounds = array<i64: 128, 128>}, {pipeline_mode = #tpu.pipeline_mode<synchronous>, transform_indices = @transform_1, window_bounds = array<i64: 1, 128>}, {pipeline_mode = #tpu.pipeline_mode<synchronous>, transform_indices = @transform_2, window_bounds = array<i64: 1, 128>}, {pipeline_mode = #tpu.pipeline_mode<synchronous>, transform_indices = @transform_3, window_bounds = array<i64: 128, 128>}, {transform_indices = @transform_4, window_bounds = array<i64: 128, 128>}, {transform_indices = @transform_5, window_bounds = array<i64: 1, 1, 128>}, {transform_indices = @transform_6, window_bounds = array<i64: 1, 1, 128>}]} {
    %c0 = arith.constant 0 : index
    %c0_0 = arith.constant 0 : index
    %0 = vector.load %arg1[%c0, %c0_0] : memref<128x128xf32, #tpu.memory_space<vmem>>, vector<128x128xf32>
    %c0_1 = arith.constant 0 : index
    %c0_2 = arith.constant 0 : index
    %1 = vector.load %arg2[%c0_1, %c0_2] : memref<1x128xf32, #tpu.memory_space<vmem>>, vector<1x128xf32>
    %2 = vector.broadcast %1 : vector<1x128xf32> to vector<128x128xf32>
    %3 = arith.mulf %0, %2 : vector<128x128xf32>
    %c0_3 = arith.constant 0 : index
    %c0_4 = arith.constant 0 : index
    %4 = vector.load %arg3[%c0_3, %c0_4] : memref<1x128xf32, #tpu.memory_space<vmem>>, vector<1x128xf32>
    %5 = vector.broadcast %4 : vector<1x128xf32> to vector<128x128xf32>
    %6 = arith.addf %3, %5 : vector<128x128xf32>
    %cst = arith.constant 0.000000e+00 : f32
    %7 = vector.broadcast %cst : f32 to vector<128x128xf32>
    %8 = arith.cmpf ogt, %6, %7 : vector<128x128xf32>
    %cst_5 = arith.constant 1.000000e-01 : f32
    %9 = vector.broadcast %cst_5 : f32 to vector<128x128xf32>
    %10 = arith.mulf %9, %6 : vector<128x128xf32>
    %11 = arith.select %8, %6, %10 : vector<128x128xi1>, vector<128x128xf32>
    %c0_6 = arith.constant 0 : index
    %c0_7 = arith.constant 0 : index
    %12 = vector.load %arg4[%c0_6, %c0_7] : memref<128x128xf32, #tpu.memory_space<vmem>>, vector<128x128xf32>
    %cst_8 = arith.constant dense<0.000000e+00> : vector<128x128xf32>
    %13 = tpu.matmul %11, %12, %cst_8 {dimension_numbers = #tpu.dot_dimension_numbers<[1], [0], [0], [1], [0, 0, 1, 1], [], []>} : vector<128x128xf32>, vector<128x128xf32>, vector<128x128xf32> -> vector<128x128xf32>
    %c0_9 = arith.constant 0 : index
    %c0_10 = arith.constant 0 : index
    %14 = vector.load %arg5[%c0_9, %c0_10] : memref<128x128xf32, #tpu.memory_space<vmem>>, vector<128x128xf32>
    tpu.vector_store %arg5[%c0_9, %c0_10], %13 {strides = array<i32>} : memref<128x128xf32, #tpu.memory_space<vmem>>, vector<128x128xf32>,
    %cst_11 = arith.constant dense<0.000000e+00> : vector<128xf32>
    %15 = vector.multi_reduction <add>, %13, %cst_11 [0] : vector<128x128xf32> to vector<128xf32>
    %16 = vector.shape_cast %15 : vector<128xf32> to vector<1x128xf32>
    %17 = vector.shape_cast %16 : vector<1x128xf32> to vector<1x1x128xf32>
    %c0_12 = arith.constant 0 : index
    %c0_13 = arith.constant 0 : index
    %c0_14 = arith.constant 0 : index
    %18 = vector.load %arg6[%c0_12, %c0_13, %c0_14] : memref<1x1x128xf32, #tpu.memory_space<vmem>>, vector<1x1x128xf32>
    tpu.vector_store %arg6[%c0_12, %c0_13, %c0_14], %17 {strides = array<i32>} : memref<1x1x128xf32, #tpu.memory_space<vmem>>, vector<1x1x128xf32>,
    %19 = arith.mulf %13, %13 : vector<128x128xf32>
    %cst_15 = arith.constant dense<0.000000e+00> : vector<128xf32>
    %20 = vector.multi_reduction <add>, %19, %cst_15 [0] : vector<128x128xf32> to vector<128xf32>
    %21 = vector.shape_cast %20 : vector<128xf32> to vector<1x128xf32>
    %22 = vector.shape_cast %21 : vector<1x128xf32> to vector<1x1x128xf32>
    %c0_16 = arith.constant 0 : index
    %c0_17 = arith.constant 0 : index
    %c0_18 = arith.constant 0 : index
    %23 = vector.load %arg7[%c0_16, %c0_17, %c0_18] : memref<1x1x128xf32, #tpu.memory_space<vmem>>, vector<1x1x128xf32>
    tpu.vector_store %arg7[%c0_16, %c0_17, %c0_18], %22 {strides = array<i32>} : memref<1x1x128xf32, #tpu.memory_space<vmem>>, vector<1x1x128xf32>,
    return
  }
  func.func @transform_0(%arg0: i32) -> (i32, i32) {
    %c0_i32 = arith.constant 0 : i32
    %c0_i32_0 = arith.constant 0 : i32
    return %arg0, %c0_i32 : i32, i32
  }
  func.func @transform_1(%arg0: i32) -> (i32, i32) {
    %c0_i32 = arith.constant 0 : i32
    %c0_i32_0 = arith.constant 0 : i32
    %c0_i32_1 = arith.constant 0 : i32
    return %c0_i32, %c0_i32_0 : i32, i32
  }
  func.func @transform_2(%arg0: i32) -> (i32, i32) {
    %c0_i32 = arith.constant 0 : i32
    %c0_i32_0 = arith.constant 0 : i32
    %c0_i32_1 = arith.constant 0 : i32
    return %c0_i32, %c0_i32_0 : i32, i32
  }
  func.func @transform_3(%arg0: i32) -> (i32, i32) {
    %c0_i32 = arith.constant 0 : i32
    %c0_i32_0 = arith.constant 0 : i32
    %c0_i32_1 = arith.constant 0 : i32
    return %c0_i32, %c0_i32_0 : i32, i32
  }
  func.func @transform_4(%arg0: i32) -> (i32, i32) {
    %c0_i32 = arith.constant 0 : i32
    %c0_i32_0 = arith.constant 0 : i32
    return %arg0, %c0_i32 : i32, i32
  }
  func.func @transform_5(%arg0: i32) -> (i32, i32, i32) {
    %c0_i32 = arith.constant 0 : i32
    %c0_i32_0 = arith.constant 0 : i32
    %c0_i32_1 = arith.constant 0 : i32
    return %arg0, %c0_i32, %c0_i32_0 : i32, i32, i32
  }
  func.func @transform_6(%arg0: i32) -> (i32, i32, i32) {
    %c0_i32 = arith.constant 0 : i32
    %c0_i32_0 = arith.constant 0 : i32
    %c0_i32_1 = arith.constant 0 : i32
    return %arg0, %c0_i32, %c0_i32_0 : i32, i32, i32
  }
}

module attributes {stable_mosaic.version = 11 : i64} {
  func.func @stage4_kernel(%arg0: i32, %arg1: memref<128x128xf32, #tpu.memory_space<vmem>>, %arg2: memref<128x128xf32, #tpu.memory_space<vmem>>, %arg3: memref<1x128xf32, #tpu.memory_space<vmem>>, %arg4: memref<1x128xf32, #tpu.memory_space<vmem>>, %arg5: memref<128x128xf32, #tpu.memory_space<vmem>>) attributes {dimension_semantics = [#tpu.dimension_semantics<parallel>], iteration_bounds = array<i64: 4>, scalar_prefetch = 0 : i64, scratch_operands = 0 : i64, tpu.core_type = #tpu.core_type<tc>, window_params = [{transform_indices = @transform_0, window_bounds = array<i64: 128, 128>}, {transform_indices = @transform_1, window_bounds = array<i64: 128, 128>}, {pipeline_mode = #tpu.pipeline_mode<synchronous>, transform_indices = @transform_2, window_bounds = array<i64: 1, 128>}, {pipeline_mode = #tpu.pipeline_mode<synchronous>, transform_indices = @transform_3, window_bounds = array<i64: 1, 128>}, {transform_indices = @transform_4, window_bounds = array<i64: 128, 128>}]} {
    %c0 = arith.constant 0 : index
    %c0_0 = arith.constant 0 : index
    %0 = vector.load %arg1[%c0, %c0_0] : memref<128x128xf32, #tpu.memory_space<vmem>>, vector<128x128xf32>
    %c0_1 = arith.constant 0 : index
    %c0_2 = arith.constant 0 : index
    %1 = vector.load %arg3[%c0_1, %c0_2] : memref<1x128xf32, #tpu.memory_space<vmem>>, vector<1x128xf32>
    %2 = vector.broadcast %1 : vector<1x128xf32> to vector<128x128xf32>
    %3 = arith.mulf %0, %2 : vector<128x128xf32>
    %c0_3 = arith.constant 0 : index
    %c0_4 = arith.constant 0 : index
    %4 = vector.load %arg4[%c0_3, %c0_4] : memref<1x128xf32, #tpu.memory_space<vmem>>, vector<1x128xf32>
    %5 = vector.broadcast %4 : vector<1x128xf32> to vector<128x128xf32>
    %6 = arith.addf %3, %5 : vector<128x128xf32>
    %c0_5 = arith.constant 0 : index
    %c0_6 = arith.constant 0 : index
    %7 = vector.load %arg2[%c0_5, %c0_6] : memref<128x128xf32, #tpu.memory_space<vmem>>, vector<128x128xf32>
    %8 = arith.addf %6, %7 : vector<128x128xf32>
    %cst = arith.constant 0.000000e+00 : f32
    %9 = vector.broadcast %cst : f32 to vector<128x128xf32>
    %10 = arith.cmpf ogt, %8, %9 : vector<128x128xf32>
    %cst_7 = arith.constant 1.000000e-01 : f32
    %11 = vector.broadcast %cst_7 : f32 to vector<128x128xf32>
    %12 = arith.mulf %11, %8 : vector<128x128xf32>
    %13 = arith.select %10, %8, %12 : vector<128x128xi1>, vector<128x128xf32>
    %c0_8 = arith.constant 0 : index
    %c0_9 = arith.constant 0 : index
    %14 = vector.load %arg5[%c0_8, %c0_9] : memref<128x128xf32, #tpu.memory_space<vmem>>, vector<128x128xf32>
    tpu.vector_store %arg5[%c0_8, %c0_9], %13 {strides = array<i32>} : memref<128x128xf32, #tpu.memory_space<vmem>>, vector<128x128xf32>,
    return
  }
  func.func @transform_0(%arg0: i32) -> (i32, i32) {
    %c0_i32 = arith.constant 0 : i32
    %c0_i32_0 = arith.constant 0 : i32
    return %arg0, %c0_i32 : i32, i32
  }
  func.func @transform_1(%arg0: i32) -> (i32, i32) {
    %c0_i32 = arith.constant 0 : i32
    %c0_i32_0 = arith.constant 0 : i32
    return %arg0, %c0_i32 : i32, i32
  }
  func.func @transform_2(%arg0: i32) -> (i32, i32) {
    %c0_i32 = arith.constant 0 : i32
    %c0_i32_0 = arith.constant 0 : i32
    %c0_i32_1 = arith.constant 0 : i32
    return %c0_i32, %c0_i32_0 : i32, i32
  }
  func.func @transform_3(%arg0: i32) -> (i32, i32) {
    %c0_i32 = arith.constant 0 : i32
    %c0_i32_0 = arith.constant 0 : i32
    %c0_i32_1 = arith.constant 0 : i32
    return %c0_i32, %c0_i32_0 : i32, i32
  }
  func.func @transform_4(%arg0: i32) -> (i32, i32) {
    %c0_i32 = arith.constant 0 : i32
    %c0_i32_0 = arith.constant 0 : i32
    return %arg0, %c0_i32 : i32, i32
  }
}

module attributes {stable_mosaic.version = 11 : i64} {
  func.func @stage2_kernel(%arg0: i32, %arg1: i32, %arg2: memref<1x8x16x128xf32, #tpu.memory_space<vmem>>, %arg3: memref<1x1x16x128xf32, #tpu.memory_space<vmem>>, %arg4: memref<1x1x16x128xf32, #tpu.memory_space<vmem>>, %arg5: memref<1x128xf32, #tpu.memory_space<vmem>>, %arg6: memref<1x128xf32, #tpu.memory_space<vmem>>, %arg7: memref<3x384x128xf32, #tpu.memory_space<vmem>>, %arg8: memref<1x8x16x128xf32, #tpu.memory_space<vmem>>, %arg9: memref<1x1x1x128xf32, #tpu.memory_space<vmem>>, %arg10: memref<1x1x1x128xf32, #tpu.memory_space<vmem>>) attributes {dimension_semantics = [#tpu.dimension_semantics<parallel>, #tpu.dimension_semantics<parallel>], iteration_bounds = array<i64: 2, 2>, scalar_prefetch = 0 : i64, scratch_operands = 0 : i64, tpu.core_type = #tpu.core_type<tc>, window_params = [{transform_indices = @transform_0, window_bounds = array<i64: 1, 8, 16, 128>}, {transform_indices = @transform_1, window_bounds = array<i64: 1, 1, 16, 128>}, {transform_indices = @transform_2, window_bounds = array<i64: 1, 1, 16, 128>}, {pipeline_mode = #tpu.pipeline_mode<synchronous>, transform_indices = @transform_3, window_bounds = array<i64: 1, 128>}, {pipeline_mode = #tpu.pipeline_mode<synchronous>, transform_indices = @transform_4, window_bounds = array<i64: 1, 128>}, {pipeline_mode = #tpu.pipeline_mode<synchronous>, transform_indices = @transform_5, window_bounds = array<i64: 3, 384, 128>}, {transform_indices = @transform_6, window_bounds = array<i64: 1, 8, 16, 128>}, {transform_indices = @transform_7, window_bounds = array<i64: 1, 1, 1, 128>}, {transform_indices = @transform_8, window_bounds = array<i64: 1, 1, 1, 128>}]} {
    %c0 = arith.constant 0 : index
    %c0_0 = arith.constant 0 : index
    %0 = vector.load %arg5[%c0, %c0_0] : memref<1x128xf32, #tpu.memory_space<vmem>>, vector<1x128xf32>
    %c0_1 = arith.constant 0 : index
    %c0_2 = arith.constant 0 : index
    %1 = vector.load %arg6[%c0_1, %c0_2] : memref<1x128xf32, #tpu.memory_space<vmem>>, vector<1x128xf32>
    %c0_3 = arith.constant 0 : index
    %c0_4 = arith.constant 0 : index
    %c0_5 = arith.constant 0 : index
    %c0_6 = arith.constant 0 : index
    %2 = vector.load %arg2[%c0_3, %c0_4, %c0_5, %c0_6] : memref<1x8x16x128xf32, #tpu.memory_space<vmem>>, vector<1x8x16x128xf32>
    %3 = vector.shape_cast %2 : vector<1x8x16x128xf32> to vector<8x16x128xf32>
    %4 = vector.shape_cast %0 : vector<1x128xf32> to vector<1x1x128xf32>
    %5 = vector.broadcast %4 : vector<1x1x128xf32> to vector<8x16x128xf32>
    %6 = arith.mulf %3, %5 : vector<8x16x128xf32>
    %7 = vector.shape_cast %1 : vector<1x128xf32> to vector<1x1x128xf32>
    %8 = vector.broadcast %7 : vector<1x1x128xf32> to vector<8x16x128xf32>
    %9 = arith.addf %6, %8 : vector<8x16x128xf32>
    %cst = arith.constant 0.000000e+00 : f32
    %10 = vector.broadcast %cst : f32 to vector<8x16x128xf32>
    %11 = arith.cmpf ogt, %9, %10 : vector<8x16x128xf32>
    %cst_7 = arith.constant 1.000000e-01 : f32
    %12 = vector.broadcast %cst_7 : f32 to vector<8x16x128xf32>
    %13 = arith.mulf %12, %9 : vector<8x16x128xf32>
    %14 = arith.select %11, %9, %13 : vector<8x16x128xi1>, vector<8x16x128xf32>
    %c0_8 = arith.constant 0 : index
    %c0_9 = arith.constant 0 : index
    %c0_10 = arith.constant 0 : index
    %c0_11 = arith.constant 0 : index
    %15 = vector.load %arg3[%c0_8, %c0_9, %c0_10, %c0_11] : memref<1x1x16x128xf32, #tpu.memory_space<vmem>>, vector<1x1x16x128xf32>
    %16 = vector.shape_cast %15 : vector<1x1x16x128xf32> to vector<1x16x128xf32>
    %17 = vector.shape_cast %0 : vector<1x128xf32> to vector<1x1x128xf32>
    %18 = vector.broadcast %17 : vector<1x1x128xf32> to vector<1x16x128xf32>
    %19 = arith.mulf %16, %18 : vector<1x16x128xf32>
    %20 = vector.shape_cast %1 : vector<1x128xf32> to vector<1x1x128xf32>
    %21 = vector.broadcast %20 : vector<1x1x128xf32> to vector<1x16x128xf32>
    %22 = arith.addf %19, %21 : vector<1x16x128xf32>
    %cst_12 = arith.constant 0.000000e+00 : f32
    %23 = vector.broadcast %cst_12 : f32 to vector<1x16x128xf32>
    %24 = arith.cmpf ogt, %22, %23 : vector<1x16x128xf32>
    %cst_13 = arith.constant 1.000000e-01 : f32
    %25 = vector.broadcast %cst_13 : f32 to vector<1x16x128xf32>
    %26 = arith.mulf %25, %22 : vector<1x16x128xf32>
    %27 = arith.select %24, %22, %26 : vector<1x16x128xi1>, vector<1x16x128xf32>
    %c0_14 = arith.constant 0 : index
    %c0_15 = arith.constant 0 : index
    %c0_16 = arith.constant 0 : index
    %c0_17 = arith.constant 0 : index
    %28 = vector.load %arg4[%c0_14, %c0_15, %c0_16, %c0_17] : memref<1x1x16x128xf32, #tpu.memory_space<vmem>>, vector<1x1x16x128xf32>
    %29 = vector.shape_cast %28 : vector<1x1x16x128xf32> to vector<1x16x128xf32>
    %30 = vector.shape_cast %0 : vector<1x128xf32> to vector<1x1x128xf32>
    %31 = vector.broadcast %30 : vector<1x1x128xf32> to vector<1x16x128xf32>
    %32 = arith.mulf %29, %31 : vector<1x16x128xf32>
    %33 = vector.shape_cast %1 : vector<1x128xf32> to vector<1x1x128xf32>
    %34 = vector.broadcast %33 : vector<1x1x128xf32> to vector<1x16x128xf32>
    %35 = arith.addf %32, %34 : vector<1x16x128xf32>
    %cst_18 = arith.constant 0.000000e+00 : f32
    %36 = vector.broadcast %cst_18 : f32 to vector<1x16x128xf32>
    %37 = arith.cmpf ogt, %35, %36 : vector<1x16x128xf32>
    %cst_19 = arith.constant 1.000000e-01 : f32
    %38 = vector.broadcast %cst_19 : f32 to vector<1x16x128xf32>
    %39 = arith.mulf %38, %35 : vector<1x16x128xf32>
    %40 = arith.select %37, %35, %39 : vector<1x16x128xi1>, vector<1x16x128xf32>
    %c0_i32 = arith.constant 0 : i32
    %41 = arith.cmpi sgt, %arg1, %c0_i32 : i32
    %42 = arith.extui %41 : i1 to i32
    %43 = arith.sitofp %42 : i32 to f32
    %44 = vector.broadcast %43 : f32 to vector<1x16x128xf32>
    %45 = arith.mulf %27, %44 : vector<1x16x128xf32>
    %c1_i32 = arith.constant 1 : i32
    %46 = arith.cmpi slt, %arg1, %c1_i32 : i32
    %47 = arith.extui %46 : i1 to i32
    %48 = arith.sitofp %47 : i32 to f32
    %49 = vector.broadcast %48 : f32 to vector<1x16x128xf32>
    %50 = arith.mulf %40, %49 : vector<1x16x128xf32>
    %51 = tpu.concatenate %45, %14, %50 in 0 : vector<1x16x128xf32>, vector<8x16x128xf32>, vector<1x16x128xf32> -> vector<10x16x128xf32>
    %cst_20 = arith.constant 0.000000e+00 : f32
    %52 = vector.broadcast %cst_20 : f32 to vector<10x1x128xf32>
    %53 = tpu.concatenate %52, %51, %52 in 1 : vector<10x1x128xf32>, vector<10x16x128xf32>, vector<10x1x128xf32> -> vector<10x18x128xf32>
    %cst_21 = arith.constant 0.000000e+00 : f32
    %54 = vector.broadcast %cst_21 : f32 to vector<128x128xf32>
    %55 = vector.extract_strided_slice %53 {offsets = [0, 0, 0], sizes = [8, 18, 128], strides = [1, 1, 1]} : vector<10x18x128xf32> to vector<8x18x128xf32>
    %56 = vector.extract_strided_slice %55 {offsets = [0, 0, 0], sizes = [8, 16, 128], strides = [1, 1, 1]} : vector<8x18x128xf32> to vector<8x16x128xf32>
    %57 = vector.extract_strided_slice %55 {offsets = [0, 1, 0], sizes = [8, 16, 128], strides = [1, 1, 1]} : vector<8x18x128xf32> to vector<8x16x128xf32>
    %58 = vector.extract_strided_slice %55 {offsets = [0, 2, 0], sizes = [8, 16, 128], strides = [1, 1, 1]} : vector<8x18x128xf32> to vector<8x16x128xf32>
    %59 = tpu.concatenate %56, %57, %58 in 2 : vector<8x16x128xf32>, vector<8x16x128xf32>, vector<8x16x128xf32> -> vector<8x16x384xf32>
    %60 = vector.shape_cast %59 : vector<8x16x384xf32> to vector<128x384xf32>
    %c0_22 = arith.constant 0 : index
    %c0_23 = arith.constant 0 : index
    %c0_24 = arith.constant 0 : index
    %61 = vector.load %arg7[%c0_22, %c0_23, %c0_24] : memref<3x384x128xf32, #tpu.memory_space<vmem>>, vector<1x384x128xf32>
    %62 = vector.shape_cast %61 : vector<1x384x128xf32> to vector<384x128xf32>
    %cst_25 = arith.constant dense<0.000000e+00> : vector<128x128xf32>
    %63 = tpu.matmul %60, %62, %cst_25 {dimension_numbers = #tpu.dot_dimension_numbers<[1], [0], [0], [1], [0, 0, 1, 1], [], []>} : vector<128x384xf32>, vector<384x128xf32>, vector<128x128xf32> -> vector<128x128xf32>
    %64 = arith.addf %54, %63 : vector<128x128xf32>
    %65 = vector.extract_strided_slice %53 {offsets = [1, 0, 0], sizes = [8, 18, 128], strides = [1, 1, 1]} : vector<10x18x128xf32> to vector<8x18x128xf32>
    %66 = vector.extract_strided_slice %65 {offsets = [0, 0, 0], sizes = [8, 16, 128], strides = [1, 1, 1]} : vector<8x18x128xf32> to vector<8x16x128xf32>
    %67 = vector.extract_strided_slice %65 {offsets = [0, 1, 0], sizes = [8, 16, 128], strides = [1, 1, 1]} : vector<8x18x128xf32> to vector<8x16x128xf32>
    %68 = vector.extract_strided_slice %65 {offsets = [0, 2, 0], sizes = [8, 16, 128], strides = [1, 1, 1]} : vector<8x18x128xf32> to vector<8x16x128xf32>
    %69 = tpu.concatenate %66, %67, %68 in 2 : vector<8x16x128xf32>, vector<8x16x128xf32>, vector<8x16x128xf32> -> vector<8x16x384xf32>
    %70 = vector.shape_cast %69 : vector<8x16x384xf32> to vector<128x384xf32>
    %c1 = arith.constant 1 : index
    %c0_26 = arith.constant 0 : index
    %c0_27 = arith.constant 0 : index
    %71 = vector.load %arg7[%c1, %c0_26, %c0_27] : memref<3x384x128xf32, #tpu.memory_space<vmem>>, vector<1x384x128xf32>
    %72 = vector.shape_cast %71 : vector<1x384x128xf32> to vector<384x128xf32>
    %cst_28 = arith.constant dense<0.000000e+00> : vector<128x128xf32>
    %73 = tpu.matmul %70, %72, %cst_28 {dimension_numbers = #tpu.dot_dimension_numbers<[1], [0], [0], [1], [0, 0, 1, 1], [], []>} : vector<128x384xf32>, vector<384x128xf32>, vector<128x128xf32> -> vector<128x128xf32>
    %74 = arith.addf %64, %73 : vector<128x128xf32>
    %75 = vector.extract_strided_slice %53 {offsets = [2, 0, 0], sizes = [8, 18, 128], strides = [1, 1, 1]} : vector<10x18x128xf32> to vector<8x18x128xf32>
    %76 = vector.extract_strided_slice %75 {offsets = [0, 0, 0], sizes = [8, 16, 128], strides = [1, 1, 1]} : vector<8x18x128xf32> to vector<8x16x128xf32>
    %77 = vector.extract_strided_slice %75 {offsets = [0, 1, 0], sizes = [8, 16, 128], strides = [1, 1, 1]} : vector<8x18x128xf32> to vector<8x16x128xf32>
    %78 = vector.extract_strided_slice %75 {offsets = [0, 2, 0], sizes = [8, 16, 128], strides = [1, 1, 1]} : vector<8x18x128xf32> to vector<8x16x128xf32>
    %79 = tpu.concatenate %76, %77, %78 in 2 : vector<8x16x128xf32>, vector<8x16x128xf32>, vector<8x16x128xf32> -> vector<8x16x384xf32>
    %80 = vector.shape_cast %79 : vector<8x16x384xf32> to vector<128x384xf32>
    %c2 = arith.constant 2 : index
    %c0_29 = arith.constant 0 : index
    %c0_30 = arith.constant 0 : index
    %81 = vector.load %arg7[%c2, %c0_29, %c0_30] : memref<3x384x128xf32, #tpu.memory_space<vmem>>, vector<1x384x128xf32>
    %82 = vector.shape_cast %81 : vector<1x384x128xf32> to vector<384x128xf32>
    %cst_31 = arith.constant dense<0.000000e+00> : vector<128x128xf32>
    %83 = tpu.matmul %80, %82, %cst_31 {dimension_numbers = #tpu.dot_dimension_numbers<[1], [0], [0], [1], [0, 0, 1, 1], [], []>} : vector<128x384xf32>, vector<384x128xf32>, vector<128x128xf32> -> vector<128x128xf32>
    %84 = arith.addf %74, %83 : vector<128x128xf32>
    %85 = vector.shape_cast %84 : vector<128x128xf32> to vector<1x8x16x128xf32>
    %c0_32 = arith.constant 0 : index
    %c0_33 = arith.constant 0 : index
    %c0_34 = arith.constant 0 : index
    %c0_35 = arith.constant 0 : index
    %86 = vector.load %arg8[%c0_32, %c0_33, %c0_34, %c0_35] : memref<1x8x16x128xf32, #tpu.memory_space<vmem>>, vector<1x8x16x128xf32>
    tpu.vector_store %arg8[%c0_32, %c0_33, %c0_34, %c0_35], %85 {strides = array<i32>} : memref<1x8x16x128xf32, #tpu.memory_space<vmem>>, vector<1x8x16x128xf32>,
    %cst_36 = arith.constant dense<0.000000e+00> : vector<128xf32>
    %87 = vector.multi_reduction <add>, %84, %cst_36 [0] : vector<128x128xf32> to vector<128xf32>
    %88 = vector.shape_cast %87 : vector<128xf32> to vector<1x128xf32>
    %89 = vector.shape_cast %88 : vector<1x128xf32> to vector<1x1x1x128xf32>
    %c0_37 = arith.constant 0 : index
    %c0_38 = arith.constant 0 : index
    %c0_39 = arith.constant 0 : index
    %c0_40 = arith.constant 0 : index
    %90 = vector.load %arg9[%c0_37, %c0_38, %c0_39, %c0_40] : memref<1x1x1x128xf32, #tpu.memory_space<vmem>>, vector<1x1x1x128xf32>
    tpu.vector_store %arg9[%c0_37, %c0_38, %c0_39, %c0_40], %89 {strides = array<i32>} : memref<1x1x1x128xf32, #tpu.memory_space<vmem>>, vector<1x1x1x128xf32>,
    %91 = arith.mulf %84, %84 : vector<128x128xf32>
    %cst_41 = arith.constant dense<0.000000e+00> : vector<128xf32>
    %92 = vector.multi_reduction <add>, %91, %cst_41 [0] : vector<128x128xf32> to vector<128xf32>
    %93 = vector.shape_cast %92 : vector<128xf32> to vector<1x128xf32>
    %94 = vector.shape_cast %93 : vector<1x128xf32> to vector<1x1x1x128xf32>
    %c0_42 = arith.constant 0 : index
    %c0_43 = arith.constant 0 : index
    %c0_44 = arith.constant 0 : index
    %c0_45 = arith.constant 0 : index
    %95 = vector.load %arg10[%c0_42, %c0_43, %c0_44, %c0_45] : memref<1x1x1x128xf32, #tpu.memory_space<vmem>>, vector<1x1x1x128xf32>
    tpu.vector_store %arg10[%c0_42, %c0_43, %c0_44, %c0_45], %94 {strides = array<i32>} : memref<1x1x1x128xf32, #tpu.memory_space<vmem>>, vector<1x1x1x128xf32>,
    return
  }
  func.func @transform_0(%arg0: i32, %arg1: i32) -> (i32, i32, i32, i32) {
    %c0_i32 = arith.constant 0 : i32
    %c0_i32_0 = arith.constant 0 : i32
    %c0_i32_1 = arith.constant 0 : i32
    return %arg0, %arg1, %c0_i32, %c0_i32_0 : i32, i32, i32, i32
  }
  func.func @transform_1(%arg0: i32, %arg1: i32) -> (i32, i32, i32, i32) {
    %c8_i32 = arith.constant 8 : i32
    %0 = arith.muli %arg1, %c8_i32 : i32
    %c1_i32 = arith.constant 1 : i32
    %1 = arith.subi %0, %c1_i32 : i32
    %c0_i32 = arith.constant 0 : i32
    %2 = arith.maxsi %1, %c0_i32 : i32
    %c0_i32_0 = arith.constant 0 : i32
    %c0_i32_1 = arith.constant 0 : i32
    %c0_i32_2 = arith.constant 0 : i32
    return %arg0, %2, %c0_i32_0, %c0_i32_1 : i32, i32, i32, i32
  }
  func.func @transform_2(%arg0: i32, %arg1: i32) -> (i32, i32, i32, i32) {
    %c8_i32 = arith.constant 8 : i32
    %0 = arith.muli %arg1, %c8_i32 : i32
    %c8_i32_0 = arith.constant 8 : i32
    %1 = arith.addi %0, %c8_i32_0 : i32
    %c15_i32 = arith.constant 15 : i32
    %2 = arith.minsi %1, %c15_i32 : i32
    %c0_i32 = arith.constant 0 : i32
    %c0_i32_1 = arith.constant 0 : i32
    %c0_i32_2 = arith.constant 0 : i32
    return %arg0, %2, %c0_i32, %c0_i32_1 : i32, i32, i32, i32
  }
  func.func @transform_3(%arg0: i32, %arg1: i32) -> (i32, i32) {
    %c0_i32 = arith.constant 0 : i32
    %c0_i32_0 = arith.constant 0 : i32
    %c0_i32_1 = arith.constant 0 : i32
    return %c0_i32, %c0_i32_0 : i32, i32
  }
  func.func @transform_4(%arg0: i32, %arg1: i32) -> (i32, i32) {
    %c0_i32 = arith.constant 0 : i32
    %c0_i32_0 = arith.constant 0 : i32
    %c0_i32_1 = arith.constant 0 : i32
    return %c0_i32, %c0_i32_0 : i32, i32
  }
  func.func @transform_5(%arg0: i32, %arg1: i32) -> (i32, i32, i32) {
    %c0_i32 = arith.constant 0 : i32
    %c0_i32_0 = arith.constant 0 : i32
    %c0_i32_1 = arith.constant 0 : i32
    %c0_i32_2 = arith.constant 0 : i32
    return %c0_i32, %c0_i32_0, %c0_i32_1 : i32, i32, i32
  }
  func.func @transform_6(%arg0: i32, %arg1: i32) -> (i32, i32, i32, i32) {
    %c0_i32 = arith.constant 0 : i32
    %c0_i32_0 = arith.constant 0 : i32
    %c0_i32_1 = arith.constant 0 : i32
    return %arg0, %arg1, %c0_i32, %c0_i32_0 : i32, i32, i32, i32
  }
  func.func @transform_7(%arg0: i32, %arg1: i32) -> (i32, i32, i32, i32) {
    %c0_i32 = arith.constant 0 : i32
    %c0_i32_0 = arith.constant 0 : i32
    %c0_i32_1 = arith.constant 0 : i32
    return %arg0, %arg1, %c0_i32, %c0_i32_0 : i32, i32, i32, i32
  }
  func.func @transform_8(%arg0: i32, %arg1: i32) -> (i32, i32, i32, i32) {
    %c0_i32 = arith.constant 0 : i32
    %c0_i32_0 = arith.constant 0 : i32
    %c0_i32_1 = arith.constant 0 : i32
    return %arg0, %arg1, %c0_i32, %c0_i32_0 : i32, i32, i32, i32
  }
}

</mosaic_0001>

<llo_original>
// kernel: _lambda_.4
$region0: #{_lambda_.4}
  #allocation0 [shape = 'u32[]', space=smem, size = 0x4, offset = 0x4, fixed_abs, tag = 'smem constant byte address 0x4 - core index']
  #allocation1 [shape = 'u32[72,128]{1,0:T(1,128)}', space=vmem, size = 0x9000, scoped, tag = 'internal scratch']
  %s0 = inlined_call_operand.vmem [shape: f32[512,128], index: 0, kind: input, shape index: {}]
  %s1 = inlined_call_operand.vmem [shape: f32[128,128], index: 1, kind: input, shape index: {}]
  %s2 = inlined_call_operand.vmem [shape: f32[512,128], index: 2, kind: output, shape index: {0}]
  %s3 = inlined_call_operand.vmem [shape: f32[4,1,128], index: 3, kind: output, shape index: {1}]
  %s4 = inlined_call_operand.vmem [shape: f32[4,1,128], index: 4, kind: output, shape index: {2}]
  %5 = xla_tuple %s2, %s3, %s4
  %s6 = sld [smem:[#allocation0]]
  $region57: #{_lambda_.4} parent=0
    _
  %s8 = ssub.s32 1, %s6
  %s9 = scalar_select 0, %s8, %s6
  loop: start=0, step=1, limit=6
  $region2: #{_lambda_.4} parent=0 // loop_pre_header
    _
  $region3: #{_lambda_.4} parent=0 // loop_header
    %s11 = sphi 0, %s15
    %p12 = scmp.ge.s32.totalorder %s11, 6
    %s21 = sphi 0, %s23
    %s24 = sphi 0, %s21
    %s25 = sphi 0, %s24
    %s41 = sphi 0, %s25
    %s45 = sphi 0, %s45
    %s47 = sphi 0, %s45
    %s48 = sphi 0, %s47
    %s62 = sphi 0, %s48
    %s68 = sphi 0, %s70
    %s71 = sphi 0, %s68
    %s72 = sphi 0, %s71
    %s88 = sphi 0, %s72
    %s94 = sphi 0, %s96
    %s97 = sphi 0, %s94
    %s98 = sphi 0, %s97
    %s114 = sphi 0, %s98
    %s120 = sphi 0, %s122
    %s123 = sphi 0, %s120
    %s124 = sphi 0, %s123
    %s140 = sphi 0, %s124
  $region4: #{_lambda_.4} parent=0 // loop_header_branch
    %14 = sbr.rel (%p12) target = $region8
  $region5: #{_lambda_.4} parent=0 // loop_body
    %s16 = ssub.s32 %s11, 1
    %s17 = ssub.s32 %s11, 2
    %s18 = sadd.s32 %s11, 1
    %s19 = ssub.s32 %s11, %s18
    %p20 = scmp.eq.s32.totalorder %s19, 0
    %s22 = sadd.s32 %s21, 1
    %s23 = scalar_select %p20, %s21, %s22
    %p26 = pneg %p20
    %p27 = scmp.eq.s32.totalorder %s11, 3
    %p28 = por %p26, %p27
    %p29 = scmp.ne.s32.totalorder %s21, %s24
    %p30 = scmp.eq.s32.totalorder %s11, 0
    %p31 = por %p29, %p30
    %p32 = scmp.ne.s32.totalorder %s21, %s24
    %p33 = scmp.eq.s32.totalorder %s16, 3
    %p34 = por %p32, %p33
    %p35 = scmp.ne.s32.totalorder %s24, %s25
    %p36 = scmp.eq.s32.totalorder %s16, 0
    %p37 = por %p35, %p36
    %p38 = scmp.ne.s32.totalorder %s24, %s25
    %p39 = scmp.eq.s32.totalorder %s17, 3
    %p40 = por %p38, %p39
    %p42 = scmp.ne.s32.totalorder %s25, %s41
    %p43 = scmp.eq.s32.totalorder %s17, 0
    %p44 = por %p42, %p43
    %s46 = sadd.s32 %s45, 1
    %p49 = scmp.eq.s32.totalorder %s11, 3
    %p50 = scmp.ne.s32.totalorder %s45, %s47
    %p51 = scmp.eq.s32.totalorder %s11, 0
    %p52 = por %p50, %p51
    %p53 = scmp.ne.s32.totalorder %s45, %s47
    %p54 = scmp.eq.s32.totalorder %s16, 3
    %p55 = por %p53, %p54
    %p56 = scmp.ne.s32.totalorder %s47, %s48
    %p57 = scmp.eq.s32.totalorder %s16, 0
    %p58 = por %p56, %p57
    %p59 = scmp.ne.s32.totalorder %s47, %s48
    %p60 = scmp.eq.s32.totalorder %s17, 3
    %p61 = por %p59, %p60
    %p63 = scmp.ne.s32.totalorder %s48, %s62
    %p64 = scmp.eq.s32.totalorder %s17, 0
    %p65 = por %p63, %p64
    %s66 = ssub.s32 %s11, %s18
    %p67 = scmp.eq.s32.totalorder %s66, 0
    %s69 = sadd.s32 %s68, 1
    %s70 = scalar_select %p67, %s68, %s69
    %p73 = pneg %p67
    %p74 = scmp.eq.s32.totalorder %s11, 3
    %p75 = por %p73, %p74
    %p76 = scmp.ne.s32.totalorder %s68, %s71
    %p77 = scmp.eq.s32.totalorder %s11, 0
    %p78 = por %p76, %p77
    %p79 = scmp.ne.s32.totalorder %s68, %s71
    %p80 = scmp.eq.s32.totalorder %s16, 3
    %p81 = por %p79, %p80
    %p82 = scmp.ne.s32.totalorder %s71, %s72
    %p83 = scmp.eq.s32.totalorder %s16, 0
    %p84 = por %p82, %p83
    %p85 = scmp.ne.s32.totalorder %s71, %s72
    %p86 = scmp.eq.s32.totalorder %s17, 3
    %p87 = por %p85, %p86
    %p89 = scmp.ne.s32.totalorder %s72, %s88
    %p90 = scmp.eq.s32.totalorder %s17, 0
    %p91 = por %p89, %p90
    %s92 = ssub.s32 %s11, %s18
    %p93 = scmp.eq.s32.totalorder %s92, 0
    %s95 = sadd.s32 %s94, 1
    %s96 = scalar_select %p93, %s94, %s95
    %p99 = pneg %p93
    %p100 = scmp.eq.s32.totalorder %s11, 3
    %p101 = por %p99, %p100
    %p102 = scmp.ne.s32.totalorder %s94, %s97
    %p103 = scmp.eq.s32.totalorder %s11, 0
    %p104 = por %p102, %p103
    %p105 = scmp.ne.s32.totalorder %s94, %s97
    %p106 = scmp.eq.s32.totalorder %s16, 3
    %p107 = por %p105, %p106
    %p108 = scmp.ne.s32.totalorder %s97, %s98
    %p109 = scmp.eq.s32.totalorder %s16, 0
    %p110 = por %p108, %p109
    %p111 = scmp.ne.s32.totalorder %s97, %s98
    %p112 = scmp.eq.s32.totalorder %s17, 3
    %p113 = por %p111, %p112
    %p115 = scmp.ne.s32.totalorder %s98, %s114
    %p116 = scmp.eq.s32.totalorder %s17, 0
    %p117 = por %p115, %p116
    %s118 = ssub.s32 %s11, %s18
    %p119 = scmp.eq.s32.totalorder %s118, 0
    %s121 = sadd.s32 %s120, 1
    %s122 = scalar_select %p119, %s120, %s121
    %p125 = pneg %p119
    %p126 = scmp.eq.s32.totalorder %s11, 3
    %p127 = por %p125, %p126
    %p128 = scmp.ne.s32.totalorder %s120, %s123
    %p129 = scmp.eq.s32.totalorder %s11, 0
    %p130 = por %p128, %p129
    %p131 = scmp.ne.s32.totalorder %s120, %s123
    %p132 = scmp.eq.s32.totalorder %s16, 3
    %p133 = por %p131, %p132
    %p134 = scmp.ne.s32.totalorder %s123, %s124
    %p135 = scmp.eq.s32.totalorder %s16, 0
    %p136 = por %p134, %p135
    %p137 = scmp.ne.s32.totalorder %s123, %s124
    %p138 = scmp.eq.s32.totalorder %s17, 3
    %p139 = por %p137, %p138
    %p141 = scmp.ne.s32.totalorder %s124, %s140
    %p142 = scmp.eq.s32.totalorder %s17, 0
    %p143 = por %p141, %p142
    %p144 = scmp.le.s32.totalorder 1, %s11
    %p145 = scmp.lt.s32.totalorder %s11, 5
    %p146 = pnand %p144, %p145
    %p147 = pneg %p146
    // Predicated region
    $region9: #{_lambda_.4} parent=5 // pred_check
      _
    $region10: #{_lambda_.4} parent=5 // pred_check_branch
      %149 = sbr.rel (%p146) target = $region12
    $region11: #{_lambda_.4} parent=5 // pred_region
      %s150 = ssub.s32 %s11, 1
      // Predicated region
      $region13: #{_lambda_.4} parent=11 // pred_check
        %p151 = pneg %p58
      $region14: #{_lambda_.4} parent=11 // pred_check_branch
        %153 = sbr.rel (%p151) target = $region16
      $region15: #{_lambda_.4} parent=11 // pred_region
        _
      $region16: #{_lambda_.4} parent=11 // pred_fallthru
        _
    $region12: #{_lambda_.4} parent=5 // pred_fallthru
      _
    %p154 = scmp.lt.s32.totalorder %s11, 4
    // Predicated region
    $region17: #{_lambda_.4} parent=5 // pred_check
      %p155 = pneg %p154
    $region18: #{_lambda_.4} parent=5 // pred_check_branch
      %157 = sbr.rel (%p155) target = $region20
    $region19: #{_lambda_.4} parent=5 // pred_region
      // Predicated region
      $region21: #{_lambda_.4} parent=19 // pred_check
        %p158 = pneg %p31
      $region22: #{_lambda_.4} parent=19 // pred_check_branch
        %160 = sbr.rel (%p158) target = $region24
      $region23: #{_lambda_.4} parent=19 // pred_region
        %s161 = smul.u32 16, %s11
        %p162 = scmp.lt.s32.totalorder %s161, 63
        %s163 = scalar_select %p162, %s161, 63
        %s164 = smul.addr %s163, 8
        %s165 = scalar_lea.vmem %s0, %s164
        %s166 = smul.u32 16, %s11
      $region24: #{_lambda_.4} parent=19 // pred_fallthru
        _
    $region20: #{_lambda_.4} parent=5 // pred_fallthru
      _
    %p167 = scmp.le.s32.totalorder 1, %s11
    %p168 = scmp.lt.s32.totalorder %s11, 5
    %p169 = pnand %p167, %p168
    %p170 = pneg %p169
    // Predicated region
    $region25: #{_lambda_.4} parent=5 // pred_check
      _
    $region26: #{_lambda_.4} parent=5 // pred_check_branch
      %172 = sbr.rel (%p169) target = $region28
    $region27: #{_lambda_.4} parent=5 // pred_region
      %s173 = ssub.s32 %s11, 1
      %s174 = smul.u32 16, %s16
      %p175 = scmp.lt.s32.totalorder %s174, 63
      %s176 = scalar_select %p175, %s174, 63
      %s177 = smul.addr %s176, 8
      %s178 = scalar_lea.vmem %s0, %s177
      %p179 = pneg %p37
      %p180 = pneg %p34
      %p181 = pneg %p58
      %p182 = pneg %p55
      %p183 = pneg %p84
      %p184 = pneg %p81
      %s185 = smul.u32 16, %s16
      %p186 = scmp.lt.s32.totalorder %s185, 63
      %s187 = scalar_select %p186, %s185, 63
      %s188 = smul.addr %s187, 8
      %s189 = scalar_lea.vmem %s2, %s188
      %p190 = pneg %p110
      %p191 = pneg %p107
      %p192 = scmp.lt.s32.totalorder %s16, 3
      %s193 = scalar_select %p192, %s16, 3
      %s194 = scalar_lea.vmem %s3, %s193
      %p195 = pneg %p136
      %p196 = pneg %p133
      %p197 = scmp.lt.s32.totalorder %s16, 3
      %s198 = scalar_select %p197, %s16, 3
      %s199 = scalar_lea.vmem %s4, %s198
      %s200 = smul.u32 16, %s16
      %p201 = scmp.lt.s32.totalorder %s200, 63
      %s202 = scalar_select %p201, %s200, 63
      %s203 = smul.addr %s202, 8
      %s204 = scalar_lea.vmem %s0, %s203
      %s205 = smul.u32 16, %s16
      %s206 = smul.u32 16, %s16
      %p207 = scmp.lt.s32.totalorder %s206, 63
      %s208 = scalar_select %p207, %s206, 63
      %s209 = smul.addr %s208, 8
      %s210 = scalar_lea.vmem %s2, %s209
      %s211 = smul.u32 16, %s16
      %p212 = scmp.lt.s32.totalorder %s16, 3
      %s213 = scalar_select %p212, %s16, 3
      %s214 = scalar_lea.vmem %s3, %s213
      %p215 = scmp.lt.s32.totalorder %s16, 3
      %s216 = scalar_select %p215, %s16, 3
      %s217 = scalar_lea.vmem %s4, %s216
      %v218 = vld [vmem:[%s204] sm:$0xff]
      %v219 = vld [vmem:[%s204 + $0x8] sm:$0xff]
      %v220 = vld [vmem:[%s204 + $0x10] sm:$0xff]
      %v221 = vld [vmem:[%s204 + $0x18] sm:$0xff]
      %v222 = vld [vmem:[%s204 + $0x20] sm:$0xff]
      %v223 = vld [vmem:[%s204 + $0x28] sm:$0xff]
      %v224 = vld [vmem:[%s204 + $0x30] sm:$0xff]
      %v225 = vld [vmem:[%s204 + $0x38] sm:$0xff]
      %v226 = vld [vmem:[%s204 + $0x40] sm:$0xff]
      %v227 = vld [vmem:[%s204 + $0x48] sm:$0xff]
      %v228 = vld [vmem:[%s204 + $0x50] sm:$0xff]
      %v229 = vld [vmem:[%s204 + $0x58] sm:$0xff]
      %v230 = vld [vmem:[%s204 + $0x60] sm:$0xff]
      %v231 = vld [vmem:[%s204 + $0x68] sm:$0xff]
      %v232 = vld [vmem:[%s204 + $0x70] sm:$0xff]
      %v233 = vld [vmem:[%s204 + $0x78] sm:$0xff]
      %v234 = vld [vmem:[%s1] sm:$0xff]
      %v235 = vld [vmem:[%s1 + $0x8] sm:$0xff]
      %v236 = vld [vmem:[%s1 + $0x10] sm:$0xff]
      %v237 = vld [vmem:[%s1 + $0x18] sm:$0xff]
      %v238 = vld [vmem:[%s1 + $0x20] sm:$0xff]
      %v239 = vld [vmem:[%s1 + $0x28] sm:$0xff]
      %v240 = vld [vmem:[%s1 + $0x30] sm:$0xff]
      %v241 = vld [vmem:[%s1 + $0x38] sm:$0xff]
      %v242 = vld [vmem:[%s1 + $0x40] sm:$0xff]
      %v243 = vld [vmem:[%s1 + $0x48] sm:$0xff]
      %v244 = vld [vmem:[%s1 + $0x50] sm:$0xff]
      %v245 = vld [vmem:[%s1 + $0x58] sm:$0xff]
      %v246 = vld [vmem:[%s1 + $0x60] sm:$0xff]
      %v247 = vld [vmem:[%s1 + $0x68] sm:$0xff]
      %v248 = vld [vmem:[%s1 + $0x70] sm:$0xff]
      %v249 = vld [vmem:[%s1 + $0x78] sm:$0xff]
      %250 = vmatpush.msra.mxu0 %v249
      %251 = vmatpush.msra.mxu0 %v248
      %252 = vmatpush.msra.mxu0 %v247
      %253 = vmatpush.msra.mxu0 %v246
      %254 = vmatpush.msra.mxu0 %v245
      %255 = vmatpush.msra.mxu0 %v244
      %256 = vmatpush.msra.mxu0 %v243
      %257 = vmatpush.msra.mxu0 %v242
      %258 = vmatpush.msra.mxu0 %v241
      %259 = vmatpush.msra.mxu0 %v240
      %260 = vmatpush.msra.mxu0 %v239
      %261 = vmatpush.msra.mxu0 %v238
      %262 = vmatpush.msra.mxu0 %v237
      %263 = vmatpush.msra.mxu0 %v236
      %264 = vmatpush.msra.mxu0 %v235
      %265 = vmatpush.msra.mxu0 %v234
      %266 = vmatmul.f32.gmra.mxu0 %v218
      %v267 = vpop.f32.mrf.mxu0
      %v268 = vadd.f32 0.0, %v267
      %269 = vmatmul.f32.gmra.mxu0 %v219
      %v270 = vpop.f32.mrf.mxu0
      %v271 = vadd.f32 0.0, %v270
      %272 = vmatmul.f32.gmra.mxu0 %v220
      %v273 = vpop.f32.mrf.mxu0
      %v274 = vadd.f32 0.0, %v273
      %275 = vmatmul.f32.gmra.mxu0 %v221
      %v276 = vpop.f32.mrf.mxu0
      %v277 = vadd.f32 0.0, %v276
      %278 = vmatmul.f32.gmra.mxu0 %v222
      %v279 = vpop.f32.mrf.mxu0
      %v280 = vadd.f32 0.0, %v279
      %281 = vmatmul.f32.gmra.mxu0 %v223
      %v282 = vpop.f32.mrf.mxu0
      %v283 = vadd.f32 0.0, %v282
      %284 = vmatmul.f32.gmra.mxu0 %v224
      %v285 = vpop.f32.mrf.mxu0
      %v286 = vadd.f32 0.0, %v285
      %287 = vmatmul.f32.gmra.mxu0 %v225
      %v288 = vpop.f32.mrf.mxu0
      %v289 = vadd.f32 0.0, %v288
      %290 = vmatmul.f32.gmra.mxu0 %v226
      %v291 = vpop.f32.mrf.mxu0
      %v292 = vadd.f32 0.0, %v291
      %293 = vmatmul.f32.gmra.mxu0 %v227
      %v294 = vpop.f32.mrf.mxu0
      %v295 = vadd.f32 0.0, %v294
      %296 = vmatmul.f32.gmra.mxu0 %v228
      %v297 = vpop.f32.mrf.mxu0
      %v298 = vadd.f32 0.0, %v297
      %299 = vmatmul.f32.gmra.mxu0 %v229
      %v300 = vpop.f32.mrf.mxu0
      %v301 = vadd.f32 0.0, %v300
      %302 = vmatmul.f32.gmra.mxu0 %v230
      %v303 = vpop.f32.mrf.mxu0
      %v304 = vadd.f32 0.0, %v303
      %305 = vmatmul.f32.gmra.mxu0 %v231
      %v306 = vpop.f32.mrf.mxu0
      %v307 = vadd.f32 0.0, %v306
      %308 = vmatmul.f32.gmra.mxu0 %v232
      %v309 = vpop.f32.mrf.mxu0
      %v310 = vadd.f32 0.0, %v309
      %311 = vmatmul.f32.gmra.mxu0 %v233
      %v312 = vpop.f32.mrf.mxu0
      %v313 = vadd.f32 0.0, %v312
      %314 = vdwg.mxu0
      %315 = vst [vmem:[%s210] sm:$0xff] %v268
      %316 = vst [vmem:[%s210 + $0x8] sm:$0xff] %v271
      %317 = vst [vmem:[%s210 + $0x10] sm:$0xff] %v274
      %318 = vst [vmem:[%s210 + $0x18] sm:$0xff] %v277
      %319 = vst [vmem:[%s210 + $0x20] sm:$0xff] %v280
      %320 = vst [vmem:[%s210 + $0x28] sm:$0xff] %v283
      %321 = vst [vmem:[%s210 + $0x30] sm:$0xff] %v286
      %322 = vst [vmem:[%s210 + $0x38] sm:$0xff] %v289
      %323 = vst [vmem:[%s210 + $0x40] sm:$0xff] %v292
      %324 = vst [vmem:[%s210 + $0x48] sm:$0xff] %v295
      %325 = vst [vmem:[%s210 + $0x50] sm:$0xff] %v298
      %326 = vst [vmem:[%s210 + $0x58] sm:$0xff] %v301
      %327 = vst [vmem:[%s210 + $0x60] sm:$0xff] %v304
      %328 = vst [vmem:[%s210 + $0x68] sm:$0xff] %v307
      %329 = vst [vmem:[%s210 + $0x70] sm:$0xff] %v310
      %330 = vst [vmem:[%s210 + $0x78] sm:$0xff] %v313
      %v331 = vadd.f32 %v268, %v271
      %v332 = vadd.f32 %v331, %v274
      %v333 = vadd.f32 %v332, %v277
      %v334 = vadd.f32 %v333, %v280
      %v335 = vadd.f32 %v334, %v283
      %v336 = vadd.f32 %v335, %v286
      %v337 = vadd.f32 %v336, %v289
      %v338 = vadd.f32 %v337, %v292
      %v339 = vadd.f32 %v338, %v295
      %v340 = vadd.f32 %v339, %v298
      %v341 = vadd.f32 %v340, %v301
      %v342 = vadd.f32 %v341, %v304
      %v343 = vadd.f32 %v342, %v307
      %v344 = vadd.f32 %v343, %v310
      %v345 = vadd.f32 %v344, %v313
      %v346 = vrot.slane %v345, 4
      %v347 = vadd.f32 %v345, %v346
      %v348 = vrot.slane %v347, 2
      %v349 = vadd.f32 %v347, %v348
      %v350 = vrot.slane %v349, 1
      %v351 = vadd.f32 %v349, %v350
      %352 = vst [vmem:[%s214] sm:$0x1] %v351
      %v353 = vmul.f32 %v268, %v268
      %v354 = vmul.f32 %v271, %v271
      %v355 = vmul.f32 %v274, %v274
      %v356 = vmul.f32 %v277, %v277
      %v357 = vmul.f32 %v280, %v280
      %v358 = vmul.f32 %v283, %v283
      %v359 = vmul.f32 %v286, %v286
      %v360 = vmul.f32 %v289, %v289
      %v361 = vmul.f32 %v292, %v292
      %v362 = vmul.f32 %v295, %v295
      %v363 = vmul.f32 %v298, %v298
      %v364 = vmul.f32 %v301, %v301
      %v365 = vmul.f32 %v304, %v304
      %v366 = vmul.f32 %v307, %v307
      %v367 = vmul.f32 %v310, %v310
      %v368 = vmul.f32 %v313, %v313
      %v369 = vadd.f32 %v353, %v354
      %v370 = vadd.f32 %v369, %v355
      %v371 = vadd.f32 %v370, %v356
      %v372 = vadd.f32 %v371, %v357
      %v373 = vadd.f32 %v372, %v358
      %v374 = vadd.f32 %v373, %v359
      %v375 = vadd.f32 %v374, %v360
      %v376 = vadd.f32 %v375, %v361
      %v377 = vadd.f32 %v376, %v362
      %v378 = vadd.f32 %v377, %v363
      %v379 = vadd.f32 %v378, %v364
      %v380 = vadd.f32 %v379, %v365
      %v381 = vadd.f32 %v380, %v366
      %v382 = vadd.f32 %v381, %v367
      %v383 = vadd.f32 %v382, %v368
      %v384 = vrot.slane %v383, 4
      %v385 = vadd.f32 %v383, %v384
      %v386 = vrot.slane %v385, 2
      %v387 = vadd.f32 %v385, %v386
      %v388 = vrot.slane %v387, 1
      %v389 = vadd.f32 %v387, %v388
      %390 = vst [vmem:[%s217] sm:$0x1] %v389
      %s391 = smul.u32 16, %s16
      %p392 = scmp.lt.s32.totalorder %s391, 63
      %s393 = scalar_select %p392, %s391, 63
      %s394 = smul.addr %s393, 8
      %s395 = scalar_lea.vmem %s2, %s394
      %p396 = scmp.lt.s32.totalorder %s16, 3
      %s397 = scalar_select %p396, %s16, 3
      %s398 = scalar_lea.vmem %s3, %s397
      %p399 = scmp.lt.s32.totalorder %s16, 3
      %s400 = scalar_select %p399, %s16, 3
      %s401 = scalar_lea.vmem %s4, %s400
      // Predicated region
      $region29: #{_lambda_.4} parent=27 // pred_check
        %p402 = pneg %p81
      $region30: #{_lambda_.4} parent=27 // pred_check_branch
        %404 = sbr.rel (%p402) target = $region32
      $region31: #{_lambda_.4} parent=27 // pred_region
        %s405 = smul.u32 16, %s16
      $region32: #{_lambda_.4} parent=27 // pred_fallthru
        _
      // Predicated region
      $region33: #{_lambda_.4} parent=27 // pred_check
        %p406 = pneg %p107
      $region34: #{_lambda_.4} parent=27 // pred_check_branch
        %408 = sbr.rel (%p406) target = $region36
      $region35: #{_lambda_.4} parent=27 // pred_region
        _
      $region36: #{_lambda_.4} parent=27 // pred_fallthru
        _
      // Predicated region
      $region37: #{_lambda_.4} parent=27 // pred_check
        %p409 = pneg %p133
      $region38: #{_lambda_.4} parent=27 // pred_check_branch
        %411 = sbr.rel (%p409) target = $region40
      $region39: #{_lambda_.4} parent=27 // pred_region
        _
      $region40: #{_lambda_.4} parent=27 // pred_fallthru
        _
    $region28: #{_lambda_.4} parent=5 // pred_fallthru
      _
    %p412 = scmp.le.s32.totalorder 2, %s11
    // Predicated region
    $region41: #{_lambda_.4} parent=5 // pred_check
      %p413 = pneg %p412
    $region42: #{_lambda_.4} parent=5 // pred_check_branch
      %415 = sbr.rel (%p413) target = $region44
    $region43: #{_lambda_.4} parent=5 // pred_region
      %s416 = ssub.s32 %s11, 2
      // Predicated region
      $region45: #{_lambda_.4} parent=43 // pred_check
        %p417 = pneg %p87
      $region46: #{_lambda_.4} parent=43 // pred_check_branch
        %419 = sbr.rel (%p417) target = $region48
      $region47: #{_lambda_.4} parent=43 // pred_region
        %s420 = smul.u32 16, %s17
        %p421 = scmp.lt.s32.totalorder %s420, 63
        %s422 = scalar_select %p421, %s420, 63
        %s423 = smul.addr %s422, 8
        %s424 = scalar_lea.vmem %s2, %s423
      $region48: #{_lambda_.4} parent=43 // pred_fallthru
        _
      // Predicated region
      $region49: #{_lambda_.4} parent=43 // pred_check
        %p425 = pneg %p113
      $region50: #{_lambda_.4} parent=43 // pred_check_branch
        %427 = sbr.rel (%p425) target = $region52
      $region51: #{_lambda_.4} parent=43 // pred_region
        %p428 = scmp.lt.s32.totalorder %s17, 3
        %s429 = scalar_select %p428, %s17, 3
        %s430 = scalar_lea.vmem %s3, %s429
      $region52: #{_lambda_.4} parent=43 // pred_fallthru
        _
      // Predicated region
      $region53: #{_lambda_.4} parent=43 // pred_check
        %p431 = pneg %p139
      $region54: #{_lambda_.4} parent=43 // pred_check_branch
        %433 = sbr.rel (%p431) target = $region56
      $region55: #{_lambda_.4} parent=43 // pred_region
        %p434 = scmp.lt.s32.totalorder %s17, 3
        %s435 = scalar_select %p434, %s17, 3
        %s436 = scalar_lea.vmem %s4, %s435
      $region56: #{_lambda_.4} parent=43 // pred_fallthru
        _
    $region44: #{_lambda_.4} parent=5 // pred_fallthru
      _
  $region6: #{_lambda_.4} parent=0 // loop_footer
    %s15 = sadd.s32 1, %s11
  $region7: #{_lambda_.4} parent=0 // loop_footer_branch
    %10 = sbr.rel target = $region3
  $region8: #{_lambda_.4} parent=0 // loop_exit
    _

// kernel: _lambda_.7
$region0: #{_lambda_.7}
  #allocation0 [shape = 'u32[]', space=smem, size = 0x4, offset = 0x4, fixed_abs, tag = 'smem constant byte address 0x4 - core index']
  #allocation1 [shape = 'u32[72,128]{1,0:T(1,128)}', space=vmem, size = 0x9000, scoped, tag = 'internal scratch']
  %s0 = inlined_call_operand.vmem [shape: f32[512,128], index: 0, kind: input, shape index: {}]
  %s1 = inlined_call_operand.vmem [shape: f32[512,128], index: 1, kind: input, shape index: {}, may-alias: {1,4}]
  %s2 = inlined_call_operand.vmem [shape: f32[1,128], index: 2, kind: input, shape index: {}]
  %s3 = inlined_call_operand.vmem [shape: f32[1,128], index: 3, kind: input, shape index: {}]
  %s4 = inlined_call_operand.vmem [shape: f32[512,128], index: 4, kind: output, shape index: {}, may-alias: {1,4}]
  %s5 = sld [smem:[#allocation0]]
  $region49: #{_lambda_.7} parent=0
    _
  %s7 = ssub.s32 1, %s5
  %s8 = scalar_select 0, %s7, %s5
  loop: start=0, step=1, limit=6
  $region2: #{_lambda_.7} parent=0 // loop_pre_header
    _
  $region3: #{_lambda_.7} parent=0 // loop_header
    %s10 = sphi 0, %s14
    %p11 = scmp.ge.s32.totalorder %s10, 6
    %s20 = sphi 0, %s22
    %s23 = sphi 0, %s20
    %s24 = sphi 0, %s23
    %s40 = sphi 0, %s24
    %s46 = sphi 0, %s48
    %s49 = sphi 0, %s46
    %s50 = sphi 0, %s49
    %s66 = sphi 0, %s50
    %s70 = sphi 0, %s70
    %s72 = sphi 0, %s70
    %s73 = sphi 0, %s72
    %s87 = sphi 0, %s73
    %s91 = sphi 0, %s91
    %s93 = sphi 0, %s91
    %s94 = sphi 0, %s93
    %s108 = sphi 0, %s94
    %s114 = sphi 0, %s116
    %s117 = sphi 0, %s114
    %s118 = sphi 0, %s117
    %s134 = sphi 0, %s118
  $region4: #{_lambda_.7} parent=0 // loop_header_branch
    %13 = sbr.rel (%p11) target = $region8
  $region5: #{_lambda_.7} parent=0 // loop_body
    %s15 = ssub.s32 %s10, 1
    %s16 = ssub.s32 %s10, 2
    %s17 = sadd.s32 %s10, 1
    %s18 = ssub.s32 %s10, %s17
    %p19 = scmp.eq.s32.totalorder %s18, 0
    %s21 = sadd.s32 %s20, 1
    %s22 = scalar_select %p19, %s20, %s21
    %p25 = pneg %p19
    %p26 = scmp.eq.s32.totalorder %s10, 3
    %p27 = por %p25, %p26
    %p28 = scmp.ne.s32.totalorder %s20, %s23
    %p29 = scmp.eq.s32.totalorder %s10, 0
    %p30 = por %p28, %p29
    %p31 = scmp.ne.s32.totalorder %s20, %s23
    %p32 = scmp.eq.s32.totalorder %s15, 3
    %p33 = por %p31, %p32
    %p34 = scmp.ne.s32.totalorder %s23, %s24
    %p35 = scmp.eq.s32.totalorder %s15, 0
    %p36 = por %p34, %p35
    %p37 = scmp.ne.s32.totalorder %s23, %s24
    %p38 = scmp.eq.s32.totalorder %s16, 3
    %p39 = por %p37, %p38
    %p41 = scmp.ne.s32.totalorder %s24, %s40
    %p42 = scmp.eq.s32.totalorder %s16, 0
    %p43 = por %p41, %p42
    %s44 = ssub.s32 %s10, %s17
    %p45 = scmp.eq.s32.totalorder %s44, 0
    %s47 = sadd.s32 %s46, 1
    %s48 = scalar_select %p45, %s46, %s47
    %p51 = pneg %p45
    %p52 = scmp.eq.s32.totalorder %s10, 3
    %p53 = por %p51, %p52
    %p54 = scmp.ne.s32.totalorder %s46, %s49
    %p55 = scmp.eq.s32.totalorder %s10, 0
    %p56 = por %p54, %p55
    %p57 = scmp.ne.s32.totalorder %s46, %s49
    %p58 = scmp.eq.s32.totalorder %s15, 3
    %p59 = por %p57, %p58
    %p60 = scmp.ne.s32.totalorder %s49, %s50
    %p61 = scmp.eq.s32.totalorder %s15, 0
    %p62 = por %p60, %p61
    %p63 = scmp.ne.s32.totalorder %s49, %s50
    %p64 = scmp.eq.s32.totalorder %s16, 3
    %p65 = por %p63, %p64
    %p67 = scmp.ne.s32.totalorder %s50, %s66
    %p68 = scmp.eq.s32.totalorder %s16, 0
    %p69 = por %p67, %p68
    %s71 = sadd.s32 %s70, 1
    %p74 = scmp.eq.s32.totalorder %s10, 3
    %p75 = scmp.ne.s32.totalorder %s70, %s72
    %p76 = scmp.eq.s32.totalorder %s10, 0
    %p77 = por %p75, %p76
    %p78 = scmp.ne.s32.totalorder %s70, %s72
    %p79 = scmp.eq.s32.totalorder %s15, 3
    %p80 = por %p78, %p79
    %p81 = scmp.ne.s32.totalorder %s72, %s73
    %p82 = scmp.eq.s32.totalorder %s15, 0
    %p83 = por %p81, %p82
    %p84 = scmp.ne.s32.totalorder %s72, %s73
    %p85 = scmp.eq.s32.totalorder %s16, 3
    %p86 = por %p84, %p85
    %p88 = scmp.ne.s32.totalorder %s73, %s87
    %p89 = scmp.eq.s32.totalorder %s16, 0
    %p90 = por %p88, %p89
    %s92 = sadd.s32 %s91, 1
    %p95 = scmp.eq.s32.totalorder %s10, 3
    %p96 = scmp.ne.s32.totalorder %s91, %s93
    %p97 = scmp.eq.s32.totalorder %s10, 0
    %p98 = por %p96, %p97
    %p99 = scmp.ne.s32.totalorder %s91, %s93
    %p100 = scmp.eq.s32.totalorder %s15, 3
    %p101 = por %p99, %p100
    %p102 = scmp.ne.s32.totalorder %s93, %s94
    %p103 = scmp.eq.s32.totalorder %s15, 0
    %p104 = por %p102, %p103
    %p105 = scmp.ne.s32.totalorder %s93, %s94
    %p106 = scmp.eq.s32.totalorder %s16, 3
    %p107 = por %p105, %p106
    %p109 = scmp.ne.s32.totalorder %s94, %s108
    %p110 = scmp.eq.s32.totalorder %s16, 0
    %p111 = por %p109, %p110
    %s112 = ssub.s32 %s10, %s17
    %p113 = scmp.eq.s32.totalorder %s112, 0
    %s115 = sadd.s32 %s114, 1
    %s116 = scalar_select %p113, %s114, %s115
    %p119 = pneg %p113
    %p120 = scmp.eq.s32.totalorder %s10, 3
    %p121 = por %p119, %p120
    %p122 = scmp.ne.s32.totalorder %s114, %s117
    %p123 = scmp.eq.s32.totalorder %s10, 0
    %p124 = por %p122, %p123
    %p125 = scmp.ne.s32.totalorder %s114, %s117
    %p126 = scmp.eq.s32.totalorder %s15, 3
    %p127 = por %p125, %p126
    %p128 = scmp.ne.s32.totalorder %s117, %s118
    %p129 = scmp.eq.s32.totalorder %s15, 0
    %p130 = por %p128, %p129
    %p131 = scmp.ne.s32.totalorder %s117, %s118
    %p132 = scmp.eq.s32.totalorder %s16, 3
    %p133 = por %p131, %p132
    %p135 = scmp.ne.s32.totalorder %s118, %s134
    %p136 = scmp.eq.s32.totalorder %s16, 0
    %p137 = por %p135, %p136
    %p138 = scmp.le.s32.totalorder 1, %s10
    %p139 = scmp.lt.s32.totalorder %s10, 5
    %p140 = pnand %p138, %p139
    %p141 = pneg %p140
    // Predicated region
    $region9: #{_lambda_.7} parent=5 // pred_check
      _
    $region10: #{_lambda_.7} parent=5 // pred_check_branch
      %143 = sbr.rel (%p140) target = $region12
    $region11: #{_lambda_.7} parent=5 // pred_region
      %s144 = ssub.s32 %s10, 1
      // Predicated region
      $region13: #{_lambda_.7} parent=11 // pred_check
        %p145 = pneg %p83
      $region14: #{_lambda_.7} parent=11 // pred_check_branch
        %147 = sbr.rel (%p145) target = $region16
      $region15: #{_lambda_.7} parent=11 // pred_region
        _
      $region16: #{_lambda_.7} parent=11 // pred_fallthru
        _
      // Predicated region
      $region17: #{_lambda_.7} parent=11 // pred_check
        %p148 = pneg %p104
      $region18: #{_lambda_.7} parent=11 // pred_check_branch
        %150 = sbr.rel (%p148) target = $region20
      $region19: #{_lambda_.7} parent=11 // pred_region
        _
      $region20: #{_lambda_.7} parent=11 // pred_fallthru
        _
    $region12: #{_lambda_.7} parent=5 // pred_fallthru
      _
    %p151 = scmp.lt.s32.totalorder %s10, 4
    // Predicated region
    $region21: #{_lambda_.7} parent=5 // pred_check
      %p152 = pneg %p151
    $region22: #{_lambda_.7} parent=5 // pred_check_branch
      %154 = sbr.rel (%p152) target = $region24
    $region23: #{_lambda_.7} parent=5 // pred_region
      // Predicated region
      $region25: #{_lambda_.7} parent=23 // pred_check
        %p155 = pneg %p30
      $region26: #{_lambda_.7} parent=23 // pred_check_branch
        %157 = sbr.rel (%p155) target = $region28
      $region27: #{_lambda_.7} parent=23 // pred_region
        %s158 = smul.u32 16, %s10
        %p159 = scmp.lt.s32.totalorder %s158, 63
        %s160 = scalar_select %p159, %s158, 63
        %s161 = smul.addr %s160, 8
        %s162 = scalar_lea.vmem %s0, %s161
        %s163 = smul.u32 16, %s10
      $region28: #{_lambda_.7} parent=23 // pred_fallthru
        _
      // Predicated region
      $region29: #{_lambda_.7} parent=23 // pred_check
        %p164 = pneg %p56
      $region30: #{_lambda_.7} parent=23 // pred_check_branch
        %166 = sbr.rel (%p164) target = $region32
      $region31: #{_lambda_.7} parent=23 // pred_region
        %s167 = smul.u32 16, %s10
        %p168 = scmp.lt.s32.totalorder %s167, 63
        %s169 = scalar_select %p168, %s167, 63
        %s170 = smul.addr %s169, 8
        %s171 = scalar_lea.vmem %s1, %s170
        %s172 = smul.u32 16, %s10
      $region32: #{_lambda_.7} parent=23 // pred_fallthru
        _
    $region24: #{_lambda_.7} parent=5 // pred_fallthru
      _
    %p173 = scmp.le.s32.totalorder 1, %s10
    %p174 = scmp.lt.s32.totalorder %s10, 5
    %p175 = pnand %p173, %p174
    %p176 = pneg %p175
    // Predicated region
    $region33: #{_lambda_.7} parent=5 // pred_check
      _
    $region34: #{_lambda_.7} parent=5 // pred_check_branch
      %178 = sbr.rel (%p175) target = $region36
    $region35: #{_lambda_.7} parent=5 // pred_region
      %s179 = ssub.s32 %s10, 1
      %s180 = smul.u32 16, %s15
      %p181 = scmp.lt.s32.totalorder %s180, 63
      %s182 = scalar_select %p181, %s180, 63
      %s183 = smul.addr %s182, 8
      %s184 = scalar_lea.vmem %s0, %s183
      %p185 = pneg %p36
      %p186 = pneg %p33
      %s187 = smul.u32 16, %s15
      %p188 = scmp.lt.s32.totalorder %s187, 63
      %s189 = scalar_select %p188, %s187, 63
      %s190 = smul.addr %s189, 8
      %s191 = scalar_lea.vmem %s1, %s190
      %p192 = pneg %p62
      %p193 = pneg %p59
      %p194 = pneg %p83
      %p195 = pneg %p80
      %p196 = pneg %p104
      %p197 = pneg %p101
      %p198 = pneg %p130
      %p199 = pneg %p127
      %s200 = smul.u32 16, %s15
      %p201 = scmp.lt.s32.totalorder %s200, 63
      %s202 = scalar_select %p201, %s200, 63
      %s203 = smul.addr %s202, 8
      %s204 = scalar_lea.vmem %s4, %s203
      %s205 = smul.u32 16, %s15
      %p206 = scmp.lt.s32.totalorder %s205, 63
      %s207 = scalar_select %p206, %s205, 63
      %s208 = smul.addr %s207, 8
      %s209 = scalar_lea.vmem %s0, %s208
      %s210 = smul.u32 16, %s15
      %s211 = smul.u32 16, %s15
      %p212 = scmp.lt.s32.totalorder %s211, 63
      %s213 = scalar_select %p212, %s211, 63
      %s214 = smul.addr %s213, 8
      %s215 = scalar_lea.vmem %s1, %s214
      %s216 = smul.u32 16, %s15
      %s217 = smul.u32 16, %s15
      %p218 = scmp.lt.s32.totalorder %s217, 63
      %s219 = scalar_select %p218, %s217, 63
      %s220 = smul.addr %s219, 8
      %s221 = scalar_lea.vmem %s4, %s220
      %s222 = smul.u32 16, %s15
      %v223 = vld [vmem:[%s209] sm:$0xff]
      %v224 = vld [vmem:[%s209 + $0x8] sm:$0xff]
      %v225 = vld [vmem:[%s209 + $0x10] sm:$0xff]
      %v226 = vld [vmem:[%s209 + $0x18] sm:$0xff]
      %v227 = vld [vmem:[%s209 + $0x20] sm:$0xff]
      %v228 = vld [vmem:[%s209 + $0x28] sm:$0xff]
      %v229 = vld [vmem:[%s209 + $0x30] sm:$0xff]
      %v230 = vld [vmem:[%s209 + $0x38] sm:$0xff]
      %v231 = vld [vmem:[%s209 + $0x40] sm:$0xff]
      %v232 = vld [vmem:[%s209 + $0x48] sm:$0xff]
      %v233 = vld [vmem:[%s209 + $0x50] sm:$0xff]
      %v234 = vld [vmem:[%s209 + $0x58] sm:$0xff]
      %v235 = vld [vmem:[%s209 + $0x60] sm:$0xff]
      %v236 = vld [vmem:[%s209 + $0x68] sm:$0xff]
      %v237 = vld [vmem:[%s209 + $0x70] sm:$0xff]
      %v238 = vld [vmem:[%s209 + $0x78] sm:$0xff]
      %v239 = vld [vmem:[%s2] sm:$0x1]
      %v241 = vperm.slane %v239, 0
      %v243 = vmul.f32 %v223, %v241
      %v244 = vmul.f32 %v224, %v241
      %v245 = vmul.f32 %v225, %v241
      %v246 = vmul.f32 %v226, %v241
      %v247 = vmul.f32 %v227, %v241
      %v248 = vmul.f32 %v228, %v241
      %v249 = vmul.f32 %v229, %v241
      %v250 = vmul.f32 %v230, %v241
      %v251 = vmul.f32 %v231, %v241
      %v252 = vmul.f32 %v232, %v241
      %v253 = vmul.f32 %v233, %v241
      %v254 = vmul.f32 %v234, %v241
      %v255 = vmul.f32 %v235, %v241
      %v256 = vmul.f32 %v236, %v241
      %v257 = vmul.f32 %v237, %v241
      %v258 = vmul.f32 %v238, %v241
      %v259 = vld [vmem:[%s3] sm:$0x1]
      %v261 = vperm.slane %v259, 0
      %v263 = vadd.f32 %v243, %v261
      %v264 = vadd.f32 %v244, %v261
      %v265 = vadd.f32 %v245, %v261
      %v266 = vadd.f32 %v246, %v261
      %v267 = vadd.f32 %v247, %v261
      %v268 = vadd.f32 %v248, %v261
      %v269 = vadd.f32 %v249, %v261
      %v270 = vadd.f32 %v250, %v261
      %v271 = vadd.f32 %v251, %v261
      %v272 = vadd.f32 %v252, %v261
      %v273 = vadd.f32 %v253, %v261
      %v274 = vadd.f32 %v254, %v261
      %v275 = vadd.f32 %v255, %v261
      %v276 = vadd.f32 %v256, %v261
      %v277 = vadd.f32 %v257, %v261
      %v278 = vadd.f32 %v258, %v261
      %v279 = vld [vmem:[%s215] sm:$0xff]
      %v280 = vld [vmem:[%s215 + $0x8] sm:$0xff]
      %v281 = vld [vmem:[%s215 + $0x10] sm:$0xff]
      %v282 = vld [vmem:[%s215 + $0x18] sm:$0xff]
      %v283 = vld [vmem:[%s215 + $0x20] sm:$0xff]
      %v284 = vld [vmem:[%s215 + $0x28] sm:$0xff]
      %v285 = vld [vmem:[%s215 + $0x30] sm:$0xff]
      %v286 = vld [vmem:[%s215 + $0x38] sm:$0xff]
      %v287 = vld [vmem:[%s215 + $0x40] sm:$0xff]
      %v288 = vld [vmem:[%s215 + $0x48] sm:$0xff]
      %v289 = vld [vmem:[%s215 + $0x50] sm:$0xff]
      %v290 = vld [vmem:[%s215 + $0x58] sm:$0xff]
      %v291 = vld [vmem:[%s215 + $0x60] sm:$0xff]
      %v292 = vld [vmem:[%s215 + $0x68] sm:$0xff]
      %v293 = vld [vmem:[%s215 + $0x70] sm:$0xff]
      %v294 = vld [vmem:[%s215 + $0x78] sm:$0xff]
      %v295 = vadd.f32 %v263, %v279
      %v296 = vadd.f32 %v264, %v280
      %v297 = vadd.f32 %v265, %v281
      %v298 = vadd.f32 %v266, %v282
      %v299 = vadd.f32 %v267, %v283
      %v300 = vadd.f32 %v268, %v284
      %v301 = vadd.f32 %v269, %v285
      %v302 = vadd.f32 %v270, %v286
      %v303 = vadd.f32 %v271, %v287
      %v304 = vadd.f32 %v272, %v288
      %v305 = vadd.f32 %v273, %v289
      %v306 = vadd.f32 %v274, %v290
      %v307 = vadd.f32 %v275, %v291
      %v308 = vadd.f32 %v276, %v292
      %v309 = vadd.f32 %v277, %v293
      %v310 = vadd.f32 %v278, %v294
      %vm311 = vcmp.gt.f32.partialorder %v295, 0.0
      %vm312 = vcmp.gt.f32.partialorder %v296, 0.0
      %vm313 = vcmp.gt.f32.partialorder %v297, 0.0
      %vm314 = vcmp.gt.f32.partialorder %v298, 0.0
      %vm315 = vcmp.gt.f32.partialorder %v299, 0.0
      %vm316 = vcmp.gt.f32.partialorder %v300, 0.0
      %vm317 = vcmp.gt.f32.partialorder %v301, 0.0
      %vm318 = vcmp.gt.f32.partialorder %v302, 0.0
      %vm319 = vcmp.gt.f32.partialorder %v303, 0.0
      %vm320 = vcmp.gt.f32.partialorder %v304, 0.0
      %vm321 = vcmp.gt.f32.partialorder %v305, 0.0
      %vm322 = vcmp.gt.f32.partialorder %v306, 0.0
      %vm323 = vcmp.gt.f32.partialorder %v307, 0.0
      %vm324 = vcmp.gt.f32.partialorder %v308, 0.0
      %vm325 = vcmp.gt.f32.partialorder %v309, 0.0
      %vm326 = vcmp.gt.f32.partialorder %v310, 0.0
      %v327 = vmul.f32 %v295, 0.1
      %v328 = vmul.f32 %v296, 0.1
      %v329 = vmul.f32 %v297, 0.1
      %v330 = vmul.f32 %v298, 0.1
      %v331 = vmul.f32 %v299, 0.1
      %v332 = vmul.f32 %v300, 0.1
      %v333 = vmul.f32 %v301, 0.1
      %v334 = vmul.f32 %v302, 0.1
      %v335 = vmul.f32 %v303, 0.1
      %v336 = vmul.f32 %v304, 0.1
      %v337 = vmul.f32 %v305, 0.1
      %v338 = vmul.f32 %v306, 0.1
      %v339 = vmul.f32 %v307, 0.1
      %v340 = vmul.f32 %v308, 0.1
      %v341 = vmul.f32 %v309, 0.1
      %v342 = vmul.f32 %v310, 0.1
      %v343 = vsel %vm311, %v295, %v327
      %v344 = vsel %vm312, %v296, %v328
      %v345 = vsel %vm313, %v297, %v329
      %v346 = vsel %vm314, %v298, %v330
      %v347 = vsel %vm315, %v299, %v331
      %v348 = vsel %vm316, %v300, %v332
      %v349 = vsel %vm317, %v301, %v333
      %v350 = vsel %vm318, %v302, %v334
      %v351 = vsel %vm319, %v303, %v335
      %v352 = vsel %vm320, %v304, %v336
      %v353 = vsel %vm321, %v305, %v337
      %v354 = vsel %vm322, %v306, %v338
      %v355 = vsel %vm323, %v307, %v339
      %v356 = vsel %vm324, %v308, %v340
      %v357 = vsel %vm325, %v309, %v341
      %v358 = vsel %vm326, %v310, %v342
      %359 = vst [vmem:[%s221] sm:$0xff] %v343
      %360 = vst [vmem:[%s221 + $0x8] sm:$0xff] %v344
      %361 = vst [vmem:[%s221 + $0x10] sm:$0xff] %v345
      %362 = vst [vmem:[%s221 + $0x18] sm:$0xff] %v346
      %363 = vst [vmem:[%s221 + $0x20] sm:$0xff] %v347
      %364 = vst [vmem:[%s221 + $0x28] sm:$0xff] %v348
      %365 = vst [vmem:[%s221 + $0x30] sm:$0xff] %v349
      %366 = vst [vmem:[%s221 + $0x38] sm:$0xff] %v350
      %367 = vst [vmem:[%s221 + $0x40] sm:$0xff] %v351
      %368 = vst [vmem:[%s221 + $0x48] sm:$0xff] %v352
      %369 = vst [vmem:[%s221 + $0x50] sm:$0xff] %v353
      %370 = vst [vmem:[%s221 + $0x58] sm:$0xff] %v354
      %371 = vst [vmem:[%s221 + $0x60] sm:$0xff] %v355
      %372 = vst [vmem:[%s221 + $0x68] sm:$0xff] %v356
      %373 = vst [vmem:[%s221 + $0x70] sm:$0xff] %v357
      %374 = vst [vmem:[%s221 + $0x78] sm:$0xff] %v358
      %s375 = smul.u32 16, %s15
      %p376 = scmp.lt.s32.totalorder %s375, 63
      %s377 = scalar_select %p376, %s375, 63
      %s378 = smul.addr %s377, 8
      %s379 = scalar_lea.vmem %s4, %s378
      // Predicated region
      $region37: #{_lambda_.7} parent=35 // pred_check
        %p380 = pneg %p127
      $region38: #{_lambda_.7} parent=35 // pred_check_branch
        %382 = sbr.rel (%p380) target = $region40
      $region39: #{_lambda_.7} parent=35 // pred_region
        %s383 = smul.u32 16, %s15
      $region40: #{_lambda_.7} parent=35 // pred_fallthru
        _
    $region36: #{_lambda_.7} parent=5 // pred_fallthru
      _
    %p384 = scmp.le.s32.totalorder 2, %s10
    // Predicated region
    $region41: #{_lambda_.7} parent=5 // pred_check
      %p385 = pneg %p384
    $region42: #{_lambda_.7} parent=5 // pred_check_branch
      %387 = sbr.rel (%p385) target = $region44
    $region43: #{_lambda_.7} parent=5 // pred_region
      %s388 = ssub.s32 %s10, 2
      // Predicated region
      $region45: #{_lambda_.7} parent=43 // pred_check
        %p389 = pneg %p133
      $region46: #{_lambda_.7} parent=43 // pred_check_branch
        %391 = sbr.rel (%p389) target = $region48
      $region47: #{_lambda_.7} parent=43 // pred_region
        %s392 = smul.u32 16, %s16
        %p393 = scmp.lt.s32.totalorder %s392, 63
        %s394 = scalar_select %p393, %s392, 63
        %s395 = smul.addr %s394, 8
        %s396 = scalar_lea.vmem %s4, %s395
      $region48: #{_lambda_.7} parent=43 // pred_fallthru
        _
    $region44: #{_lambda_.7} parent=5 // pred_fallthru
      _
  $region6: #{_lambda_.7} parent=0 // loop_footer
    %s14 = sadd.s32 1, %s10
  $region7: #{_lambda_.7} parent=0 // loop_footer_branch
    %9 = sbr.rel target = $region3
  $region8: #{_lambda_.7} parent=0 // loop_exit
    _

// kernel: _lambda_.6
$region0: #{_lambda_.6}
  #allocation0 [shape = 'u32[]', space=smem, size = 0x4, offset = 0x4, fixed_abs, tag = 'smem constant byte address 0x4 - core index']
  #allocation1 [shape = 'u32[72,128]{1,0:T(1,128)}', space=vmem, size = 0x9000, scoped, tag = 'internal scratch']
  %s0 = inlined_call_operand.vmem [shape: f32[512,128], index: 0, kind: input, shape index: {}]
  %s1 = inlined_call_operand.vmem [shape: f32[1,128], index: 1, kind: input, shape index: {}]
  %s2 = inlined_call_operand.vmem [shape: f32[1,128], index: 2, kind: input, shape index: {}]
  %s3 = inlined_call_operand.vmem [shape: f32[128,128], index: 3, kind: input, shape index: {}]
  %s4 = inlined_call_operand.vmem [shape: f32[512,128], index: 4, kind: output, shape index: {0}]
  %s5 = inlined_call_operand.vmem [shape: f32[4,1,128], index: 5, kind: output, shape index: {1}]
  %s6 = inlined_call_operand.vmem [shape: f32[4,1,128], index: 6, kind: output, shape index: {2}]
  %7 = xla_tuple %s4, %s5, %s6
  %s8 = sld [smem:[#allocation0]]
  $region65: #{_lambda_.6} parent=0
    _
  %s10 = ssub.s32 1, %s8
  %s11 = scalar_select 0, %s10, %s8
  loop: start=0, step=1, limit=6
  $region2: #{_lambda_.6} parent=0 // loop_pre_header
    _
  $region3: #{_lambda_.6} parent=0 // loop_header
    %s13 = sphi 0, %s17
    %p14 = scmp.ge.s32.totalorder %s13, 6
    %s23 = sphi 0, %s25
    %s26 = sphi 0, %s23
    %s27 = sphi 0, %s26
    %s43 = sphi 0, %s27
    %s47 = sphi 0, %s47
    %s49 = sphi 0, %s47
    %s50 = sphi 0, %s49
    %s64 = sphi 0, %s50
    %s68 = sphi 0, %s68
    %s70 = sphi 0, %s68
    %s71 = sphi 0, %s70
    %s85 = sphi 0, %s71
    %s89 = sphi 0, %s89
    %s91 = sphi 0, %s89
    %s92 = sphi 0, %s91
    %s106 = sphi 0, %s92
    %s112 = sphi 0, %s114
    %s115 = sphi 0, %s112
    %s116 = sphi 0, %s115
    %s132 = sphi 0, %s116
    %s138 = sphi 0, %s140
    %s141 = sphi 0, %s138
    %s142 = sphi 0, %s141
    %s158 = sphi 0, %s142
    %s164 = sphi 0, %s166
    %s167 = sphi 0, %s164
    %s168 = sphi 0, %s167
    %s184 = sphi 0, %s168
  $region4: #{_lambda_.6} parent=0 // loop_header_branch
    %16 = sbr.rel (%p14) target = $region8
  $region5: #{_lambda_.6} parent=0 // loop_body
    %s18 = ssub.s32 %s13, 1
    %s19 = ssub.s32 %s13, 2
    %s20 = sadd.s32 %s13, 1
    %s21 = ssub.s32 %s13, %s20
    %p22 = scmp.eq.s32.totalorder %s21, 0
    %s24 = sadd.s32 %s23, 1
    %s25 = scalar_select %p22, %s23, %s24
    %p28 = pneg %p22
    %p29 = scmp.eq.s32.totalorder %s13, 3
    %p30 = por %p28, %p29
    %p31 = scmp.ne.s32.totalorder %s23, %s26
    %p32 = scmp.eq.s32.totalorder %s13, 0
    %p33 = por %p31, %p32
    %p34 = scmp.ne.s32.totalorder %s23, %s26
    %p35 = scmp.eq.s32.totalorder %s18, 3
    %p36 = por %p34, %p35
    %p37 = scmp.ne.s32.totalorder %s26, %s27
    %p38 = scmp.eq.s32.totalorder %s18, 0
    %p39 = por %p37, %p38
    %p40 = scmp.ne.s32.totalorder %s26, %s27
    %p41 = scmp.eq.s32.totalorder %s19, 3
    %p42 = por %p40, %p41
    %p44 = scmp.ne.s32.totalorder %s27, %s43
    %p45 = scmp.eq.s32.totalorder %s19, 0
    %p46 = por %p44, %p45
    %s48 = sadd.s32 %s47, 1
    %p51 = scmp.eq.s32.totalorder %s13, 3
    %p52 = scmp.ne.s32.totalorder %s47, %s49
    %p53 = scmp.eq.s32.totalorder %s13, 0
    %p54 = por %p52, %p53
    %p55 = scmp.ne.s32.totalorder %s47, %s49
    %p56 = scmp.eq.s32.totalorder %s18, 3
    %p57 = por %p55, %p56
    %p58 = scmp.ne.s32.totalorder %s49, %s50
    %p59 = scmp.eq.s32.totalorder %s18, 0
    %p60 = por %p58, %p59
    %p61 = scmp.ne.s32.totalorder %s49, %s50
    %p62 = scmp.eq.s32.totalorder %s19, 3
    %p63 = por %p61, %p62
    %p65 = scmp.ne.s32.totalorder %s50, %s64
    %p66 = scmp.eq.s32.totalorder %s19, 0
    %p67 = por %p65, %p66
    %s69 = sadd.s32 %s68, 1
    %p72 = scmp.eq.s32.totalorder %s13, 3
    %p73 = scmp.ne.s32.totalorder %s68, %s70
    %p74 = scmp.eq.s32.totalorder %s13, 0
    %p75 = por %p73, %p74
    %p76 = scmp.ne.s32.totalorder %s68, %s70
    %p77 = scmp.eq.s32.totalorder %s18, 3
    %p78 = por %p76, %p77
    %p79 = scmp.ne.s32.totalorder %s70, %s71
    %p80 = scmp.eq.s32.totalorder %s18, 0
    %p81 = por %p79, %p80
    %p82 = scmp.ne.s32.totalorder %s70, %s71
    %p83 = scmp.eq.s32.totalorder %s19, 3
    %p84 = por %p82, %p83
    %p86 = scmp.ne.s32.totalorder %s71, %s85
    %p87 = scmp.eq.s32.totalorder %s19, 0
    %p88 = por %p86, %p87
    %s90 = sadd.s32 %s89, 1
    %p93 = scmp.eq.s32.totalorder %s13, 3
    %p94 = scmp.ne.s32.totalorder %s89, %s91
    %p95 = scmp.eq.s32.totalorder %s13, 0
    %p96 = por %p94, %p95
    %p97 = scmp.ne.s32.totalorder %s89, %s91
    %p98 = scmp.eq.s32.totalorder %s18, 3
    %p99 = por %p97, %p98
    %p100 = scmp.ne.s32.totalorder %s91, %s92
    %p101 = scmp.eq.s32.totalorder %s18, 0
    %p102 = por %p100, %p101
    %p103 = scmp.ne.s32.totalorder %s91, %s92
    %p104 = scmp.eq.s32.totalorder %s19, 3
    %p105 = por %p103, %p104
    %p107 = scmp.ne.s32.totalorder %s92, %s106
    %p108 = scmp.eq.s32.totalorder %s19, 0
    %p109 = por %p107, %p108
    %s110 = ssub.s32 %s13, %s20
    %p111 = scmp.eq.s32.totalorder %s110, 0
    %s113 = sadd.s32 %s112, 1
    %s114 = scalar_select %p111, %s112, %s113
    %p117 = pneg %p111
    %p118 = scmp.eq.s32.totalorder %s13, 3
    %p119 = por %p117, %p118
    %p120 = scmp.ne.s32.totalorder %s112, %s115
    %p121 = scmp.eq.s32.totalorder %s13, 0
    %p122 = por %p120, %p121
    %p123 = scmp.ne.s32.totalorder %s112, %s115
    %p124 = scmp.eq.s32.totalorder %s18, 3
    %p125 = por %p123, %p124
    %p126 = scmp.ne.s32.totalorder %s115, %s116
    %p127 = scmp.eq.s32.totalorder %s18, 0
    %p128 = por %p126, %p127
    %p129 = scmp.ne.s32.totalorder %s115, %s116
    %p130 = scmp.eq.s32.totalorder %s19, 3
    %p131 = por %p129, %p130
    %p133 = scmp.ne.s32.totalorder %s116, %s132
    %p134 = scmp.eq.s32.totalorder %s19, 0
    %p135 = por %p133, %p134
    %s136 = ssub.s32 %s13, %s20
    %p137 = scmp.eq.s32.totalorder %s136, 0
    %s139 = sadd.s32 %s138, 1
    %s140 = scalar_select %p137, %s138, %s139
    %p143 = pneg %p137
    %p144 = scmp.eq.s32.totalorder %s13, 3
    %p145 = por %p143, %p144
    %p146 = scmp.ne.s32.totalorder %s138, %s141
    %p147 = scmp.eq.s32.totalorder %s13, 0
    %p148 = por %p146, %p147
    %p149 = scmp.ne.s32.totalorder %s138, %s141
    %p150 = scmp.eq.s32.totalorder %s18, 3
    %p151 = por %p149, %p150
    %p152 = scmp.ne.s32.totalorder %s141, %s142
    %p153 = scmp.eq.s32.totalorder %s18, 0
    %p154 = por %p152, %p153
    %p155 = scmp.ne.s32.totalorder %s141, %s142
    %p156 = scmp.eq.s32.totalorder %s19, 3
    %p157 = por %p155, %p156
    %p159 = scmp.ne.s32.totalorder %s142, %s158
    %p160 = scmp.eq.s32.totalorder %s19, 0
    %p161 = por %p159, %p160
    %s162 = ssub.s32 %s13, %s20
    %p163 = scmp.eq.s32.totalorder %s162, 0
    %s165 = sadd.s32 %s164, 1
    %s166 = scalar_select %p163, %s164, %s165
    %p169 = pneg %p163
    %p170 = scmp.eq.s32.totalorder %s13, 3
    %p171 = por %p169, %p170
    %p172 = scmp.ne.s32.totalorder %s164, %s167
    %p173 = scmp.eq.s32.totalorder %s13, 0
    %p174 = por %p172, %p173
    %p175 = scmp.ne.s32.totalorder %s164, %s167
    %p176 = scmp.eq.s32.totalorder %s18, 3
    %p177 = por %p175, %p176
    %p178 = scmp.ne.s32.totalorder %s167, %s168
    %p179 = scmp.eq.s32.totalorder %s18, 0
    %p180 = por %p178, %p179
    %p181 = scmp.ne.s32.totalorder %s167, %s168
    %p182 = scmp.eq.s32.totalorder %s19, 3
    %p183 = por %p181, %p182
    %p185 = scmp.ne.s32.totalorder %s168, %s184
    %p186 = scmp.eq.s32.totalorder %s19, 0
    %p187 = por %p185, %p186
    %p188 = scmp.le.s32.totalorder 1, %s13
    %p189 = scmp.lt.s32.totalorder %s13, 5
    %p190 = pnand %p188, %p189
    %p191 = pneg %p190
    // Predicated region
    $region9: #{_lambda_.6} parent=5 // pred_check
      _
    $region10: #{_lambda_.6} parent=5 // pred_check_branch
      %193 = sbr.rel (%p190) target = $region12
    $region11: #{_lambda_.6} parent=5 // pred_region
      %s194 = ssub.s32 %s13, 1
      // Predicated region
      $region13: #{_lambda_.6} parent=11 // pred_check
        %p195 = pneg %p60
      $region14: #{_lambda_.6} parent=11 // pred_check_branch
        %197 = sbr.rel (%p195) target = $region16
      $region15: #{_lambda_.6} parent=11 // pred_region
        _
      $region16: #{_lambda_.6} parent=11 // pred_fallthru
        _
      // Predicated region
      $region17: #{_lambda_.6} parent=11 // pred_check
        %p198 = pneg %p81
      $region18: #{_lambda_.6} parent=11 // pred_check_branch
        %200 = sbr.rel (%p198) target = $region20
      $region19: #{_lambda_.6} parent=11 // pred_region
        _
      $region20: #{_lambda_.6} parent=11 // pred_fallthru
        _
      // Predicated region
      $region21: #{_lambda_.6} parent=11 // pred_check
        %p201 = pneg %p102
      $region22: #{_lambda_.6} parent=11 // pred_check_branch
        %203 = sbr.rel (%p201) target = $region24
      $region23: #{_lambda_.6} parent=11 // pred_region
        _
      $region24: #{_lambda_.6} parent=11 // pred_fallthru
        _
    $region12: #{_lambda_.6} parent=5 // pred_fallthru
      _
    %p204 = scmp.lt.s32.totalorder %s13, 4
    // Predicated region
    $region25: #{_lambda_.6} parent=5 // pred_check
      %p205 = pneg %p204
    $region26: #{_lambda_.6} parent=5 // pred_check_branch
      %207 = sbr.rel (%p205) target = $region28
    $region27: #{_lambda_.6} parent=5 // pred_region
      // Predicated region
      $region29: #{_lambda_.6} parent=27 // pred_check
        %p208 = pneg %p33
      $region30: #{_lambda_.6} parent=27 // pred_check_branch
        %210 = sbr.rel (%p208) target = $region32
      $region31: #{_lambda_.6} parent=27 // pred_region
        %s211 = smul.u32 16, %s13
        %p212 = scmp.lt.s32.totalorder %s211, 63
        %s213 = scalar_select %p212, %s211, 63
        %s214 = smul.addr %s213, 8
        %s215 = scalar_lea.vmem %s0, %s214
        %s216 = smul.u32 16, %s13
      $region32: #{_lambda_.6} parent=27 // pred_fallthru
        _
    $region28: #{_lambda_.6} parent=5 // pred_fallthru
      _
    %p217 = scmp.le.s32.totalorder 1, %s13
    %p218 = scmp.lt.s32.totalorder %s13, 5
    %p219 = pnand %p217, %p218
    %p220 = pneg %p219
    // Predicated region
    $region33: #{_lambda_.6} parent=5 // pred_check
      _
    $region34: #{_lambda_.6} parent=5 // pred_check_branch
      %222 = sbr.rel (%p219) target = $region36
    $region35: #{_lambda_.6} parent=5 // pred_region
      %s223 = ssub.s32 %s13, 1
      %s224 = smul.u32 16, %s18
      %p225 = scmp.lt.s32.totalorder %s224, 63
      %s226 = scalar_select %p225, %s224, 63
      %s227 = smul.addr %s226, 8
      %s228 = scalar_lea.vmem %s0, %s227
      %p229 = pneg %p39
      %p230 = pneg %p36
      %p231 = pneg %p60
      %p232 = pneg %p57
      %p233 = pneg %p81
      %p234 = pneg %p78
      %p235 = pneg %p102
      %p236 = pneg %p99
      %p237 = pneg %p128
      %p238 = pneg %p125
      %s239 = smul.u32 16, %s18
      %p240 = scmp.lt.s32.totalorder %s239, 63
      %s241 = scalar_select %p240, %s239, 63
      %s242 = smul.addr %s241, 8
      %s243 = scalar_lea.vmem %s4, %s242
      %p244 = pneg %p154
      %p245 = pneg %p151
      %p246 = scmp.lt.s32.totalorder %s18, 3
      %s247 = scalar_select %p246, %s18, 3
      %s248 = scalar_lea.vmem %s5, %s247
      %p249 = pneg %p180
      %p250 = pneg %p177
      %p251 = scmp.lt.s32.totalorder %s18, 3
      %s252 = scalar_select %p251, %s18, 3
      %s253 = scalar_lea.vmem %s6, %s252
      %s254 = smul.u32 16, %s18
      %p255 = scmp.lt.s32.totalorder %s254, 63
      %s256 = scalar_select %p255, %s254, 63
      %s257 = smul.addr %s256, 8
      %s258 = scalar_lea.vmem %s0, %s257
      %s259 = smul.u32 16, %s18
      %s260 = smul.u32 16, %s18
      %p261 = scmp.lt.s32.totalorder %s260, 63
      %s262 = scalar_select %p261, %s260, 63
      %s263 = smul.addr %s262, 8
      %s264 = scalar_lea.vmem %s4, %s263
      %s265 = smul.u32 16, %s18
      %p266 = scmp.lt.s32.totalorder %s18, 3
      %s267 = scalar_select %p266, %s18, 3
      %s268 = scalar_lea.vmem %s5, %s267
      %p269 = scmp.lt.s32.totalorder %s18, 3
      %s270 = scalar_select %p269, %s18, 3
      %s271 = scalar_lea.vmem %s6, %s270
      %v272 = vld [vmem:[%s258] sm:$0xff]
      %v273 = vld [vmem:[%s258 + $0x8] sm:$0xff]
      %v274 = vld [vmem:[%s258 + $0x10] sm:$0xff]
      %v275 = vld [vmem:[%s258 + $0x18] sm:$0xff]
      %v276 = vld [vmem:[%s258 + $0x20] sm:$0xff]
      %v277 = vld [vmem:[%s258 + $0x28] sm:$0xff]
      %v278 = vld [vmem:[%s258 + $0x30] sm:$0xff]
      %v279 = vld [vmem:[%s258 + $0x38] sm:$0xff]
      %v280 = vld [vmem:[%s258 + $0x40] sm:$0xff]
      %v281 = vld [vmem:[%s258 + $0x48] sm:$0xff]
      %v282 = vld [vmem:[%s258 + $0x50] sm:$0xff]
      %v283 = vld [vmem:[%s258 + $0x58] sm:$0xff]
      %v284 = vld [vmem:[%s258 + $0x60] sm:$0xff]
      %v285 = vld [vmem:[%s258 + $0x68] sm:$0xff]
      %v286 = vld [vmem:[%s258 + $0x70] sm:$0xff]
      %v287 = vld [vmem:[%s258 + $0x78] sm:$0xff]
      %v288 = vld [vmem:[%s1] sm:$0x1]
      %v290 = vperm.slane %v288, 0
      %v292 = vmul.f32 %v272, %v290
      %v293 = vmul.f32 %v273, %v290
      %v294 = vmul.f32 %v274, %v290
      %v295 = vmul.f32 %v275, %v290
      %v296 = vmul.f32 %v276, %v290
      %v297 = vmul.f32 %v277, %v290
      %v298 = vmul.f32 %v278, %v290
      %v299 = vmul.f32 %v279, %v290
      %v300 = vmul.f32 %v280, %v290
      %v301 = vmul.f32 %v281, %v290
      %v302 = vmul.f32 %v282, %v290
      %v303 = vmul.f32 %v283, %v290
      %v304 = vmul.f32 %v284, %v290
      %v305 = vmul.f32 %v285, %v290
      %v306 = vmul.f32 %v286, %v290
      %v307 = vmul.f32 %v287, %v290
      %v308 = vld [vmem:[%s2] sm:$0x1]
      %v310 = vperm.slane %v308, 0
      %v312 = vadd.f32 %v292, %v310
      %v313 = vadd.f32 %v293, %v310
      %v314 = vadd.f32 %v294, %v310
      %v315 = vadd.f32 %v295, %v310
      %v316 = vadd.f32 %v296, %v310
      %v317 = vadd.f32 %v297, %v310
      %v318 = vadd.f32 %v298, %v310
      %v319 = vadd.f32 %v299, %v310
      %v320 = vadd.f32 %v300, %v310
      %v321 = vadd.f32 %v301, %v310
      %v322 = vadd.f32 %v302, %v310
      %v323 = vadd.f32 %v303, %v310
      %v324 = vadd.f32 %v304, %v310
      %v325 = vadd.f32 %v305, %v310
      %v326 = vadd.f32 %v306, %v310
      %v327 = vadd.f32 %v307, %v310
      %vm328 = vcmp.gt.f32.partialorder %v312, 0.0
      %vm329 = vcmp.gt.f32.partialorder %v313, 0.0
      %vm330 = vcmp.gt.f32.partialorder %v314, 0.0
      %vm331 = vcmp.gt.f32.partialorder %v315, 0.0
      %vm332 = vcmp.gt.f32.partialorder %v316, 0.0
      %vm333 = vcmp.gt.f32.partialorder %v317, 0.0
      %vm334 = vcmp.gt.f32.partialorder %v318, 0.0
      %vm335 = vcmp.gt.f32.partialorder %v319, 0.0
      %vm336 = vcmp.gt.f32.partialorder %v320, 0.0
      %vm337 = vcmp.gt.f32.partialorder %v321, 0.0
      %vm338 = vcmp.gt.f32.partialorder %v322, 0.0
      %vm339 = vcmp.gt.f32.partialorder %v323, 0.0
      %vm340 = vcmp.gt.f32.partialorder %v324, 0.0
      %vm341 = vcmp.gt.f32.partialorder %v325, 0.0
      %vm342 = vcmp.gt.f32.partialorder %v326, 0.0
      %vm343 = vcmp.gt.f32.partialorder %v327, 0.0
      %v344 = vmul.f32 %v312, 0.1
      %v345 = vmul.f32 %v313, 0.1
      %v346 = vmul.f32 %v314, 0.1
      %v347 = vmul.f32 %v315, 0.1
      %v348 = vmul.f32 %v316, 0.1
      %v349 = vmul.f32 %v317, 0.1
      %v350 = vmul.f32 %v318, 0.1
      %v351 = vmul.f32 %v319, 0.1
      %v352 = vmul.f32 %v320, 0.1
      %v353 = vmul.f32 %v321, 0.1
      %v354 = vmul.f32 %v322, 0.1
      %v355 = vmul.f32 %v323, 0.1
      %v356 = vmul.f32 %v324, 0.1
      %v357 = vmul.f32 %v325, 0.1
      %v358 = vmul.f32 %v326, 0.1
      %v359 = vmul.f32 %v327, 0.1
      %v360 = vsel %vm328, %v312, %v344
      %v361 = vsel %vm329, %v313, %v345
      %v362 = vsel %vm330, %v314, %v346
      %v363 = vsel %vm331, %v315, %v347
      %v364 = vsel %vm332, %v316, %v348
      %v365 = vsel %vm333, %v317, %v349
      %v366 = vsel %vm334, %v318, %v350
      %v367 = vsel %vm335, %v319, %v351
      %v368 = vsel %vm336, %v320, %v352
      %v369 = vsel %vm337, %v321, %v353
      %v370 = vsel %vm338, %v322, %v354
      %v371 = vsel %vm339, %v323, %v355
      %v372 = vsel %vm340, %v324, %v356
      %v373 = vsel %vm341, %v325, %v357
      %v374 = vsel %vm342, %v326, %v358
      %v375 = vsel %vm343, %v327, %v359
      %v376 = vld [vmem:[%s3] sm:$0xff]
      %v377 = vld [vmem:[%s3 + $0x8] sm:$0xff]
      %v378 = vld [vmem:[%s3 + $0x10] sm:$0xff]
      %v379 = vld [vmem:[%s3 + $0x18] sm:$0xff]
      %v380 = vld [vmem:[%s3 + $0x20] sm:$0xff]
      %v381 = vld [vmem:[%s3 + $0x28] sm:$0xff]
      %v382 = vld [vmem:[%s3 + $0x30] sm:$0xff]
      %v383 = vld [vmem:[%s3 + $0x38] sm:$0xff]
      %v384 = vld [vmem:[%s3 + $0x40] sm:$0xff]
      %v385 = vld [vmem:[%s3 + $0x48] sm:$0xff]
      %v386 = vld [vmem:[%s3 + $0x50] sm:$0xff]
      %v387 = vld [vmem:[%s3 + $0x58] sm:$0xff]
      %v388 = vld [vmem:[%s3 + $0x60] sm:$0xff]
      %v389 = vld [vmem:[%s3 + $0x68] sm:$0xff]
      %v390 = vld [vmem:[%s3 + $0x70] sm:$0xff]
      %v391 = vld [vmem:[%s3 + $0x78] sm:$0xff]
      %392 = vmatpush.msra.mxu0 %v391
      %393 = vmatpush.msra.mxu0 %v390
      %394 = vmatpush.msra.mxu0 %v389
      %395 = vmatpush.msra.mxu0 %v388
      %396 = vmatpush.msra.mxu0 %v387
      %397 = vmatpush.msra.mxu0 %v386
      %398 = vmatpush.msra.mxu0 %v385
      %399 = vmatpush.msra.mxu0 %v384
      %400 = vmatpush.msra.mxu0 %v383
      %401 = vmatpush.msra.mxu0 %v382
      %402 = vmatpush.msra.mxu0 %v381
      %403 = vmatpush.msra.mxu0 %v380
      %404 = vmatpush.msra.mxu0 %v379
      %405 = vmatpush.msra.mxu0 %v378
      %406 = vmatpush.msra.mxu0 %v377
      %407 = vmatpush.msra.mxu0 %v376
      %408 = vmatmul.f32.gmra.mxu0 %v360
      %v409 = vpop.f32.mrf.mxu0
      %v410 = vadd.f32 0.0, %v409
      %411 = vmatmul.f32.gmra.mxu0 %v361
      %v412 = vpop.f32.mrf.mxu0
      %v413 = vadd.f32 0.0, %v412
      %414 = vmatmul.f32.gmra.mxu0 %v362
      %v415 = vpop.f32.mrf.mxu0
      %v416 = vadd.f32 0.0, %v415
      %417 = vmatmul.f32.gmra.mxu0 %v363
      %v418 = vpop.f32.mrf.mxu0
      %v419 = vadd.f32 0.0, %v418
      %420 = vmatmul.f32.gmra.mxu0 %v364
      %v421 = vpop.f32.mrf.mxu0
      %v422 = vadd.f32 0.0, %v421
      %423 = vmatmul.f32.gmra.mxu0 %v365
      %v424 = vpop.f32.mrf.mxu0
      %v425 = vadd.f32 0.0, %v424
      %426 = vmatmul.f32.gmra.mxu0 %v366
      %v427 = vpop.f32.mrf.mxu0
      %v428 = vadd.f32 0.0, %v427
      %429 = vmatmul.f32.gmra.mxu0 %v367
      %v430 = vpop.f32.mrf.mxu0
      %v431 = vadd.f32 0.0, %v430
      %432 = vmatmul.f32.gmra.mxu0 %v368
      %v433 = vpop.f32.mrf.mxu0
      %v434 = vadd.f32 0.0, %v433
      %435 = vmatmul.f32.gmra.mxu0 %v369
      %v436 = vpop.f32.mrf.mxu0
      %v437 = vadd.f32 0.0, %v436
      %438 = vmatmul.f32.gmra.mxu0 %v370
      %v439 = vpop.f32.mrf.mxu0
      %v440 = vadd.f32 0.0, %v439
      %441 = vmatmul.f32.gmra.mxu0 %v371
      %v442 = vpop.f32.mrf.mxu0
      %v443 = vadd.f32 0.0, %v442
      %444 = vmatmul.f32.gmra.mxu0 %v372
      %v445 = vpop.f32.mrf.mxu0
      %v446 = vadd.f32 0.0, %v445
      %447 = vmatmul.f32.gmra.mxu0 %v373
      %v448 = vpop.f32.mrf.mxu0
      %v449 = vadd.f32 0.0, %v448
      %450 = vmatmul.f32.gmra.mxu0 %v374
      %v451 = vpop.f32.mrf.mxu0
      %v452 = vadd.f32 0.0, %v451
      %453 = vmatmul.f32.gmra.mxu0 %v375
      %v454 = vpop.f32.mrf.mxu0
      %v455 = vadd.f32 0.0, %v454
      %456 = vdwg.mxu0
      %457 = vst [vmem:[%s264] sm:$0xff] %v410
      %458 = vst [vmem:[%s264 + $0x8] sm:$0xff] %v413
      %459 = vst [vmem:[%s264 + $0x10] sm:$0xff] %v416
      %460 = vst [vmem:[%s264 + $0x18] sm:$0xff] %v419
      %461 = vst [vmem:[%s264 + $0x20] sm:$0xff] %v422
      %462 = vst [vmem:[%s264 + $0x28] sm:$0xff] %v425
      %463 = vst [vmem:[%s264 + $0x30] sm:$0xff] %v428
      %464 = vst [vmem:[%s264 + $0x38] sm:$0xff] %v431
      %465 = vst [vmem:[%s264 + $0x40] sm:$0xff] %v434
      %466 = vst [vmem:[%s264 + $0x48] sm:$0xff] %v437
      %467 = vst [vmem:[%s264 + $0x50] sm:$0xff] %v440
      %468 = vst [vmem:[%s264 + $0x58] sm:$0xff] %v443
      %469 = vst [vmem:[%s264 + $0x60] sm:$0xff] %v446
      %470 = vst [vmem:[%s264 + $0x68] sm:$0xff] %v449
      %471 = vst [vmem:[%s264 + $0x70] sm:$0xff] %v452
      %472 = vst [vmem:[%s264 + $0x78] sm:$0xff] %v455
      %v473 = vadd.f32 %v410, %v413
      %v474 = vadd.f32 %v473, %v416
      %v475 = vadd.f32 %v474, %v419
      %v476 = vadd.f32 %v475, %v422
      %v477 = vadd.f32 %v476, %v425
      %v478 = vadd.f32 %v477, %v428
      %v479 = vadd.f32 %v478, %v431
      %v480 = vadd.f32 %v479, %v434
      %v481 = vadd.f32 %v480, %v437
      %v482 = vadd.f32 %v481, %v440
      %v483 = vadd.f32 %v482, %v443
      %v484 = vadd.f32 %v483, %v446
      %v485 = vadd.f32 %v484, %v449
      %v486 = vadd.f32 %v485, %v452
      %v487 = vadd.f32 %v486, %v455
      %v488 = vrot.slane %v487, 4
      %v489 = vadd.f32 %v487, %v488
      %v490 = vrot.slane %v489, 2
      %v491 = vadd.f32 %v489, %v490
      %v492 = vrot.slane %v491, 1
      %v493 = vadd.f32 %v491, %v492
      %494 = vst [vmem:[%s268] sm:$0x1] %v493
      %v495 = vmul.f32 %v410, %v410
      %v496 = vmul.f32 %v413, %v413
      %v497 = vmul.f32 %v416, %v416
      %v498 = vmul.f32 %v419, %v419
      %v499 = vmul.f32 %v422, %v422
      %v500 = vmul.f32 %v425, %v425
      %v501 = vmul.f32 %v428, %v428
      %v502 = vmul.f32 %v431, %v431
      %v503 = vmul.f32 %v434, %v434
      %v504 = vmul.f32 %v437, %v437
      %v505 = vmul.f32 %v440, %v440
      %v506 = vmul.f32 %v443, %v443
      %v507 = vmul.f32 %v446, %v446
      %v508 = vmul.f32 %v449, %v449
      %v509 = vmul.f32 %v452, %v452
      %v510 = vmul.f32 %v455, %v455
      %v511 = vadd.f32 %v495, %v496
      %v512 = vadd.f32 %v511, %v497
      %v513 = vadd.f32 %v512, %v498
      %v514 = vadd.f32 %v513, %v499
      %v515 = vadd.f32 %v514, %v500
      %v516 = vadd.f32 %v515, %v501
      %v517 = vadd.f32 %v516, %v502
      %v518 = vadd.f32 %v517, %v503
      %v519 = vadd.f32 %v518, %v504
      %v520 = vadd.f32 %v519, %v505
      %v521 = vadd.f32 %v520, %v506
      %v522 = vadd.f32 %v521, %v507
      %v523 = vadd.f32 %v522, %v508
      %v524 = vadd.f32 %v523, %v509
      %v525 = vadd.f32 %v524, %v510
      %v526 = vrot.slane %v525, 4
      %v527 = vadd.f32 %v525, %v526
      %v528 = vrot.slane %v527, 2
      %v529 = vadd.f32 %v527, %v528
      %v530 = vrot.slane %v529, 1
      %v531 = vadd.f32 %v529, %v530
      %532 = vst [vmem:[%s271] sm:$0x1] %v531
      %s533 = smul.u32 16, %s18
      %p534 = scmp.lt.s32.totalorder %s533, 63
      %s535 = scalar_select %p534, %s533, 63
      %s536 = smul.addr %s535, 8
      %s537 = scalar_lea.vmem %s4, %s536
      %p538 = scmp.lt.s32.totalorder %s18, 3
      %s539 = scalar_select %p538, %s18, 3
      %s540 = scalar_lea.vmem %s5, %s539
      %p541 = scmp.lt.s32.totalorder %s18, 3
      %s542 = scalar_select %p541, %s18, 3
      %s543 = scalar_lea.vmem %s6, %s542
      // Predicated region
      $region37: #{_lambda_.6} parent=35 // pred_check
        %p544 = pneg %p125
      $region38: #{_lambda_.6} parent=35 // pred_check_branch
        %546 = sbr.rel (%p544) target = $region40
      $region39: #{_lambda_.6} parent=35 // pred_region
        %s547 = smul.u32 16, %s18
      $region40: #{_lambda_.6} parent=35 // pred_fallthru
        _
      // Predicated region
      $region41: #{_lambda_.6} parent=35 // pred_check
        %p548 = pneg %p151
      $region42: #{_lambda_.6} parent=35 // pred_check_branch
        %550 = sbr.rel (%p548) target = $region44
      $region43: #{_lambda_.6} parent=35 // pred_region
        _
      $region44: #{_lambda_.6} parent=35 // pred_fallthru
        _
      // Predicated region
      $region45: #{_lambda_.6} parent=35 // pred_check
        %p551 = pneg %p177
      $region46: #{_lambda_.6} parent=35 // pred_check_branch
        %553 = sbr.rel (%p551) target = $region48
      $region47: #{_lambda_.6} parent=35 // pred_region
        _
      $region48: #{_lambda_.6} parent=35 // pred_fallthru
        _
    $region36: #{_lambda_.6} parent=5 // pred_fallthru
      _
    %p554 = scmp.le.s32.totalorder 2, %s13
    // Predicated region
    $region49: #{_lambda_.6} parent=5 // pred_check
      %p555 = pneg %p554
    $region50: #{_lambda_.6} parent=5 // pred_check_branch
      %557 = sbr.rel (%p555) target = $region52
    $region51: #{_lambda_.6} parent=5 // pred_region
      %s558 = ssub.s32 %s13, 2
      // Predicated region
      $region53: #{_lambda_.6} parent=51 // pred_check
        %p559 = pneg %p131
      $region54: #{_lambda_.6} parent=51 // pred_check_branch
        %561 = sbr.rel (%p559) target = $region56
      $region55: #{_lambda_.6} parent=51 // pred_region
        %s562 = smul.u32 16, %s19
        %p563 = scmp.lt.s32.totalorder %s562, 63
        %s564 = scalar_select %p563, %s562, 63
        %s565 = smul.addr %s564, 8
        %s566 = scalar_lea.vmem %s4, %s565
      $region56: #{_lambda_.6} parent=51 // pred_fallthru
        _
      // Predicated region
      $region57: #{_lambda_.6} parent=51 // pred_check
        %p567 = pneg %p157
      $region58: #{_lambda_.6} parent=51 // pred_check_branch
        %569 = sbr.rel (%p567) target = $region60
      $region59: #{_lambda_.6} parent=51 // pred_region
        %p570 = scmp.lt.s32.totalorder %s19, 3
        %s571 = scalar_select %p570, %s19, 3
        %s572 = scalar_lea.vmem %s5, %s571
      $region60: #{_lambda_.6} parent=51 // pred_fallthru
        _
      // Predicated region
      $region61: #{_lambda_.6} parent=51 // pred_check
        %p573 = pneg %p183
      $region62: #{_lambda_.6} parent=51 // pred_check_branch
        %575 = sbr.rel (%p573) target = $region64
      $region63: #{_lambda_.6} parent=51 // pred_region
        %p576 = scmp.lt.s32.totalorder %s19, 3
        %s577 = scalar_select %p576, %s19, 3
        %s578 = scalar_lea.vmem %s6, %s577
      $region64: #{_lambda_.6} parent=51 // pred_fallthru
        _
    $region52: #{_lambda_.6} parent=5 // pred_fallthru
      _
  $region6: #{_lambda_.6} parent=0 // loop_footer
    %s17 = sadd.s32 1, %s13
  $region7: #{_lambda_.6} parent=0 // loop_footer_branch
    %12 = sbr.rel target = $region3
  $region8: #{_lambda_.6} parent=0 // loop_exit
    _

// kernel: _lambda_.5
$region0: #{_lambda_.5}
  #allocation0 [shape = 'u32[]', space=smem, size = 0x4, offset = 0x4, fixed_abs, tag = 'smem constant byte address 0x4 - core index']
  #allocation1 [shape = 'u32[72,128]{1,0:T(1,128)}', space=vmem, size = 0x9000, scoped, tag = 'internal scratch']
  %s0 = inlined_call_operand.vmem [shape: f32[2,16,16,128], index: 0, kind: input, shape index: {}, may-alias: {0,1,2}]
  %s1 = inlined_call_operand.vmem [shape: f32[2,16,16,128], index: 1, kind: input, shape index: {}, may-alias: {0,1,2}]
  %s2 = inlined_call_operand.vmem [shape: f32[2,16,16,128], index: 2, kind: input, shape index: {}, may-alias: {0,1,2}]
  %s3 = inlined_call_operand.vmem [shape: f32[1,128], index: 3, kind: input, shape index: {}]
  %s4 = inlined_call_operand.vmem [shape: f32[1,128], index: 4, kind: input, shape index: {}]
  %s5 = inlined_call_operand.vmem [shape: f32[3,384,128], index: 5, kind: input, shape index: {}]
  %s6 = inlined_call_operand.vmem [shape: f32[2,16,16,128], index: 6, kind: output, shape index: {0}]
  %s7 = inlined_call_operand.vmem [shape: f32[2,2,1,128], index: 7, kind: output, shape index: {1}]
  %s8 = inlined_call_operand.vmem [shape: f32[2,2,1,128], index: 8, kind: output, shape index: {2}]
  %9 = xla_tuple %s6, %s7, %s8
  %s10 = sld [smem:[#allocation0]]
  $region73: #{_lambda_.5} parent=0
    _
  %s12 = ssub.s32 1, %s10
  %s13 = scalar_select 0, %s12, %s10
  loop: start=0, step=1, limit=6
  $region2: #{_lambda_.5} parent=0 // loop_pre_header
    _
  $region3: #{_lambda_.5} parent=0 // loop_header
    %s15 = sphi 0, %s19
    %p16 = scmp.ge.s32.totalorder %s15, 6
    %s22 = sphi 0, %s34
    %s23 = sphi 0, %s30
    %s24 = sphi 0, %s22
    %s25 = sphi 0, %s23
    %s26 = sphi 0, %s24
    %s27 = sphi 0, %s25
    %s39 = sphi 0, %s41
    %s42 = sphi 0, %s39
    %s43 = sphi 0, %s42
    %s59 = sphi 0, %s43
    %s75 = sphi 0, %s77
    %s78 = sphi 0, %s75
    %s79 = sphi 0, %s78
    %s95 = sphi 0, %s79
    %s111 = sphi 0, %s113
    %s114 = sphi 0, %s111
    %s115 = sphi 0, %s114
    %s131 = sphi 0, %s115
    %s135 = sphi 0, %s135
    %s137 = sphi 0, %s135
    %s138 = sphi 0, %s137
    %s152 = sphi 0, %s138
    %s156 = sphi 0, %s156
    %s158 = sphi 0, %s156
    %s159 = sphi 0, %s158
    %s173 = sphi 0, %s159
    %s177 = sphi 0, %s177
    %s179 = sphi 0, %s177
    %s180 = sphi 0, %s179
    %s194 = sphi 0, %s180
    %s202 = sphi 0, %s204
    %s205 = sphi 0, %s202
    %s206 = sphi 0, %s205
    %s222 = sphi 0, %s206
    %s230 = sphi 0, %s232
    %s233 = sphi 0, %s230
    %s234 = sphi 0, %s233
    %s250 = sphi 0, %s234
    %s258 = sphi 0, %s260
    %s261 = sphi 0, %s258
    %s262 = sphi 0, %s261
    %s278 = sphi 0, %s262
  $region4: #{_lambda_.5} parent=0 // loop_header_branch
    %18 = sbr.rel (%p16) target = $region8
  $region5: #{_lambda_.5} parent=0 // loop_body
    %s20 = ssub.s32 %s15, 1
    %s21 = ssub.s32 %s15, 2
    %s28 = sadd.s32 1, %s23
    %p29 = scmp.ge.s32.totalorder %s28, 2
    %s30 = scalar_select %p29, 0, %s28
    %s31 = sadd.s32 1, %s22
    %s32 = scalar_select %p29, %s31, %s22
    %p33 = scmp.ge.s32.totalorder %s32, 2
    %s34 = scalar_select %p33, 0, %s32
    %s35 = ssub.s32 %s22, %s34
    %s36 = ssub.s32 %s23, %s30
    %s37 = sor.u32 %s35, %s36
    %p38 = scmp.eq.s32.totalorder %s37, 0
    %s40 = sadd.s32 %s39, 1
    %s41 = scalar_select %p38, %s39, %s40
    %p44 = pneg %p38
    %p45 = scmp.eq.s32.totalorder %s15, 3
    %p46 = por %p44, %p45
    %p47 = scmp.ne.s32.totalorder %s39, %s42
    %p48 = scmp.eq.s32.totalorder %s15, 0
    %p49 = por %p47, %p48
    %p50 = scmp.ne.s32.totalorder %s39, %s42
    %p51 = scmp.eq.s32.totalorder %s20, 3
    %p52 = por %p50, %p51
    %p53 = scmp.ne.s32.totalorder %s42, %s43
    %p54 = scmp.eq.s32.totalorder %s20, 0
    %p55 = por %p53, %p54
    %p56 = scmp.ne.s32.totalorder %s42, %s43
    %p57 = scmp.eq.s32.totalorder %s21, 3
    %p58 = por %p56, %p57
    %p60 = scmp.ne.s32.totalorder %s43, %s59
    %p61 = scmp.eq.s32.totalorder %s21, 0
    %p62 = por %p60, %p61
    %s63 = smul.u32 %s23, 8
    %s64 = ssub.s32 %s63, 1
    %p65 = scmp.gt.s32.totalorder %s64, 0
    %s66 = scalar_select %p65, %s64, 0
    %s67 = smul.u32 %s30, 8
    %s68 = ssub.s32 %s67, 1
    %p69 = scmp.gt.s32.totalorder %s68, 0
    %s70 = scalar_select %p69, %s68, 0
    %s71 = ssub.s32 %s22, %s34
    %s72 = ssub.s32 %s66, %s70
    %s73 = sor.u32 %s71, %s72
    %p74 = scmp.eq.s32.totalorder %s73, 0
    %s76 = sadd.s32 %s75, 1
    %s77 = scalar_select %p74, %s75, %s76
    %p80 = pneg %p74
    %p81 = scmp.eq.s32.totalorder %s15, 3
    %p82 = por %p80, %p81
    %p83 = scmp.ne.s32.totalorder %s75, %s78
    %p84 = scmp.eq.s32.totalorder %s15, 0
    %p85 = por %p83, %p84
    %p86 = scmp.ne.s32.totalorder %s75, %s78
    %p87 = scmp.eq.s32.totalorder %s20, 3
    %p88 = por %p86, %p87
    %p89 = scmp.ne.s32.totalorder %s78, %s79
    %p90 = scmp.eq.s32.totalorder %s20, 0
    %p91 = por %p89, %p90
    %p92 = scmp.ne.s32.totalorder %s78, %s79
    %p93 = scmp.eq.s32.totalorder %s21, 3
    %p94 = por %p92, %p93
    %p96 = scmp.ne.s32.totalorder %s79, %s95
    %p97 = scmp.eq.s32.totalorder %s21, 0
    %p98 = por %p96, %p97
    %s99 = smul.u32 %s23, 8
    %s100 = sadd.s32 %s99, 8
    %p101 = scmp.lt.s32.totalorder %s100, 15
    %s102 = scalar_select %p101, %s100, 15
    %s103 = smul.u32 %s30, 8
    %s104 = sadd.s32 %s103, 8
    %p105 = scmp.lt.s32.totalorder %s104, 15
    %s106 = scalar_select %p105, %s104, 15
    %s107 = ssub.s32 %s22, %s34
    %s108 = ssub.s32 %s102, %s106
    %s109 = sor.u32 %s107, %s108
    %p110 = scmp.eq.s32.totalorder %s109, 0
    %s112 = sadd.s32 %s111, 1
    %s113 = scalar_select %p110, %s111, %s112
    %p116 = pneg %p110
    %p117 = scmp.eq.s32.totalorder %s15, 3
    %p118 = por %p116, %p117
    %p119 = scmp.ne.s32.totalorder %s111, %s114
    %p120 = scmp.eq.s32.totalorder %s15, 0
    %p121 = por %p119, %p120
    %p122 = scmp.ne.s32.totalorder %s111, %s114
    %p123 = scmp.eq.s32.totalorder %s20, 3
    %p124 = por %p122, %p123
    %p125 = scmp.ne.s32.totalorder %s114, %s115
    %p126 = scmp.eq.s32.totalorder %s20, 0
    %p127 = por %p125, %p126
    %p128 = scmp.ne.s32.totalorder %s114, %s115
    %p129 = scmp.eq.s32.totalorder %s21, 3
    %p130 = por %p128, %p129
    %p132 = scmp.ne.s32.totalorder %s115, %s131
    %p133 = scmp.eq.s32.totalorder %s21, 0
    %p134 = por %p132, %p133
    %s136 = sadd.s32 %s135, 1
    %p139 = scmp.eq.s32.totalorder %s15, 3
    %p140 = scmp.ne.s32.totalorder %s135, %s137
    %p141 = scmp.eq.s32.totalorder %s15, 0
    %p142 = por %p140, %p141
    %p143 = scmp.ne.s32.totalorder %s135, %s137
    %p144 = scmp.eq.s32.totalorder %s20, 3
    %p145 = por %p143, %p144
    %p146 = scmp.ne.s32.totalorder %s137, %s138
    %p147 = scmp.eq.s32.totalorder %s20, 0
    %p148 = por %p146, %p147
    %p149 = scmp.ne.s32.totalorder %s137, %s138
    %p150 = scmp.eq.s32.totalorder %s21, 3
    %p151 = por %p149, %p150
    %p153 = scmp.ne.s32.totalorder %s138, %s152
    %p154 = scmp.eq.s32.totalorder %s21, 0
    %p155 = por %p153, %p154
    %s157 = sadd.s32 %s156, 1
    %p160 = scmp.eq.s32.totalorder %s15, 3
    %p161 = scmp.ne.s32.totalorder %s156, %s158
    %p162 = scmp.eq.s32.totalorder %s15, 0
    %p163 = por %p161, %p162
    %p164 = scmp.ne.s32.totalorder %s156, %s158
    %p165 = scmp.eq.s32.totalorder %s20, 3
    %p166 = por %p164, %p165
    %p167 = scmp.ne.s32.totalorder %s158, %s159
    %p168 = scmp.eq.s32.totalorder %s20, 0
    %p169 = por %p167, %p168
    %p170 = scmp.ne.s32.totalorder %s158, %s159
    %p171 = scmp.eq.s32.totalorder %s21, 3
    %p172 = por %p170, %p171
    %p174 = scmp.ne.s32.totalorder %s159, %s173
    %p175 = scmp.eq.s32.totalorder %s21, 0
    %p176 = por %p174, %p175
    %s178 = sadd.s32 %s177, 1
    %p181 = scmp.eq.s32.totalorder %s15, 3
    %p182 = scmp.ne.s32.totalorder %s177, %s179
    %p183 = scmp.eq.s32.totalorder %s15, 0
    %p184 = por %p182, %p183
    %p185 = scmp.ne.s32.totalorder %s177, %s179
    %p186 = scmp.eq.s32.totalorder %s20, 3
    %p187 = por %p185, %p186
    %p188 = scmp.ne.s32.totalorder %s179, %s180
    %p189 = scmp.eq.s32.totalorder %s20, 0
    %p190 = por %p188, %p189
    %p191 = scmp.ne.s32.totalorder %s179, %s180
    %p192 = scmp.eq.s32.totalorder %s21, 3
    %p193 = por %p191, %p192
    %p195 = scmp.ne.s32.totalorder %s180, %s194
    %p196 = scmp.eq.s32.totalorder %s21, 0
    %p197 = por %p195, %p196
    %s198 = ssub.s32 %s22, %s34
    %s199 = ssub.s32 %s23, %s30
    %s200 = sor.u32 %s198, %s199
    %p201 = scmp.eq.s32.totalorder %s200, 0
    %s203 = sadd.s32 %s202, 1
    %s204 = scalar_select %p201, %s202, %s203
    %p207 = pneg %p201
    %p208 = scmp.eq.s32.totalorder %s15, 3
    %p209 = por %p207, %p208
    %p210 = scmp.ne.s32.totalorder %s202, %s205
    %p211 = scmp.eq.s32.totalorder %s15, 0
    %p212 = por %p210, %p211
    %p213 = scmp.ne.s32.totalorder %s202, %s205
    %p214 = scmp.eq.s32.totalorder %s20, 3
    %p215 = por %p213, %p214
    %p216 = scmp.ne.s32.totalorder %s205, %s206
    %p217 = scmp.eq.s32.totalorder %s20, 0
    %p218 = por %p216, %p217
    %p219 = scmp.ne.s32.totalorder %s205, %s206
    %p220 = scmp.eq.s32.totalorder %s21, 3
    %p221 = por %p219, %p220
    %p223 = scmp.ne.s32.totalorder %s206, %s222
    %p224 = scmp.eq.s32.totalorder %s21, 0
    %p225 = por %p223, %p224
    %s226 = ssub.s32 %s22, %s34
    %s227 = ssub.s32 %s23, %s30
    %s228 = sor.u32 %s226, %s227
    %p229 = scmp.eq.s32.totalorder %s228, 0
    %s231 = sadd.s32 %s230, 1
    %s232 = scalar_select %p229, %s230, %s231
    %p235 = pneg %p229
    %p236 = scmp.eq.s32.totalorder %s15, 3
    %p237 = por %p235, %p236
    %p238 = scmp.ne.s32.totalorder %s230, %s233
    %p239 = scmp.eq.s32.totalorder %s15, 0
    %p240 = por %p238, %p239
    %p241 = scmp.ne.s32.totalorder %s230, %s233
    %p242 = scmp.eq.s32.totalorder %s20, 3
    %p243 = por %p241, %p242
    %p244 = scmp.ne.s32.totalorder %s233, %s234
    %p245 = scmp.eq.s32.totalorder %s20, 0
    %p246 = por %p244, %p245
    %p247 = scmp.ne.s32.totalorder %s233, %s234
    %p248 = scmp.eq.s32.totalorder %s21, 3
    %p249 = por %p247, %p248
    %p251 = scmp.ne.s32.totalorder %s234, %s250
    %p252 = scmp.eq.s32.totalorder %s21, 0
    %p253 = por %p251, %p252
    %s254 = ssub.s32 %s22, %s34
    %s255 = ssub.s32 %s23, %s30
    %s256 = sor.u32 %s254, %s255
    %p257 = scmp.eq.s32.totalorder %s256, 0
    %s259 = sadd.s32 %s258, 1
    %s260 = scalar_select %p257, %s258, %s259
    %p263 = pneg %p257
    %p264 = scmp.eq.s32.totalorder %s15, 3
    %p265 = por %p263, %p264
    %p266 = scmp.ne.s32.totalorder %s258, %s261
    %p267 = scmp.eq.s32.totalorder %s15, 0
    %p268 = por %p266, %p267
    %p269 = scmp.ne.s32.totalorder %s258, %s261
    %p270 = scmp.eq.s32.totalorder %s20, 3
    %p271 = por %p269, %p270
    %p272 = scmp.ne.s32.totalorder %s261, %s262
    %p273 = scmp.eq.s32.totalorder %s20, 0
    %p274 = por %p272, %p273
    %p275 = scmp.ne.s32.totalorder %s261, %s262
    %p276 = scmp.eq.s32.totalorder %s21, 3
    %p277 = por %p275, %p276
    %p279 = scmp.ne.s32.totalorder %s262, %s278
    %p280 = scmp.eq.s32.totalorder %s21, 0
    %p281 = por %p279, %p280
    %p282 = scmp.le.s32.totalorder 1, %s15
    %p283 = scmp.lt.s32.totalorder %s15, 5
    %p284 = pnand %p282, %p283
    %p285 = pneg %p284
    // Predicated region
    $region9: #{_lambda_.5} parent=5 // pred_check
      _
    $region10: #{_lambda_.5} parent=5 // pred_check_branch
      %287 = sbr.rel (%p284) target = $region12
    $region11: #{_lambda_.5} parent=5 // pred_region
      %s288 = ssub.s32 %s15, 1
      // Predicated region
      $region13: #{_lambda_.5} parent=11 // pred_check
        %p289 = pneg %p148
      $region14: #{_lambda_.5} parent=11 // pred_check_branch
        %291 = sbr.rel (%p289) target = $region16
      $region15: #{_lambda_.5} parent=11 // pred_region
        _
      $region16: #{_lambda_.5} parent=11 // pred_fallthru
        _
      // Predicated region
      $region17: #{_lambda_.5} parent=11 // pred_check
        %p292 = pneg %p169
      $region18: #{_lambda_.5} parent=11 // pred_check_branch
        %294 = sbr.rel (%p292) target = $region20
      $region19: #{_lambda_.5} parent=11 // pred_region
        _
      $region20: #{_lambda_.5} parent=11 // pred_fallthru
        _
      // Predicated region
      $region21: #{_lambda_.5} parent=11 // pred_check
        %p295 = pneg %p190
      $region22: #{_lambda_.5} parent=11 // pred_check_branch
        %297 = sbr.rel (%p295) target = $region24
      $region23: #{_lambda_.5} parent=11 // pred_region
        _
      $region24: #{_lambda_.5} parent=11 // pred_fallthru
        _
    $region12: #{_lambda_.5} parent=5 // pred_fallthru
      _
    %p298 = scmp.lt.s32.totalorder %s15, 4
    // Predicated region
    $region25: #{_lambda_.5} parent=5 // pred_check
      %p299 = pneg %p298
    $region26: #{_lambda_.5} parent=5 // pred_check_branch
      %301 = sbr.rel (%p299) target = $region28
    $region27: #{_lambda_.5} parent=5 // pred_region
      // Predicated region
      $region29: #{_lambda_.5} parent=27 // pred_check
        %p302 = pneg %p49
      $region30: #{_lambda_.5} parent=27 // pred_check_branch
        %304 = sbr.rel (%p302) target = $region32
      $region31: #{_lambda_.5} parent=27 // pred_region
        %s305 = smul.u32 8, %s23
        %p306 = scmp.lt.s32.totalorder %s22, 1
        %s307 = scalar_select %p306, %s22, 1
        %p308 = scmp.lt.s32.totalorder %s305, 15
        %s309 = scalar_select %p308, %s305, 15
        %s310 = smul.addr %s309, 2
        %s311 = smul.addr %s307, 32
        %s312 = sadd.s32 %s310, %s311
        %s313 = smul.addr %s312, 8
        %s314 = scalar_lea.vmem %s0, %s313
        %s315 = smul.u32 8, %s23
      $region32: #{_lambda_.5} parent=27 // pred_fallthru
        _
      // Predicated region
      $region33: #{_lambda_.5} parent=27 // pred_check
        %p316 = pneg %p85
      $region34: #{_lambda_.5} parent=27 // pred_check_branch
        %318 = sbr.rel (%p316) target = $region36
      $region35: #{_lambda_.5} parent=27 // pred_region
        %s319 = smul.u32 %s23, 8
        %s320 = ssub.s32 %s319, 1
        %p321 = scmp.gt.s32.totalorder %s320, 0
        %s322 = scalar_select %p321, %s320, 0
        %p323 = scmp.lt.s32.totalorder %s22, 1
        %s324 = scalar_select %p323, %s22, 1
        %p325 = scmp.lt.s32.totalorder %s322, 15
        %s326 = scalar_select %p325, %s322, 15
        %s327 = smul.addr %s326, 2
        %s328 = smul.addr %s324, 32
        %s329 = sadd.s32 %s327, %s328
        %s330 = smul.addr %s329, 8
        %s331 = scalar_lea.vmem %s1, %s330
        %s332 = smul.u32 %s23, 8
        %s333 = ssub.s32 %s332, 1
        %p334 = scmp.gt.s32.totalorder %s333, 0
        %s335 = scalar_select %p334, %s333, 0
      $region36: #{_lambda_.5} parent=27 // pred_fallthru
        _
      // Predicated region
      $region37: #{_lambda_.5} parent=27 // pred_check
        %p336 = pneg %p121
      $region38: #{_lambda_.5} parent=27 // pred_check_branch
        %338 = sbr.rel (%p336) target = $region40
      $region39: #{_lambda_.5} parent=27 // pred_region
        %s339 = smul.u32 %s23, 8
        %s340 = sadd.s32 %s339, 8
        %p341 = scmp.lt.s32.totalorder %s340, 15
        %s342 = scalar_select %p341, %s340, 15
        %p343 = scmp.lt.s32.totalorder %s22, 1
        %s344 = scalar_select %p343, %s22, 1
        %p345 = scmp.lt.s32.totalorder %s342, 15
        %s346 = scalar_select %p345, %s342, 15
        %s347 = smul.addr %s346, 2
        %s348 = smul.addr %s344, 32
        %s349 = sadd.s32 %s347, %s348
        %s350 = smul.addr %s349, 8
        %s351 = scalar_lea.vmem %s2, %s350
        %s352 = smul.u32 %s23, 8
        %s353 = sadd.s32 %s352, 8
        %p354 = scmp.lt.s32.totalorder %s353, 15
        %s355 = scalar_select %p354, %s353, 15
      $region40: #{_lambda_.5} parent=27 // pred_fallthru
        _
    $region28: #{_lambda_.5} parent=5 // pred_fallthru
      _
    %p356 = scmp.le.s32.totalorder 1, %s15
    %p357 = scmp.lt.s32.totalorder %s15, 5
    %p358 = pnand %p356, %p357
    %p359 = pneg %p358
    // Predicated region
    $region41: #{_lambda_.5} parent=5 // pred_check
      _
    $region42: #{_lambda_.5} parent=5 // pred_check_branch
      %361 = sbr.rel (%p358) target = $region44
    $region43: #{_lambda_.5} parent=5 // pred_region
      %s362 = ssub.s32 %s15, 1
      %s363 = smul.u32 8, %s25
      %p364 = scmp.lt.s32.totalorder %s24, 1
      %s365 = scalar_select %p364, %s24, 1
      %p366 = scmp.lt.s32.totalorder %s363, 15
      %s367 = scalar_select %p366, %s363, 15
      %s368 = smul.addr %s367, 2
      %s369 = smul.addr %s365, 32
      %s370 = sadd.s32 %s368, %s369
      %s371 = smul.addr %s370, 8
      %s372 = scalar_lea.vmem %s0, %s371
      %p373 = pneg %p55
      %p374 = pneg %p52
      %s375 = smul.u32 %s25, 8
      %s376 = ssub.s32 %s375, 1
      %p377 = scmp.gt.s32.totalorder %s376, 0
      %s378 = scalar_select %p377, %s376, 0
      %p379 = scmp.lt.s32.totalorder %s24, 1
      %s380 = scalar_select %p379, %s24, 1
      %p381 = scmp.lt.s32.totalorder %s378, 15
      %s382 = scalar_select %p381, %s378, 15
      %s383 = smul.addr %s382, 2
      %s384 = smul.addr %s380, 32
      %s385 = sadd.s32 %s383, %s384
      %s386 = smul.addr %s385, 8
      %s387 = scalar_lea.vmem %s1, %s386
      %p388 = pneg %p91
      %p389 = pneg %p88
      %s390 = smul.u32 %s25, 8
      %s391 = sadd.s32 %s390, 8
      %p392 = scmp.lt.s32.totalorder %s391, 15
      %s393 = scalar_select %p392, %s391, 15
      %p394 = scmp.lt.s32.totalorder %s24, 1
      %s395 = scalar_select %p394, %s24, 1
      %p396 = scmp.lt.s32.totalorder %s393, 15
      %s397 = scalar_select %p396, %s393, 15
      %s398 = smul.addr %s397, 2
      %s399 = smul.addr %s395, 32
      %s400 = sadd.s32 %s398, %s399
      %s401 = smul.addr %s400, 8
      %s402 = scalar_lea.vmem %s2, %s401
      %p403 = pneg %p127
      %p404 = pneg %p124
      %p405 = pneg %p148
      %p406 = pneg %p145
      %p407 = pneg %p169
      %p408 = pneg %p166
      %p409 = pneg %p190
      %p410 = pneg %p187
      %p411 = pneg %p218
      %p412 = pneg %p215
      %s413 = smul.u32 8, %s25
      %p414 = scmp.lt.s32.totalorder %s24, 1
      %s415 = scalar_select %p414, %s24, 1
      %p416 = scmp.lt.s32.totalorder %s413, 15
      %s417 = scalar_select %p416, %s413, 15
      %s418 = smul.addr %s417, 2
      %s419 = smul.addr %s415, 32
      %s420 = sadd.s32 %s418, %s419
      %s421 = smul.addr %s420, 8
      %s422 = scalar_lea.vmem %s6, %s421
      %p423 = pneg %p246
      %p424 = pneg %p243
      %p425 = scmp.lt.s32.totalorder %s24, 1
      %s426 = scalar_select %p425, %s24, 1
      %p427 = scmp.lt.s32.totalorder %s25, 1
      %s428 = scalar_select %p427, %s25, 1
      %s429 = smul.addr %s426, 2
      %s430 = sadd.s32 %s428, %s429
      %s431 = scalar_lea.vmem %s7, %s430
      %p432 = pneg %p274
      %p433 = pneg %p271
      %p434 = scmp.lt.s32.totalorder %s24, 1
      %s435 = scalar_select %p434, %s24, 1
      %p436 = scmp.lt.s32.totalorder %s25, 1
      %s437 = scalar_select %p436, %s25, 1
      %s438 = smul.addr %s435, 2
      %s439 = sadd.s32 %s437, %s438
      %s440 = scalar_lea.vmem %s8, %s439
      %s441 = smul.u32 8, %s25
      %p442 = scmp.lt.s32.totalorder %s24, 1
      %s443 = scalar_select %p442, %s24, 1
      %p444 = scmp.lt.s32.totalorder %s441, 15
      %s445 = scalar_select %p444, %s441, 15
      %s446 = smul.addr %s445, 2
      %s447 = smul.addr %s443, 32
      %s448 = sadd.s32 %s446, %s447
      %s449 = smul.addr %s448, 8
      %s450 = scalar_lea.vmem %s0, %s449
      %s451 = smul.u32 8, %s25
      %s452 = smul.u32 %s25, 8
      %s453 = ssub.s32 %s452, 1
      %p454 = scmp.gt.s32.totalorder %s453, 0
      %s455 = scalar_select %p454, %s453, 0
      %p456 = scmp.lt.s32.totalorder %s24, 1
      %s457 = scalar_select %p456, %s24, 1
      %p458 = scmp.lt.s32.totalorder %s455, 15
      %s459 = scalar_select %p458, %s455, 15
      %s460 = smul.addr %s459, 2
      %s461 = smul.addr %s457, 32
      %s462 = sadd.s32 %s460, %s461
      %s463 = smul.addr %s462, 8
      %s464 = scalar_lea.vmem %s1, %s463
      %s465 = smul.u32 %s25, 8
      %s466 = ssub.s32 %s465, 1
      %p467 = scmp.gt.s32.totalorder %s466, 0
      %s468 = scalar_select %p467, %s466, 0
      %s469 = smul.u32 %s25, 8
      %s470 = sadd.s32 %s469, 8
      %p471 = scmp.lt.s32.totalorder %s470, 15
      %s472 = scalar_select %p471, %s470, 15
      %p473 = scmp.lt.s32.totalorder %s24, 1
      %s474 = scalar_select %p473, %s24, 1
      %p475 = scmp.lt.s32.totalorder %s472, 15
      %s476 = scalar_select %p475, %s472, 15
      %s477 = smul.addr %s476, 2
      %s478 = smul.addr %s474, 32
      %s479 = sadd.s32 %s477, %s478
      %s480 = smul.addr %s479, 8
      %s481 = scalar_lea.vmem %s2, %s480
      %s482 = smul.u32 %s25, 8
      %s483 = sadd.s32 %s482, 8
      %p484 = scmp.lt.s32.totalorder %s483, 15
      %s485 = scalar_select %p484, %s483, 15
      %s486 = smul.u32 8, %s25
      %p487 = scmp.lt.s32.totalorder %s24, 1
      %s488 = scalar_select %p487, %s24, 1
      %p489 = scmp.lt.s32.totalorder %s486, 15
      %s490 = scalar_select %p489, %s486, 15
      %s491 = smul.addr %s490, 2
      %s492 = smul.addr %s488, 32
      %s493 = sadd.s32 %s491, %s492
      %s494 = smul.addr %s493, 8
      %s495 = scalar_lea.vmem %s6, %s494
      %s496 = smul.u32 8, %s25
      %p497 = scmp.lt.s32.totalorder %s24, 1
      %s498 = scalar_select %p497, %s24, 1
      %p499 = scmp.lt.s32.totalorder %s25, 1
      %s500 = scalar_select %p499, %s25, 1
      %s501 = smul.addr %s498, 2
      %s502 = sadd.s32 %s500, %s501
      %s503 = scalar_lea.vmem %s7, %s502
      %p504 = scmp.lt.s32.totalorder %s24, 1
      %s505 = scalar_select %p504, %s24, 1
      %p506 = scmp.lt.s32.totalorder %s25, 1
      %s507 = scalar_select %p506, %s25, 1
      %s508 = smul.addr %s505, 2
      %s509 = sadd.s32 %s507, %s508
      %s510 = scalar_lea.vmem %s8, %s509
      %v511 = vld [vmem:[%s3] sm:$0x1]
      %v512 = vld [vmem:[%s4] sm:$0x1]
      %v513 = vld [vmem:[%s450] sm:$0xff]
      %v514 = vld [vmem:[%s450 + $0x8] sm:$0xff]
      %v515 = vld [vmem:[%s450 + $0x10] sm:$0xff]
      %v516 = vld [vmem:[%s450 + $0x18] sm:$0xff]
      %v517 = vld [vmem:[%s450 + $0x20] sm:$0xff]
      %v518 = vld [vmem:[%s450 + $0x28] sm:$0xff]
      %v519 = vld [vmem:[%s450 + $0x30] sm:$0xff]
      %v520 = vld [vmem:[%s450 + $0x38] sm:$0xff]
      %v521 = vld [vmem:[%s450 + $0x40] sm:$0xff]
      %v522 = vld [vmem:[%s450 + $0x48] sm:$0xff]
      %v523 = vld [vmem:[%s450 + $0x50] sm:$0xff]
      %v524 = vld [vmem:[%s450 + $0x58] sm:$0xff]
      %v525 = vld [vmem:[%s450 + $0x60] sm:$0xff]
      %v526 = vld [vmem:[%s450 + $0x68] sm:$0xff]
      %v527 = vld [vmem:[%s450 + $0x70] sm:$0xff]
      %v528 = vld [vmem:[%s450 + $0x78] sm:$0xff]
      %v530 = vperm.slane %v511, 0
      %v532 = vmul.f32 %v513, %v530
      %v533 = vmul.f32 %v514, %v530
      %v534 = vmul.f32 %v515, %v530
      %v535 = vmul.f32 %v516, %v530
      %v536 = vmul.f32 %v517, %v530
      %v537 = vmul.f32 %v518, %v530
      %v538 = vmul.f32 %v519, %v530
      %v539 = vmul.f32 %v520, %v530
      %v540 = vmul.f32 %v521, %v530
      %v541 = vmul.f32 %v522, %v530
      %v542 = vmul.f32 %v523, %v530
      %v543 = vmul.f32 %v524, %v530
      %v544 = vmul.f32 %v525, %v530
      %v545 = vmul.f32 %v526, %v530
      %v546 = vmul.f32 %v527, %v530
      %v547 = vmul.f32 %v528, %v530
      %v549 = vperm.slane %v512, 0
      %v551 = vadd.f32 %v532, %v549
      %v552 = vadd.f32 %v533, %v549
      %v553 = vadd.f32 %v534, %v549
      %v554 = vadd.f32 %v535, %v549
      %v555 = vadd.f32 %v536, %v549
      %v556 = vadd.f32 %v537, %v549
      %v557 = vadd.f32 %v538, %v549
      %v558 = vadd.f32 %v539, %v549
      %v559 = vadd.f32 %v540, %v549
      %v560 = vadd.f32 %v541, %v549
      %v561 = vadd.f32 %v542, %v549
      %v562 = vadd.f32 %v543, %v549
      %v563 = vadd.f32 %v544, %v549
      %v564 = vadd.f32 %v545, %v549
      %v565 = vadd.f32 %v546, %v549
      %v566 = vadd.f32 %v547, %v549
      %vm567 = vcmp.gt.f32.partialorder %v551, 0.0
      %vm568 = vcmp.gt.f32.partialorder %v552, 0.0
      %vm569 = vcmp.gt.f32.partialorder %v553, 0.0
      %vm570 = vcmp.gt.f32.partialorder %v554, 0.0
      %vm571 = vcmp.gt.f32.partialorder %v555, 0.0
      %vm572 = vcmp.gt.f32.partialorder %v556, 0.0
      %vm573 = vcmp.gt.f32.partialorder %v557, 0.0
      %vm574 = vcmp.gt.f32.partialorder %v558, 0.0
      %vm575 = vcmp.gt.f32.partialorder %v559, 0.0
      %vm576 = vcmp.gt.f32.partialorder %v560, 0.0
      %vm577 = vcmp.gt.f32.partialorder %v561, 0.0
      %vm578 = vcmp.gt.f32.partialorder %v562, 0.0
      %vm579 = vcmp.gt.f32.partialorder %v563, 0.0
      %vm580 = vcmp.gt.f32.partialorder %v564, 0.0
      %vm581 = vcmp.gt.f32.partialorder %v565, 0.0
      %vm582 = vcmp.gt.f32.partialorder %v566, 0.0
      %v583 = vmul.f32 %v551, 0.1
      %v584 = vmul.f32 %v552, 0.1
      %v585 = vmul.f32 %v553, 0.1
      %v586 = vmul.f32 %v554, 0.1
      %v587 = vmul.f32 %v555, 0.1
      %v588 = vmul.f32 %v556, 0.1
      %v589 = vmul.f32 %v557, 0.1
      %v590 = vmul.f32 %v558, 0.1
      %v591 = vmul.f32 %v559, 0.1
      %v592 = vmul.f32 %v560, 0.1
      %v593 = vmul.f32 %v561, 0.1
      %v594 = vmul.f32 %v562, 0.1
      %v595 = vmul.f32 %v563, 0.1
      %v596 = vmul.f32 %v564, 0.1
      %v597 = vmul.f32 %v565, 0.1
      %v598 = vmul.f32 %v566, 0.1
      %v599 = vsel %vm567, %v551, %v583
      %v600 = vsel %vm568, %v552, %v584
      %v601 = vsel %vm569, %v553, %v585
      %v602 = vsel %vm570, %v554, %v586
      %v603 = vsel %vm571, %v555, %v587
      %v604 = vsel %vm572, %v556, %v588
      %v605 = vsel %vm573, %v557, %v589
      %v606 = vsel %vm574, %v558, %v590
      %v607 = vsel %vm575, %v559, %v591
      %v608 = vsel %vm576, %v560, %v592
      %v609 = vsel %vm577, %v561, %v593
      %v610 = vsel %vm578, %v562, %v594
      %v611 = vsel %vm579, %v563, %v595
      %v612 = vsel %vm580, %v564, %v596
      %v613 = vsel %vm581, %v565, %v597
      %v614 = vsel %vm582, %v566, %v598
      %v615 = vld [vmem:[%s464] sm:$0xff]
      %v616 = vld [vmem:[%s464 + $0x8] sm:$0xff]
      %v617 = vmul.f32 %v615, %v530
      %v618 = vmul.f32 %v616, %v530
      %v619 = vadd.f32 %v617, %v549
      %v620 = vadd.f32 %v618, %v549
      %vm621 = vcmp.gt.f32.partialorder %v619, 0.0
      %vm622 = vcmp.gt.f32.partialorder %v620, 0.0
      %v623 = vmul.f32 %v619, 0.1
      %v624 = vmul.f32 %v620, 0.1
      %v625 = vsel %vm621, %v619, %v623
      %v626 = vsel %vm622, %v620, %v624
      %v627 = vld [vmem:[%s481] sm:$0xff]
      %v628 = vld [vmem:[%s481 + $0x8] sm:$0xff]
      %v629 = vmul.f32 %v627, %v530
      %v630 = vmul.f32 %v628, %v530
      %v631 = vadd.f32 %v629, %v549
      %v632 = vadd.f32 %v630, %v549
      %vm633 = vcmp.gt.f32.partialorder %v631, 0.0
      %vm634 = vcmp.gt.f32.partialorder %v632, 0.0
      %v635 = vmul.f32 %v631, 0.1
      %v636 = vmul.f32 %v632, 0.1
      %v637 = vsel %vm633, %v631, %v635
      %v638 = vsel %vm634, %v632, %v636
      %p639 = scmp.gt.s32.totalorder %s25, 0
      %s640 = scalar_select %p639, 1, 0
      %s641 = scvt.s32.f32 %s640
      %v642 = vstv %s641
      %v643 = vmul.f32 %v625, %v642
      %v644 = vmul.f32 %v626, %v642
      %p645 = scmp.lt.s32.totalorder %s25, 1
      %s646 = scalar_select %p645, 1, 0
      %s647 = scvt.s32.f32 %s646
      %v648 = vstv %s647
      %v649 = vmul.f32 %v637, %v648
      %v650 = vmul.f32 %v638, %v648
      %vm671 = vcmask 1040384
      %v672 = vrot.slane %v643, 7
      %v673 = vrot.slane %v644, 7
      %v674 = vsel %vm671, %v672, %v673
      %v675 = vrot.slane %v599, 7
      %v676 = vrot.slane %v600, 7
      %v677 = vsel %vm671, %v675, %v676
      %v678 = vrot.slane %v601, 7
      %v679 = vrot.slane %v602, 7
      %v680 = vsel %vm671, %v678, %v679
      %v681 = vrot.slane %v603, 7
      %v682 = vrot.slane %v604, 7
      %v683 = vsel %vm671, %v681, %v682
      %v684 = vrot.slane %v605, 7
      %v685 = vrot.slane %v606, 7
      %v686 = vsel %vm671, %v684, %v685
      %v687 = vrot.slane %v607, 7
      %v688 = vrot.slane %v608, 7
      %v689 = vsel %vm671, %v687, %v688
      %v690 = vrot.slane %v609, 7
      %v691 = vrot.slane %v610, 7
      %v692 = vsel %vm671, %v690, %v691
      %v693 = vrot.slane %v611, 7
      %v694 = vrot.slane %v612, 7
      %v695 = vsel %vm671, %v693, %v694
      %v696 = vrot.slane %v613, 7
      %v697 = vrot.slane %v614, 7
      %v698 = vsel %vm671, %v696, %v697
      %v699 = vrot.slane %v649, 7
      %v700 = vrot.slane %v650, 7
      %v701 = vsel %vm671, %v699, %v700
      %v732 = vsel %vm671, 0.0, %v672
      %v733 = vsel %vm671, 0.0, %v675
      %v734 = vsel %vm671, 0.0, %v678
      %v735 = vsel %vm671, 0.0, %v681
      %v736 = vsel %vm671, 0.0, %v684
      %v737 = vsel %vm671, 0.0, %v687
      %v738 = vsel %vm671, 0.0, %v690
      %v739 = vsel %vm671, 0.0, %v693
      %v740 = vsel %vm671, 0.0, %v696
      %v741 = vsel %vm671, 0.0, %v699
      %v742 = vsel %vm671, %v673, 0.0
      %v743 = vsel %vm671, %v676, 0.0
      %v744 = vsel %vm671, %v679, 0.0
      %v745 = vsel %vm671, %v682, 0.0
      %v746 = vsel %vm671, %v685, 0.0
      %v747 = vsel %vm671, %v688, 0.0
      %v748 = vsel %vm671, %v691, 0.0
      %v749 = vsel %vm671, %v694, 0.0
      %v750 = vsel %vm671, %v697, 0.0
      %v751 = vsel %vm671, %v700, 0.0
      %vm768 = vcmask 1046528
      %v769 = vrot.slane %v732, 1
      %v770 = vrot.slane %v674, 1
      %v771 = vsel %vm768, %v769, %v770
      %v772 = vrot.slane %v742, 1
      %v773 = vsel %vm768, %v770, %v772
      %v774 = vrot.slane %v733, 1
      %v775 = vrot.slane %v677, 1
      %v776 = vsel %vm768, %v774, %v775
      %v777 = vrot.slane %v743, 1
      %v778 = vsel %vm768, %v775, %v777
      %v779 = vrot.slane %v734, 1
      %v780 = vrot.slane %v680, 1
      %v781 = vsel %vm768, %v779, %v780
      %v782 = vrot.slane %v744, 1
      %v783 = vsel %vm768, %v780, %v782
      %v784 = vrot.slane %v735, 1
      %v785 = vrot.slane %v683, 1
      %v786 = vsel %vm768, %v784, %v785
      %v787 = vrot.slane %v745, 1
      %v788 = vsel %vm768, %v785, %v787
      %v789 = vrot.slane %v736, 1
      %v790 = vrot.slane %v686, 1
      %v791 = vsel %vm768, %v789, %v790
      %v792 = vrot.slane %v746, 1
      %v793 = vsel %vm768, %v790, %v792
      %v794 = vrot.slane %v737, 1
      %v795 = vrot.slane %v689, 1
      %v796 = vsel %vm768, %v794, %v795
      %v797 = vrot.slane %v747, 1
      %v798 = vsel %vm768, %v795, %v797
      %v799 = vrot.slane %v738, 1
      %v800 = vrot.slane %v692, 1
      %v801 = vsel %vm768, %v799, %v800
      %v802 = vrot.slane %v748, 1
      %v803 = vsel %vm768, %v800, %v802
      %v804 = vrot.slane %v739, 1
      %v805 = vrot.slane %v695, 1
      %v806 = vsel %vm768, %v804, %v805
      %v807 = vrot.slane %v749, 1
      %v808 = vsel %vm768, %v805, %v807
      %vm825 = vcmask 1045504
      %v826 = vrot.slane %v732, 2
      %v827 = vrot.slane %v674, 2
      %v828 = vsel %vm825, %v826, %v827
      %v829 = vrot.slane %v742, 2
      %v830 = vsel %vm825, %v827, %v829
      %v831 = vrot.slane %v733, 2
      %v832 = vrot.slane %v677, 2
      %v833 = vsel %vm825, %v831, %v832
      %v834 = vrot.slane %v743, 2
      %v835 = vsel %vm825, %v832, %v834
      %v836 = vrot.slane %v734, 2
      %v837 = vrot.slane %v680, 2
      %v838 = vsel %vm825, %v836, %v837
      %v839 = vrot.slane %v744, 2
      %v840 = vsel %vm825, %v837, %v839
      %v841 = vrot.slane %v735, 2
      %v842 = vrot.slane %v683, 2
      %v843 = vsel %vm825, %v841, %v842
      %v844 = vrot.slane %v745, 2
      %v845 = vsel %vm825, %v842, %v844
      %v846 = vrot.slane %v736, 2
      %v847 = vrot.slane %v686, 2
      %v848 = vsel %vm825, %v846, %v847
      %v849 = vrot.slane %v746, 2
      %v850 = vsel %vm825, %v847, %v849
      %v851 = vrot.slane %v737, 2
      %v852 = vrot.slane %v689, 2
      %v853 = vsel %vm825, %v851, %v852
      %v854 = vrot.slane %v747, 2
      %v855 = vsel %vm825, %v852, %v854
      %v856 = vrot.slane %v738, 2
      %v857 = vrot.slane %v692, 2
      %v858 = vsel %vm825, %v856, %v857
      %v859 = vrot.slane %v748, 2
      %v860 = vsel %vm825, %v857, %v859
      %v861 = vrot.slane %v739, 2
      %v862 = vrot.slane %v695, 2
      %v863 = vsel %vm825, %v861, %v862
      %v864 = vrot.slane %v749, 2
      %v865 = vsel %vm825, %v862, %v864
      %v882 = vld [vmem:[%s5] sm:$0xff]
      %v883 = vld [vmem:[%s5 + $0x8] sm:$0xff]
      %v884 = vld [vmem:[%s5 + $0x10] sm:$0xff]
      %v885 = vld [vmem:[%s5 + $0x18] sm:$0xff]
      %v886 = vld [vmem:[%s5 + $0x20] sm:$0xff]
      %v887 = vld [vmem:[%s5 + $0x28] sm:$0xff]
      %v888 = vld [vmem:[%s5 + $0x30] sm:$0xff]
      %v889 = vld [vmem:[%s5 + $0x38] sm:$0xff]
      %v890 = vld [vmem:[%s5 + $0x40] sm:$0xff]
      %v891 = vld [vmem:[%s5 + $0x48] sm:$0xff]
      %v892 = vld [vmem:[%s5 + $0x50] sm:$0xff]
      %v893 = vld [vmem:[%s5 + $0x58] sm:$0xff]
      %v894 = vld [vmem:[%s5 + $0x60] sm:$0xff]
      %v895 = vld [vmem:[%s5 + $0x68] sm:$0xff]
      %v896 = vld [vmem:[%s5 + $0x70] sm:$0xff]
      %v897 = vld [vmem:[%s5 + $0x78] sm:$0xff]
      %v898 = vld [vmem:[%s5 + $0x80] sm:$0xff]
      %v899 = vld [vmem:[%s5 + $0x88] sm:$0xff]
      %v900 = vld [vmem:[%s5 + $0x90] sm:$0xff]
      %v901 = vld [vmem:[%s5 + $0x98] sm:$0xff]
      %v902 = vld [vmem:[%s5 + $0xa0] sm:$0xff]
      %v903 = vld [vmem:[%s5 + $0xa8] sm:$0xff]
      %v904 = vld [vmem:[%s5 + $0xb0] sm:$0xff]
      %v905 = vld [vmem:[%s5 + $0xb8] sm:$0xff]
      %v906 = vld [vmem:[%s5 + $0xc0] sm:$0xff]
      %v907 = vld [vmem:[%s5 + $0xc8] sm:$0xff]
      %v908 = vld [vmem:[%s5 + $0xd0] sm:$0xff]
      %v909 = vld [vmem:[%s5 + $0xd8] sm:$0xff]
      %v910 = vld [vmem:[%s5 + $0xe0] sm:$0xff]
      %v911 = vld [vmem:[%s5 + $0xe8] sm:$0xff]
      %v912 = vld [vmem:[%s5 + $0xf0] sm:$0xff]
      %v913 = vld [vmem:[%s5 + $0xf8] sm:$0xff]
      %v914 = vld [vmem:[%s5 + $0x100] sm:$0xff]
      %v915 = vld [vmem:[%s5 + $0x108] sm:$0xff]
      %v916 = vld [vmem:[%s5 + $0x110] sm:$0xff]
      %v917 = vld [vmem:[%s5 + $0x118] sm:$0xff]
      %v918 = vld [vmem:[%s5 + $0x120] sm:$0xff]
      %v919 = vld [vmem:[%s5 + $0x128] sm:$0xff]
      %v920 = vld [vmem:[%s5 + $0x130] sm:$0xff]
      %v921 = vld [vmem:[%s5 + $0x138] sm:$0xff]
      %v922 = vld [vmem:[%s5 + $0x140] sm:$0xff]
      %v923 = vld [vmem:[%s5 + $0x148] sm:$0xff]
      %v924 = vld [vmem:[%s5 + $0x150] sm:$0xff]
      %v925 = vld [vmem:[%s5 + $0x158] sm:$0xff]
      %v926 = vld [vmem:[%s5 + $0x160] sm:$0xff]
      %v927 = vld [vmem:[%s5 + $0x168] sm:$0xff]
      %v928 = vld [vmem:[%s5 + $0x170] sm:$0xff]
      %v929 = vld [vmem:[%s5 + $0x178] sm:$0xff]
      %v932 = vrot.slane %v740, 1
      %v933 = vrot.slane %v698, 1
      %v934 = vsel %vm768, %v932, %v933
      %v935 = vrot.slane %v750, 1
      %v936 = vsel %vm768, %v933, %v935
      %v939 = vrot.slane %v740, 2
      %v940 = vrot.slane %v698, 2
      %v941 = vsel %vm825, %v939, %v940
      %v942 = vrot.slane %v750, 2
      %v943 = vsel %vm825, %v940, %v942
      %s946 = scalar_lea.vmem %s5, 384
      %v947 = vld [vmem:[%s946] sm:$0xff]
      %v948 = vld [vmem:[%s946 + $0x8] sm:$0xff]
      %v949 = vld [vmem:[%s946 + $0x10] sm:$0xff]
      %v950 = vld [vmem:[%s946 + $0x18] sm:$0xff]
      %v951 = vld [vmem:[%s946 + $0x20] sm:$0xff]
      %v952 = vld [vmem:[%s946 + $0x28] sm:$0xff]
      %v953 = vld [vmem:[%s946 + $0x30] sm:$0xff]
      %v954 = vld [vmem:[%s946 + $0x38] sm:$0xff]
      %v955 = vld [vmem:[%s946 + $0x40] sm:$0xff]
      %v956 = vld [vmem:[%s946 + $0x48] sm:$0xff]
      %v957 = vld [vmem:[%s946 + $0x50] sm:$0xff]
      %v958 = vld [vmem:[%s946 + $0x58] sm:$0xff]
      %v959 = vld [vmem:[%s946 + $0x60] sm:$0xff]
      %v960 = vld [vmem:[%s946 + $0x68] sm:$0xff]
      %v961 = vld [vmem:[%s946 + $0x70] sm:$0xff]
      %v962 = vld [vmem:[%s946 + $0x78] sm:$0xff]
      %v963 = vld [vmem:[%s946 + $0x80] sm:$0xff]
      %v964 = vld [vmem:[%s946 + $0x88] sm:$0xff]
      %v965 = vld [vmem:[%s946 + $0x90] sm:$0xff]
      %v966 = vld [vmem:[%s946 + $0x98] sm:$0xff]
      %v967 = vld [vmem:[%s946 + $0xa0] sm:$0xff]
      %v968 = vld [vmem:[%s946 + $0xa8] sm:$0xff]
      %v969 = vld [vmem:[%s946 + $0xb0] sm:$0xff]
      %v970 = vld [vmem:[%s946 + $0xb8] sm:$0xff]
      %v971 = vld [vmem:[%s946 + $0xc0] sm:$0xff]
      %v972 = vld [vmem:[%s946 + $0xc8] sm:$0xff]
      %v973 = vld [vmem:[%s946 + $0xd0] sm:$0xff]
      %v974 = vld [vmem:[%s946 + $0xd8] sm:$0xff]
      %v975 = vld [vmem:[%s946 + $0xe0] sm:$0xff]
      %v976 = vld [vmem:[%s946 + $0xe8] sm:$0xff]
      %v977 = vld [vmem:[%s946 + $0xf0] sm:$0xff]
      %v978 = vld [vmem:[%s946 + $0xf8] sm:$0xff]
      %v979 = vld [vmem:[%s946 + $0x100] sm:$0xff]
      %v980 = vld [vmem:[%s946 + $0x108] sm:$0xff]
      %v981 = vld [vmem:[%s946 + $0x110] sm:$0xff]
      %v982 = vld [vmem:[%s946 + $0x118] sm:$0xff]
      %v983 = vld [vmem:[%s946 + $0x120] sm:$0xff]
      %v984 = vld [vmem:[%s946 + $0x128] sm:$0xff]
      %v985 = vld [vmem:[%s946 + $0x130] sm:$0xff]
      %v986 = vld [vmem:[%s946 + $0x138] sm:$0xff]
      %v987 = vld [vmem:[%s946 + $0x140] sm:$0xff]
      %v988 = vld [vmem:[%s946 + $0x148] sm:$0xff]
      %v989 = vld [vmem:[%s946 + $0x150] sm:$0xff]
      %v990 = vld [vmem:[%s946 + $0x158] sm:$0xff]
      %v991 = vld [vmem:[%s946 + $0x160] sm:$0xff]
      %v992 = vld [vmem:[%s946 + $0x168] sm:$0xff]
      %v993 = vld [vmem:[%s946 + $0x170] sm:$0xff]
      %v994 = vld [vmem:[%s946 + $0x178] sm:$0xff]
      %995 = vmatpush.msra.mxu0 %v962
      %996 = vmatpush.msra.mxu0 %v961
      %997 = vmatpush.msra.mxu0 %v960
      %998 = vmatpush.msra.mxu0 %v959
      %999 = vmatpush.msra.mxu0 %v958
      %1000 = vmatpush.msra.mxu0 %v957
      %1001 = vmatpush.msra.mxu0 %v956
      %1002 = vmatpush.msra.mxu0 %v955
      %1003 = vmatpush.msra.mxu0 %v954
      %1004 = vmatpush.msra.mxu0 %v953
      %1005 = vmatpush.msra.mxu0 %v952
      %1006 = vmatpush.msra.mxu0 %v951
      %1007 = vmatpush.msra.mxu0 %v950
      %1008 = vmatpush.msra.mxu0 %v949
      %1009 = vmatpush.msra.mxu0 %v948
      %1010 = vmatpush.msra.mxu0 %v947
      %1011 = vmatmul.f32.gmra.mxu0 %v733
      %v1012 = vpop.f32.mrf.mxu0
      %v1013 = vadd.f32 0.0, %v1012
      %1014 = vmatmul.f32.gmra.mxu0 %v677
      %v1015 = vpop.f32.mrf.mxu0
      %v1016 = vadd.f32 0.0, %v1015
      %1017 = vmatmul.f32.gmra.mxu0 %v734
      %v1018 = vpop.f32.mrf.mxu0
      %v1019 = vadd.f32 0.0, %v1018
      %1020 = vmatmul.f32.gmra.mxu0 %v680
      %v1021 = vpop.f32.mrf.mxu0
      %v1022 = vadd.f32 0.0, %v1021
      %1023 = vmatmul.f32.gmra.mxu0 %v735
      %v1024 = vpop.f32.mrf.mxu0
      %v1025 = vadd.f32 0.0, %v1024
      %1026 = vmatmul.f32.gmra.mxu0 %v683
      %v1027 = vpop.f32.mrf.mxu0
      %v1028 = vadd.f32 0.0, %v1027
      %1029 = vmatmul.f32.gmra.mxu0 %v736
      %v1030 = vpop.f32.mrf.mxu0
      %v1031 = vadd.f32 0.0, %v1030
      %1032 = vmatmul.f32.gmra.mxu0 %v686
      %v1033 = vpop.f32.mrf.mxu0
      %v1034 = vadd.f32 0.0, %v1033
      %1035 = vmatmul.f32.gmra.mxu0 %v737
      %v1036 = vpop.f32.mrf.mxu0
      %v1037 = vadd.f32 0.0, %v1036
      %1038 = vmatmul.f32.gmra.mxu0 %v689
      %v1039 = vpop.f32.mrf.mxu0
      %v1040 = vadd.f32 0.0, %v1039
      %1041 = vmatmul.f32.gmra.mxu0 %v738
      %v1042 = vpop.f32.mrf.mxu0
      %v1043 = vadd.f32 0.0, %v1042
      %1044 = vmatmul.f32.gmra.mxu0 %v692
      %v1045 = vpop.f32.mrf.mxu0
      %v1046 = vadd.f32 0.0, %v1045
      %1047 = vmatmul.f32.gmra.mxu0 %v739
      %v1048 = vpop.f32.mrf.mxu0
      %v1049 = vadd.f32 0.0, %v1048
      %1050 = vmatmul.f32.gmra.mxu0 %v695
      %v1051 = vpop.f32.mrf.mxu0
      %v1052 = vadd.f32 0.0, %v1051
      %1053 = vmatmul.f32.gmra.mxu0 %v740
      %v1054 = vpop.f32.mrf.mxu0
      %v1055 = vadd.f32 0.0, %v1054
      %1056 = vmatmul.f32.gmra.mxu0 %v698
      %v1057 = vpop.f32.mrf.mxu0
      %v1058 = vadd.f32 0.0, %v1057
      %1059 = vdwg.mxu0
      %1060 = vmatpush.msra.mxu0 %v978
      %1061 = vmatpush.msra.mxu0 %v977
      %1062 = vmatpush.msra.mxu0 %v976
      %1063 = vmatpush.msra.mxu0 %v975
      %1064 = vmatpush.msra.mxu0 %v974
      %1065 = vmatpush.msra.mxu0 %v973
      %1066 = vmatpush.msra.mxu0 %v972
      %1067 = vmatpush.msra.mxu0 %v971
      %1068 = vmatpush.msra.mxu0 %v970
      %1069 = vmatpush.msra.mxu0 %v969
      %1070 = vmatpush.msra.mxu0 %v968
      %1071 = vmatpush.msra.mxu0 %v967
      %1072 = vmatpush.msra.mxu0 %v966
      %1073 = vmatpush.msra.mxu0 %v965
      %1074 = vmatpush.msra.mxu0 %v964
      %1075 = vmatpush.msra.mxu0 %v963
      %1076 = vmatmul.f32.gmra.mxu0 %v776
      %v1077 = vpop.f32.mrf.mxu0
      %v1078 = vadd.f32 %v1013, %v1077
      %1079 = vmatmul.f32.gmra.mxu0 %v778
      %v1080 = vpop.f32.mrf.mxu0
      %v1081 = vadd.f32 %v1016, %v1080
      %1082 = vmatmul.f32.gmra.mxu0 %v781
      %v1083 = vpop.f32.mrf.mxu0
      %v1084 = vadd.f32 %v1019, %v1083
      %1085 = vmatmul.f32.gmra.mxu0 %v783
      %v1086 = vpop.f32.mrf.mxu0
      %v1087 = vadd.f32 %v1022, %v1086
      %1088 = vmatmul.f32.gmra.mxu0 %v786
      %v1089 = vpop.f32.mrf.mxu0
      %v1090 = vadd.f32 %v1025, %v1089
      %1091 = vmatmul.f32.gmra.mxu0 %v788
      %v1092 = vpop.f32.mrf.mxu0
      %v1093 = vadd.f32 %v1028, %v1092
      %1094 = vmatmul.f32.gmra.mxu0 %v791
      %v1095 = vpop.f32.mrf.mxu0
      %v1096 = vadd.f32 %v1031, %v1095
      %1097 = vmatmul.f32.gmra.mxu0 %v793
      %v1098 = vpop.f32.mrf.mxu0
      %v1099 = vadd.f32 %v1034, %v1098
      %1100 = vmatmul.f32.gmra.mxu0 %v796
      %v1101 = vpop.f32.mrf.mxu0
      %v1102 = vadd.f32 %v1037, %v1101
      %1103 = vmatmul.f32.gmra.mxu0 %v798
      %v1104 = vpop.f32.mrf.mxu0
      %v1105 = vadd.f32 %v1040, %v1104
      %1106 = vmatmul.f32.gmra.mxu0 %v801
      %v1107 = vpop.f32.mrf.mxu0
      %v1108 = vadd.f32 %v1043, %v1107
      %1109 = vmatmul.f32.gmra.mxu0 %v803
      %v1110 = vpop.f32.mrf.mxu0
      %v1111 = vadd.f32 %v1046, %v1110
      %1112 = vmatmul.f32.gmra.mxu0 %v806
      %v1113 = vpop.f32.mrf.mxu0
      %v1114 = vadd.f32 %v1049, %v1113
      %1115 = vmatmul.f32.gmra.mxu0 %v808
      %v1116 = vpop.f32.mrf.mxu0
      %v1117 = vadd.f32 %v1052, %v1116
      %1118 = vmatmul.f32.gmra.mxu0 %v934
      %v1119 = vpop.f32.mrf.mxu0
      %v1120 = vadd.f32 %v1055, %v1119
      %1121 = vmatmul.f32.gmra.mxu0 %v936
      %v1122 = vpop.f32.mrf.mxu0
      %v1123 = vadd.f32 %v1058, %v1122
      %1124 = vdwg.mxu0
      %1125 = vmatpush.msra.mxu0 %v994
      %1126 = vmatpush.msra.mxu0 %v993
      %1127 = vmatpush.msra.mxu0 %v992
      %1128 = vmatpush.msra.mxu0 %v991
      %1129 = vmatpush.msra.mxu0 %v990
      %1130 = vmatpush.msra.mxu0 %v989
      %1131 = vmatpush.msra.mxu0 %v988
      %1132 = vmatpush.msra.mxu0 %v987
      %1133 = vmatpush.msra.mxu0 %v986
      %1134 = vmatpush.msra.mxu0 %v985
      %1135 = vmatpush.msra.mxu0 %v984
      %1136 = vmatpush.msra.mxu0 %v983
      %1137 = vmatpush.msra.mxu0 %v982
      %1138 = vmatpush.msra.mxu0 %v981
      %1139 = vmatpush.msra.mxu0 %v980
      %1140 = vmatpush.msra.mxu0 %v979
      %1141 = vmatmul.f32.gmra.mxu0 %v833
      %v1142 = vpop.f32.mrf.mxu0
      %v1143 = vadd.f32 %v1078, %v1142
      %1144 = vmatmul.f32.gmra.mxu0 %v835
      %v1145 = vpop.f32.mrf.mxu0
      %v1146 = vadd.f32 %v1081, %v1145
      %1147 = vmatmul.f32.gmra.mxu0 %v838
      %v1148 = vpop.f32.mrf.mxu0
      %v1149 = vadd.f32 %v1084, %v1148
      %1150 = vmatmul.f32.gmra.mxu0 %v840
      %v1151 = vpop.f32.mrf.mxu0
      %v1152 = vadd.f32 %v1087, %v1151
      %1153 = vmatmul.f32.gmra.mxu0 %v843
      %v1154 = vpop.f32.mrf.mxu0
      %v1155 = vadd.f32 %v1090, %v1154
      %1156 = vmatmul.f32.gmra.mxu0 %v845
      %v1157 = vpop.f32.mrf.mxu0
      %v1158 = vadd.f32 %v1093, %v1157
      %1159 = vmatmul.f32.gmra.mxu0 %v848
      %v1160 = vpop.f32.mrf.mxu0
      %v1161 = vadd.f32 %v1096, %v1160
      %1162 = vmatmul.f32.gmra.mxu0 %v850
      %v1163 = vpop.f32.mrf.mxu0
      %v1164 = vadd.f32 %v1099, %v1163
      %1165 = vmatmul.f32.gmra.mxu0 %v853
      %v1166 = vpop.f32.mrf.mxu0
      %v1167 = vadd.f32 %v1102, %v1166
      %1168 = vmatmul.f32.gmra.mxu0 %v855
      %v1169 = vpop.f32.mrf.mxu0
      %v1170 = vadd.f32 %v1105, %v1169
      %1171 = vmatmul.f32.gmra.mxu0 %v858
      %v1172 = vpop.f32.mrf.mxu0
      %v1173 = vadd.f32 %v1108, %v1172
      %1174 = vmatmul.f32.gmra.mxu0 %v860
      %v1175 = vpop.f32.mrf.mxu0
      %v1176 = vadd.f32 %v1111, %v1175
      %1177 = vmatmul.f32.gmra.mxu0 %v863
      %v1178 = vpop.f32.mrf.mxu0
      %v1179 = vadd.f32 %v1114, %v1178
      %1180 = vmatmul.f32.gmra.mxu0 %v865
      %v1181 = vpop.f32.mrf.mxu0
      %v1182 = vadd.f32 %v1117, %v1181
      %1183 = vmatmul.f32.gmra.mxu0 %v941
      %v1184 = vpop.f32.mrf.mxu0
      %v1185 = vadd.f32 %v1120, %v1184
      %1186 = vmatmul.f32.gmra.mxu0 %v943
      %v1187 = vpop.f32.mrf.mxu0
      %v1188 = vadd.f32 %v1123, %v1187
      %1189 = vdwg.mxu0
      %1190 = vmatpush.msra.mxu0 %v897
      %1191 = vmatpush.msra.mxu0 %v896
      %1192 = vmatpush.msra.mxu0 %v895
      %1193 = vmatpush.msra.mxu0 %v894
      %1194 = vmatpush.msra.mxu0 %v893
      %1195 = vmatpush.msra.mxu0 %v892
      %1196 = vmatpush.msra.mxu0 %v891
      %1197 = vmatpush.msra.mxu0 %v890
      %1198 = vmatpush.msra.mxu0 %v889
      %1199 = vmatpush.msra.mxu0 %v888
      %1200 = vmatpush.msra.mxu0 %v887
      %1201 = vmatpush.msra.mxu0 %v886
      %1202 = vmatpush.msra.mxu0 %v885
      %1203 = vmatpush.msra.mxu0 %v884
      %1204 = vmatpush.msra.mxu0 %v883
      %1205 = vmatpush.msra.mxu0 %v882
      %1206 = vmatmul.f32.gmra.mxu0 %v732
      %v1207 = vpop.f32.mrf.mxu0
      %v1208 = vadd.f32 %v1143, %v1207
      %1209 = vmatmul.f32.gmra.mxu0 %v674
      %v1210 = vpop.f32.mrf.mxu0
      %v1211 = vadd.f32 %v1146, %v1210
      %1212 = vmatmul.f32.gmra.mxu0 %v733
      %v1213 = vpop.f32.mrf.mxu0
      %v1214 = vadd.f32 %v1149, %v1213
      %1215 = vmatmul.f32.gmra.mxu0 %v677
      %v1216 = vpop.f32.mrf.mxu0
      %v1217 = vadd.f32 %v1152, %v1216
      %1218 = vmatmul.f32.gmra.mxu0 %v734
      %v1219 = vpop.f32.mrf.mxu0
      %v1220 = vadd.f32 %v1155, %v1219
      %1221 = vmatmul.f32.gmra.mxu0 %v680
      %v1222 = vpop.f32.mrf.mxu0
      %v1223 = vadd.f32 %v1158, %v1222
      %1224 = vmatmul.f32.gmra.mxu0 %v735
      %v1225 = vpop.f32.mrf.mxu0
      %v1226 = vadd.f32 %v1161, %v1225
      %1227 = vmatmul.f32.gmra.mxu0 %v683
      %v1228 = vpop.f32.mrf.mxu0
      %v1229 = vadd.f32 %v1164, %v1228
      %1230 = vmatmul.f32.gmra.mxu0 %v736
      %v1231 = vpop.f32.mrf.mxu0
      %v1232 = vadd.f32 %v1167, %v1231
      %1233 = vmatmul.f32.gmra.mxu0 %v686
      %v1234 = vpop.f32.mrf.mxu0
      %v1235 = vadd.f32 %v1170, %v1234
      %1236 = vmatmul.f32.gmra.mxu0 %v737
      %v1237 = vpop.f32.mrf.mxu0
      %v1238 = vadd.f32 %v1173, %v1237
      %1239 = vmatmul.f32.gmra.mxu0 %v689
      %v1240 = vpop.f32.mrf.mxu0
      %v1241 = vadd.f32 %v1176, %v1240
      %1242 = vmatmul.f32.gmra.mxu0 %v738
      %v1243 = vpop.f32.mrf.mxu0
      %v1244 = vadd.f32 %v1179, %v1243
      %1245 = vmatmul.f32.gmra.mxu0 %v692
      %v1246 = vpop.f32.mrf.mxu0
      %v1247 = vadd.f32 %v1182, %v1246
      %1248 = vmatmul.f32.gmra.mxu0 %v739
      %v1249 = vpop.f32.mrf.mxu0
      %v1250 = vadd.f32 %v1185, %v1249
      %1251 = vmatmul.f32.gmra.mxu0 %v695
      %v1252 = vpop.f32.mrf.mxu0
      %v1253 = vadd.f32 %v1188, %v1252
      %1254 = vdwg.mxu0
      %1255 = vmatpush.msra.mxu0 %v913
      %1256 = vmatpush.msra.mxu0 %v912
      %1257 = vmatpush.msra.mxu0 %v911
      %1258 = vmatpush.msra.mxu0 %v910
      %1259 = vmatpush.msra.mxu0 %v909
      %1260 = vmatpush.msra.mxu0 %v908
      %1261 = vmatpush.msra.mxu0 %v907
      %1262 = vmatpush.msra.mxu0 %v906
      %1263 = vmatpush.msra.mxu0 %v905
      %1264 = vmatpush.msra.mxu0 %v904
      %1265 = vmatpush.msra.mxu0 %v903
      %1266 = vmatpush.msra.mxu0 %v902
      %1267 = vmatpush.msra.mxu0 %v901
      %1268 = vmatpush.msra.mxu0 %v900
      %1269 = vmatpush.msra.mxu0 %v899
      %1270 = vmatpush.msra.mxu0 %v898
      %1271 = vmatmul.f32.gmra.mxu0 %v771
      %v1272 = vpop.f32.mrf.mxu0
      %v1273 = vadd.f32 %v1208, %v1272
      %1274 = vmatmul.f32.gmra.mxu0 %v773
      %v1275 = vpop.f32.mrf.mxu0
      %v1276 = vadd.f32 %v1211, %v1275
      %1277 = vmatmul.f32.gmra.mxu0 %v776
      %v1278 = vpop.f32.mrf.mxu0
      %v1279 = vadd.f32 %v1214, %v1278
      %1280 = vmatmul.f32.gmra.mxu0 %v778
      %v1281 = vpop.f32.mrf.mxu0
      %v1282 = vadd.f32 %v1217, %v1281
      %1283 = vmatmul.f32.gmra.mxu0 %v781
      %v1284 = vpop.f32.mrf.mxu0
      %v1285 = vadd.f32 %v1220, %v1284
      %1286 = vmatmul.f32.gmra.mxu0 %v783
      %v1287 = vpop.f32.mrf.mxu0
      %v1288 = vadd.f32 %v1223, %v1287
      %1289 = vmatmul.f32.gmra.mxu0 %v786
      %v1290 = vpop.f32.mrf.mxu0
      %v1291 = vadd.f32 %v1226, %v1290
      %1292 = vmatmul.f32.gmra.mxu0 %v788
      %v1293 = vpop.f32.mrf.mxu0
      %v1294 = vadd.f32 %v1229, %v1293
      %1295 = vmatmul.f32.gmra.mxu0 %v791
      %v1296 = vpop.f32.mrf.mxu0
      %v1297 = vadd.f32 %v1232, %v1296
      %1298 = vmatmul.f32.gmra.mxu0 %v793
      %v1299 = vpop.f32.mrf.mxu0
      %v1300 = vadd.f32 %v1235, %v1299
      %1301 = vmatmul.f32.gmra.mxu0 %v796
      %v1302 = vpop.f32.mrf.mxu0
      %v1303 = vadd.f32 %v1238, %v1302
      %1304 = vmatmul.f32.gmra.mxu0 %v798
      %v1305 = vpop.f32.mrf.mxu0
      %v1306 = vadd.f32 %v1241, %v1305
      %1307 = vmatmul.f32.gmra.mxu0 %v801
      %v1308 = vpop.f32.mrf.mxu0
      %v1309 = vadd.f32 %v1244, %v1308
      %1310 = vmatmul.f32.gmra.mxu0 %v803
      %v1311 = vpop.f32.mrf.mxu0
      %v1312 = vadd.f32 %v1247, %v1311
      %1313 = vmatmul.f32.gmra.mxu0 %v806
      %v1314 = vpop.f32.mrf.mxu0
      %v1315 = vadd.f32 %v1250, %v1314
      %1316 = vmatmul.f32.gmra.mxu0 %v808
      %v1317 = vpop.f32.mrf.mxu0
      %v1318 = vadd.f32 %v1253, %v1317
      %1319 = vdwg.mxu0
      %1320 = vmatpush.msra.mxu0 %v929
      %1321 = vmatpush.msra.mxu0 %v928
      %1322 = vmatpush.msra.mxu0 %v927
      %1323 = vmatpush.msra.mxu0 %v926
      %1324 = vmatpush.msra.mxu0 %v925
      %1325 = vmatpush.msra.mxu0 %v924
      %1326 = vmatpush.msra.mxu0 %v923
      %1327 = vmatpush.msra.mxu0 %v922
      %1328 = vmatpush.msra.mxu0 %v921
      %1329 = vmatpush.msra.mxu0 %v920
      %1330 = vmatpush.msra.mxu0 %v919
      %1331 = vmatpush.msra.mxu0 %v918
      %1332 = vmatpush.msra.mxu0 %v917
      %1333 = vmatpush.msra.mxu0 %v916
      %1334 = vmatpush.msra.mxu0 %v915
      %1335 = vmatpush.msra.mxu0 %v914
      %1336 = vmatmul.f32.gmra.mxu0 %v828
      %v1337 = vpop.f32.mrf.mxu0
      %v1338 = vadd.f32 %v1273, %v1337
      %1339 = vmatmul.f32.gmra.mxu0 %v830
      %v1340 = vpop.f32.mrf.mxu0
      %v1341 = vadd.f32 %v1276, %v1340
      %1342 = vmatmul.f32.gmra.mxu0 %v833
      %v1343 = vpop.f32.mrf.mxu0
      %v1344 = vadd.f32 %v1279, %v1343
      %1345 = vmatmul.f32.gmra.mxu0 %v835
      %v1346 = vpop.f32.mrf.mxu0
      %v1347 = vadd.f32 %v1282, %v1346
      %1348 = vmatmul.f32.gmra.mxu0 %v838
      %v1349 = vpop.f32.mrf.mxu0
      %v1350 = vadd.f32 %v1285, %v1349
      %1351 = vmatmul.f32.gmra.mxu0 %v840
      %v1352 = vpop.f32.mrf.mxu0
      %v1353 = vadd.f32 %v1288, %v1352
      %1354 = vmatmul.f32.gmra.mxu0 %v843
      %v1355 = vpop.f32.mrf.mxu0
      %v1356 = vadd.f32 %v1291, %v1355
      %1357 = vmatmul.f32.gmra.mxu0 %v845
      %v1358 = vpop.f32.mrf.mxu0
      %v1359 = vadd.f32 %v1294, %v1358
      %1360 = vmatmul.f32.gmra.mxu0 %v848
      %v1361 = vpop.f32.mrf.mxu0
      %v1362 = vadd.f32 %v1297, %v1361
      %1363 = vmatmul.f32.gmra.mxu0 %v850
      %v1364 = vpop.f32.mrf.mxu0
      %v1365 = vadd.f32 %v1300, %v1364
      %1366 = vmatmul.f32.gmra.mxu0 %v853
      %v1367 = vpop.f32.mrf.mxu0
      %v1368 = vadd.f32 %v1303, %v1367
      %1369 = vmatmul.f32.gmra.mxu0 %v855
      %v1370 = vpop.f32.mrf.mxu0
      %v1371 = vadd.f32 %v1306, %v1370
      %1372 = vmatmul.f32.gmra.mxu0 %v858
      %v1373 = vpop.f32.mrf.mxu0
      %v1374 = vadd.f32 %v1309, %v1373
      %1375 = vmatmul.f32.gmra.mxu0 %v860
      %v1376 = vpop.f32.mrf.mxu0
      %v1377 = vadd.f32 %v1312, %v1376
      %1378 = vmatmul.f32.gmra.mxu0 %v863
      %v1379 = vpop.f32.mrf.mxu0
      %v1380 = vadd.f32 %v1315, %v1379
      %1381 = vmatmul.f32.gmra.mxu0 %v865
      %v1382 = vpop.f32.mrf.mxu0
      %v1383 = vadd.f32 %v1318, %v1382
      %1384 = vdwg.mxu0
      %v1387 = vrot.slane %v741, 1
      %v1388 = vrot.slane %v701, 1
      %v1389 = vsel %vm768, %v1387, %v1388
      %v1390 = vrot.slane %v751, 1
      %v1391 = vsel %vm768, %v1388, %v1390
      %v1394 = vrot.slane %v741, 2
      %v1395 = vrot.slane %v701, 2
      %v1396 = vsel %vm825, %v1394, %v1395
      %v1397 = vrot.slane %v751, 2
      %v1398 = vsel %vm825, %v1395, %v1397
      %s1401 = scalar_lea.vmem %s5, 768
      %v1402 = vld [vmem:[%s1401] sm:$0xff]
      %v1403 = vld [vmem:[%s1401 + $0x8] sm:$0xff]
      %v1404 = vld [vmem:[%s1401 + $0x10] sm:$0xff]
      %v1405 = vld [vmem:[%s1401 + $0x18] sm:$0xff]
      %v1406 = vld [vmem:[%s1401 + $0x20] sm:$0xff]
      %v1407 = vld [vmem:[%s1401 + $0x28] sm:$0xff]
      %v1408 = vld [vmem:[%s1401 + $0x30] sm:$0xff]
      %v1409 = vld [vmem:[%s1401 + $0x38] sm:$0xff]
      %v1410 = vld [vmem:[%s1401 + $0x40] sm:$0xff]
      %v1411 = vld [vmem:[%s1401 + $0x48] sm:$0xff]
      %v1412 = vld [vmem:[%s1401 + $0x50] sm:$0xff]
      %v1413 = vld [vmem:[%s1401 + $0x58] sm:$0xff]
      %v1414 = vld [vmem:[%s1401 + $0x60] sm:$0xff]
      %v1415 = vld [vmem:[%s1401 + $0x68] sm:$0xff]
      %v1416 = vld [vmem:[%s1401 + $0x70] sm:$0xff]
      %v1417 = vld [vmem:[%s1401 + $0x78] sm:$0xff]
      %v1418 = vld [vmem:[%s1401 + $0x80] sm:$0xff]
      %v1419 = vld [vmem:[%s1401 + $0x88] sm:$0xff]
      %v1420 = vld [vmem:[%s1401 + $0x90] sm:$0xff]
      %v1421 = vld [vmem:[%s1401 + $0x98] sm:$0xff]
      %v1422 = vld [vmem:[%s1401 + $0xa0] sm:$0xff]
      %v1423 = vld [vmem:[%s1401 + $0xa8] sm:$0xff]
      %v1424 = vld [vmem:[%s1401 + $0xb0] sm:$0xff]
      %v1425 = vld [vmem:[%s1401 + $0xb8] sm:$0xff]
      %v1426 = vld [vmem:[%s1401 + $0xc0] sm:$0xff]
      %v1427 = vld [vmem:[%s1401 + $0xc8] sm:$0xff]
      %v1428 = vld [vmem:[%s1401 + $0xd0] sm:$0xff]
      %v1429 = vld [vmem:[%s1401 + $0xd8] sm:$0xff]
      %v1430 = vld [vmem:[%s1401 + $0xe0] sm:$0xff]
      %v1431 = vld [vmem:[%s1401 + $0xe8] sm:$0xff]
      %v1432 = vld [vmem:[%s1401 + $0xf0] sm:$0xff]
      %v1433 = vld [vmem:[%s1401 + $0xf8] sm:$0xff]
      %v1434 = vld [vmem:[%s1401 + $0x100] sm:$0xff]
      %v1435 = vld [vmem:[%s1401 + $0x108] sm:$0xff]
      %v1436 = vld [vmem:[%s1401 + $0x110] sm:$0xff]
      %v1437 = vld [vmem:[%s1401 + $0x118] sm:$0xff]
      %v1438 = vld [vmem:[%s1401 + $0x120] sm:$0xff]
      %v1439 = vld [vmem:[%s1401 + $0x128] sm:$0xff]
      %v1440 = vld [vmem:[%s1401 + $0x130] sm:$0xff]
      %v1441 = vld [vmem:[%s1401 + $0x138] sm:$0xff]
      %v1442 = vld [vmem:[%s1401 + $0x140] sm:$0xff]
      %v1443 = vld [vmem:[%s1401 + $0x148] sm:$0xff]
      %v1444 = vld [vmem:[%s1401 + $0x150] sm:$0xff]
      %v1445 = vld [vmem:[%s1401 + $0x158] sm:$0xff]
      %v1446 = vld [vmem:[%s1401 + $0x160] sm:$0xff]
      %v1447 = vld [vmem:[%s1401 + $0x168] sm:$0xff]
      %v1448 = vld [vmem:[%s1401 + $0x170] sm:$0xff]
      %v1449 = vld [vmem:[%s1401 + $0x178] sm:$0xff]
      %1450 = vmatpush.msra.mxu0 %v1417
      %1451 = vmatpush.msra.mxu0 %v1416
      %1452 = vmatpush.msra.mxu0 %v1415
      %1453 = vmatpush.msra.mxu0 %v1414
      %1454 = vmatpush.msra.mxu0 %v1413
      %1455 = vmatpush.msra.mxu0 %v1412
      %1456 = vmatpush.msra.mxu0 %v1411
      %1457 = vmatpush.msra.mxu0 %v1410
      %1458 = vmatpush.msra.mxu0 %v1409
      %1459 = vmatpush.msra.mxu0 %v1408
      %1460 = vmatpush.msra.mxu0 %v1407
      %1461 = vmatpush.msra.mxu0 %v1406
      %1462 = vmatpush.msra.mxu0 %v1405
      %1463 = vmatpush.msra.mxu0 %v1404
      %1464 = vmatpush.msra.mxu0 %v1403
      %1465 = vmatpush.msra.mxu0 %v1402
      %1466 = vmatmul.f32.gmra.mxu0 %v734
      %v1467 = vpop.f32.mrf.mxu0
      %v1468 = vadd.f32 0.0, %v1467
      %1469 = vmatmul.f32.gmra.mxu0 %v680
      %v1470 = vpop.f32.mrf.mxu0
      %v1471 = vadd.f32 0.0, %v1470
      %1472 = vmatmul.f32.gmra.mxu0 %v735
      %v1473 = vpop.f32.mrf.mxu0
      %v1474 = vadd.f32 0.0, %v1473
      %1475 = vmatmul.f32.gmra.mxu0 %v683
      %v1476 = vpop.f32.mrf.mxu0
      %v1477 = vadd.f32 0.0, %v1476
      %1478 = vmatmul.f32.gmra.mxu0 %v736
      %v1479 = vpop.f32.mrf.mxu0
      %v1480 = vadd.f32 0.0, %v1479
      %1481 = vmatmul.f32.gmra.mxu0 %v686
      %v1482 = vpop.f32.mrf.mxu0
      %v1483 = vadd.f32 0.0, %v1482
      %1484 = vmatmul.f32.gmra.mxu0 %v737
      %v1485 = vpop.f32.mrf.mxu0
      %v1486 = vadd.f32 0.0, %v1485
      %1487 = vmatmul.f32.gmra.mxu0 %v689
      %v1488 = vpop.f32.mrf.mxu0
      %v1489 = vadd.f32 0.0, %v1488
      %1490 = vmatmul.f32.gmra.mxu0 %v738
      %v1491 = vpop.f32.mrf.mxu0
      %v1492 = vadd.f32 0.0, %v1491
      %1493 = vmatmul.f32.gmra.mxu0 %v692
      %v1494 = vpop.f32.mrf.mxu0
      %v1495 = vadd.f32 0.0, %v1494
      %1496 = vmatmul.f32.gmra.mxu0 %v739
      %v1497 = vpop.f32.mrf.mxu0
      %v1498 = vadd.f32 0.0, %v1497
      %1499 = vmatmul.f32.gmra.mxu0 %v695
      %v1500 = vpop.f32.mrf.mxu0
      %v1501 = vadd.f32 0.0, %v1500
      %1502 = vmatmul.f32.gmra.mxu0 %v740
      %v1503 = vpop.f32.mrf.mxu0
      %v1504 = vadd.f32 0.0, %v1503
      %1505 = vmatmul.f32.gmra.mxu0 %v698
      %v1506 = vpop.f32.mrf.mxu0
      %v1507 = vadd.f32 0.0, %v1506
      %1508 = vmatmul.f32.gmra.mxu0 %v741
      %v1509 = vpop.f32.mrf.mxu0
      %v1510 = vadd.f32 0.0, %v1509
      %1511 = vmatmul.f32.gmra.mxu0 %v701
      %v1512 = vpop.f32.mrf.mxu0
      %v1513 = vadd.f32 0.0, %v1512
      %1514 = vdwg.mxu0
      %1515 = vmatpush.msra.mxu0 %v1433
      %1516 = vmatpush.msra.mxu0 %v1432
      %1517 = vmatpush.msra.mxu0 %v1431
      %1518 = vmatpush.msra.mxu0 %v1430
      %1519 = vmatpush.msra.mxu0 %v1429
      %1520 = vmatpush.msra.mxu0 %v1428
      %1521 = vmatpush.msra.mxu0 %v1427
      %1522 = vmatpush.msra.mxu0 %v1426
      %1523 = vmatpush.msra.mxu0 %v1425
      %1524 = vmatpush.msra.mxu0 %v1424
      %1525 = vmatpush.msra.mxu0 %v1423
      %1526 = vmatpush.msra.mxu0 %v1422
      %1527 = vmatpush.msra.mxu0 %v1421
      %1528 = vmatpush.msra.mxu0 %v1420
      %1529 = vmatpush.msra.mxu0 %v1419
      %1530 = vmatpush.msra.mxu0 %v1418
      %1531 = vmatmul.f32.gmra.mxu0 %v781
      %v1532 = vpop.f32.mrf.mxu0
      %v1533 = vadd.f32 %v1468, %v1532
      %1534 = vmatmul.f32.gmra.mxu0 %v783
      %v1535 = vpop.f32.mrf.mxu0
      %v1536 = vadd.f32 %v1471, %v1535
      %1537 = vmatmul.f32.gmra.mxu0 %v786
      %v1538 = vpop.f32.mrf.mxu0
      %v1539 = vadd.f32 %v1474, %v1538
      %1540 = vmatmul.f32.gmra.mxu0 %v788
      %v1541 = vpop.f32.mrf.mxu0
      %v1542 = vadd.f32 %v1477, %v1541
      %1543 = vmatmul.f32.gmra.mxu0 %v791
      %v1544 = vpop.f32.mrf.mxu0
      %v1545 = vadd.f32 %v1480, %v1544
      %1546 = vmatmul.f32.gmra.mxu0 %v793
      %v1547 = vpop.f32.mrf.mxu0
      %v1548 = vadd.f32 %v1483, %v1547
      %1549 = vmatmul.f32.gmra.mxu0 %v796
      %v1550 = vpop.f32.mrf.mxu0
      %v1551 = vadd.f32 %v1486, %v1550
      %1552 = vmatmul.f32.gmra.mxu0 %v798
      %v1553 = vpop.f32.mrf.mxu0
      %v1554 = vadd.f32 %v1489, %v1553
      %1555 = vmatmul.f32.gmra.mxu0 %v801
      %v1556 = vpop.f32.mrf.mxu0
      %v1557 = vadd.f32 %v1492, %v1556
      %1558 = vmatmul.f32.gmra.mxu0 %v803
      %v1559 = vpop.f32.mrf.mxu0
      %v1560 = vadd.f32 %v1495, %v1559
      %1561 = vmatmul.f32.gmra.mxu0 %v806
      %v1562 = vpop.f32.mrf.mxu0
      %v1563 = vadd.f32 %v1498, %v1562
      %1564 = vmatmul.f32.gmra.mxu0 %v808
      %v1565 = vpop.f32.mrf.mxu0
      %v1566 = vadd.f32 %v1501, %v1565
      %1567 = vmatmul.f32.gmra.mxu0 %v934
      %v1568 = vpop.f32.mrf.mxu0
      %v1569 = vadd.f32 %v1504, %v1568
      %1570 = vmatmul.f32.gmra.mxu0 %v936
      %v1571 = vpop.f32.mrf.mxu0
      %v1572 = vadd.f32 %v1507, %v1571
      %1573 = vmatmul.f32.gmra.mxu0 %v1389
      %v1574 = vpop.f32.mrf.mxu0
      %v1575 = vadd.f32 %v1510, %v1574
      %1576 = vmatmul.f32.gmra.mxu0 %v1391
      %v1577 = vpop.f32.mrf.mxu0
      %v1578 = vadd.f32 %v1513, %v1577
      %1579 = vdwg.mxu0
      %1580 = vmatpush.msra.mxu0 %v1449
      %1581 = vmatpush.msra.mxu0 %v1448
      %1582 = vmatpush.msra.mxu0 %v1447
      %1583 = vmatpush.msra.mxu0 %v1446
      %1584 = vmatpush.msra.mxu0 %v1445
      %1585 = vmatpush.msra.mxu0 %v1444
      %1586 = vmatpush.msra.mxu0 %v1443
      %1587 = vmatpush.msra.mxu0 %v1442
      %1588 = vmatpush.msra.mxu0 %v1441
      %1589 = vmatpush.msra.mxu0 %v1440
      %1590 = vmatpush.msra.mxu0 %v1439
      %1591 = vmatpush.msra.mxu0 %v1438
      %1592 = vmatpush.msra.mxu0 %v1437
      %1593 = vmatpush.msra.mxu0 %v1436
      %1594 = vmatpush.msra.mxu0 %v1435
      %1595 = vmatpush.msra.mxu0 %v1434
      %1596 = vmatmul.f32.gmra.mxu0 %v838
      %v1597 = vpop.f32.mrf.mxu0
      %v1598 = vadd.f32 %v1533, %v1597
      %1599 = vmatmul.f32.gmra.mxu0 %v840
      %v1600 = vpop.f32.mrf.mxu0
      %v1601 = vadd.f32 %v1536, %v1600
      %1602 = vmatmul.f32.gmra.mxu0 %v843
      %v1603 = vpop.f32.mrf.mxu0
      %v1604 = vadd.f32 %v1539, %v1603
      %1605 = vmatmul.f32.gmra.mxu0 %v845
      %v1606 = vpop.f32.mrf.mxu0
      %v1607 = vadd.f32 %v1542, %v1606
      %1608 = vmatmul.f32.gmra.mxu0 %v848
      %v1609 = vpop.f32.mrf.mxu0
      %v1610 = vadd.f32 %v1545, %v1609
      %1611 = vmatmul.f32.gmra.mxu0 %v850
      %v1612 = vpop.f32.mrf.mxu0
      %v1613 = vadd.f32 %v1548, %v1612
      %1614 = vmatmul.f32.gmra.mxu0 %v853
      %v1615 = vpop.f32.mrf.mxu0
      %v1616 = vadd.f32 %v1551, %v1615
      %1617 = vmatmul.f32.gmra.mxu0 %v855
      %v1618 = vpop.f32.mrf.mxu0
      %v1619 = vadd.f32 %v1554, %v1618
      %1620 = vmatmul.f32.gmra.mxu0 %v858
      %v1621 = vpop.f32.mrf.mxu0
      %v1622 = vadd.f32 %v1557, %v1621
      %1623 = vmatmul.f32.gmra.mxu0 %v860
      %v1624 = vpop.f32.mrf.mxu0
      %v1625 = vadd.f32 %v1560, %v1624
      %1626 = vmatmul.f32.gmra.mxu0 %v863
      %v1627 = vpop.f32.mrf.mxu0
      %v1628 = vadd.f32 %v1563, %v1627
      %1629 = vmatmul.f32.gmra.mxu0 %v865
      %v1630 = vpop.f32.mrf.mxu0
      %v1631 = vadd.f32 %v1566, %v1630
      %1632 = vmatmul.f32.gmra.mxu0 %v941
      %v1633 = vpop.f32.mrf.mxu0
      %v1634 = vadd.f32 %v1569, %v1633
      %1635 = vmatmul.f32.gmra.mxu0 %v943
      %v1636 = vpop.f32.mrf.mxu0
      %v1637 = vadd.f32 %v1572, %v1636
      %1638 = vmatmul.f32.gmra.mxu0 %v1396
      %v1639 = vpop.f32.mrf.mxu0
      %v1640 = vadd.f32 %v1575, %v1639
      %1641 = vmatmul.f32.gmra.mxu0 %v1398
      %v1642 = vpop.f32.mrf.mxu0
      %v1643 = vadd.f32 %v1578, %v1642
      %1644 = vdwg.mxu0
      %v1645 = vadd.f32 %v1338, %v1598
      %v1646 = vadd.f32 %v1341, %v1601
      %v1647 = vadd.f32 %v1344, %v1604
      %v1648 = vadd.f32 %v1347, %v1607
      %v1649 = vadd.f32 %v1350, %v1610
      %v1650 = vadd.f32 %v1353, %v1613
      %v1651 = vadd.f32 %v1356, %v1616
      %v1652 = vadd.f32 %v1359, %v1619
      %v1653 = vadd.f32 %v1362, %v1622
      %v1654 = vadd.f32 %v1365, %v1625
      %v1655 = vadd.f32 %v1368, %v1628
      %v1656 = vadd.f32 %v1371, %v1631
      %v1657 = vadd.f32 %v1374, %v1634
      %v1658 = vadd.f32 %v1377, %v1637
      %v1659 = vadd.f32 %v1380, %v1640
      %v1660 = vadd.f32 %v1383, %v1643
      %1661 = vst [vmem:[%s495] sm:$0xff] %v1645
      %1662 = vst [vmem:[%s495 + $0x8] sm:$0xff] %v1646
      %1663 = vst [vmem:[%s495 + $0x10] sm:$0xff] %v1647
      %1664 = vst [vmem:[%s495 + $0x18] sm:$0xff] %v1648
      %1665 = vst [vmem:[%s495 + $0x20] sm:$0xff] %v1649
      %1666 = vst [vmem:[%s495 + $0x28] sm:$0xff] %v1650
      %1667 = vst [vmem:[%s495 + $0x30] sm:$0xff] %v1651
      %1668 = vst [vmem:[%s495 + $0x38] sm:$0xff] %v1652
      %1669 = vst [vmem:[%s495 + $0x40] sm:$0xff] %v1653
      %1670 = vst [vmem:[%s495 + $0x48] sm:$0xff] %v1654
      %1671 = vst [vmem:[%s495 + $0x50] sm:$0xff] %v1655
      %1672 = vst [vmem:[%s495 + $0x58] sm:$0xff] %v1656
      %1673 = vst [vmem:[%s495 + $0x60] sm:$0xff] %v1657
      %1674 = vst [vmem:[%s495 + $0x68] sm:$0xff] %v1658
      %1675 = vst [vmem:[%s495 + $0x70] sm:$0xff] %v1659
      %1676 = vst [vmem:[%s495 + $0x78] sm:$0xff] %v1660
      %v1677 = vadd.f32 %v1645, %v1646
      %v1678 = vadd.f32 %v1677, %v1647
      %v1679 = vadd.f32 %v1678, %v1648
      %v1680 = vadd.f32 %v1679, %v1649
      %v1681 = vadd.f32 %v1680, %v1650
      %v1682 = vadd.f32 %v1681, %v1651
      %v1683 = vadd.f32 %v1682, %v1652
      %v1684 = vadd.f32 %v1683, %v1653
      %v1685 = vadd.f32 %v1684, %v1654
      %v1686 = vadd.f32 %v1685, %v1655
      %v1687 = vadd.f32 %v1686, %v1656
      %v1688 = vadd.f32 %v1687, %v1657
      %v1689 = vadd.f32 %v1688, %v1658
      %v1690 = vadd.f32 %v1689, %v1659
      %v1691 = vadd.f32 %v1690, %v1660
      %v1692 = vrot.slane %v1691, 4
      %v1693 = vadd.f32 %v1691, %v1692
      %v1694 = vrot.slane %v1693, 2
      %v1695 = vadd.f32 %v1693, %v1694
      %v1696 = vrot.slane %v1695, 1
      %v1697 = vadd.f32 %v1695, %v1696
      %1698 = vst [vmem:[%s503] sm:$0x1] %v1697
      %v1699 = vmul.f32 %v1645, %v1645
      %v1700 = vmul.f32 %v1646, %v1646
      %v1701 = vmul.f32 %v1647, %v1647
      %v1702 = vmul.f32 %v1648, %v1648
      %v1703 = vmul.f32 %v1649, %v1649
      %v1704 = vmul.f32 %v1650, %v1650
      %v1705 = vmul.f32 %v1651, %v1651
      %v1706 = vmul.f32 %v1652, %v1652
      %v1707 = vmul.f32 %v1653, %v1653
      %v1708 = vmul.f32 %v1654, %v1654
      %v1709 = vmul.f32 %v1655, %v1655
      %v1710 = vmul.f32 %v1656, %v1656
      %v1711 = vmul.f32 %v1657, %v1657
      %v1712 = vmul.f32 %v1658, %v1658
      %v1713 = vmul.f32 %v1659, %v1659
      %v1714 = vmul.f32 %v1660, %v1660
      %v1715 = vadd.f32 %v1699, %v1700
      %v1716 = vadd.f32 %v1715, %v1701
      %v1717 = vadd.f32 %v1716, %v1702
      %v1718 = vadd.f32 %v1717, %v1703
      %v1719 = vadd.f32 %v1718, %v1704
      %v1720 = vadd.f32 %v1719, %v1705
      %v1721 = vadd.f32 %v1720, %v1706
      %v1722 = vadd.f32 %v1721, %v1707
      %v1723 = vadd.f32 %v1722, %v1708
      %v1724 = vadd.f32 %v1723, %v1709
      %v1725 = vadd.f32 %v1724, %v1710
      %v1726 = vadd.f32 %v1725, %v1711
      %v1727 = vadd.f32 %v1726, %v1712
      %v1728 = vadd.f32 %v1727, %v1713
      %v1729 = vadd.f32 %v1728, %v1714
      %v1730 = vrot.slane %v1729, 4
      %v1731 = vadd.f32 %v1729, %v1730
      %v1732 = vrot.slane %v1731, 2
      %v1733 = vadd.f32 %v1731, %v1732
      %v1734 = vrot.slane %v1733, 1
      %v1735 = vadd.f32 %v1733, %v1734
      %1736 = vst [vmem:[%s510] sm:$0x1] %v1735
      %s1737 = smul.u32 8, %s25
      %p1738 = scmp.lt.s32.totalorder %s24, 1
      %s1739 = scalar_select %p1738, %s24, 1
      %p1740 = scmp.lt.s32.totalorder %s1737, 15
      %s1741 = scalar_select %p1740, %s1737, 15
      %s1742 = smul.addr %s1741, 2
      %s1743 = smul.addr %s1739, 32
      %s1744 = sadd.s32 %s1742, %s1743
      %s1745 = smul.addr %s1744, 8
      %s1746 = scalar_lea.vmem %s6, %s1745
      %p1747 = scmp.lt.s32.totalorder %s24, 1
      %s1748 = scalar_select %p1747, %s24, 1
      %p1749 = scmp.lt.s32.totalorder %s25, 1
      %s1750 = scalar_select %p1749, %s25, 1
      %s1751 = smul.addr %s1748, 2
      %s1752 = sadd.s32 %s1750, %s1751
      %s1753 = scalar_lea.vmem %s7, %s1752
      %p1754 = scmp.lt.s32.totalorder %s24, 1
      %s1755 = scalar_select %p1754, %s24, 1
      %p1756 = scmp.lt.s32.totalorder %s25, 1
      %s1757 = scalar_select %p1756, %s25, 1
      %s1758 = smul.addr %s1755, 2
      %s1759 = sadd.s32 %s1757, %s1758
      %s1760 = scalar_lea.vmem %s8, %s1759
      // Predicated region
      $region45: #{_lambda_.5} parent=43 // pred_check
        %p1761 = pneg %p215
      $region46: #{_lambda_.5} parent=43 // pred_check_branch
        %1763 = sbr.rel (%p1761) target = $region48
      $region47: #{_lambda_.5} parent=43 // pred_region
        %s1764 = smul.u32 8, %s25
      $region48: #{_lambda_.5} parent=43 // pred_fallthru
        _
      // Predicated region
      $region49: #{_lambda_.5} parent=43 // pred_check
        %p1765 = pneg %p243
      $region50: #{_lambda_.5} parent=43 // pred_check_branch
        %1767 = sbr.rel (%p1765) target = $region52
      $region51: #{_lambda_.5} parent=43 // pred_region
        _
      $region52: #{_lambda_.5} parent=43 // pred_fallthru
        _
      // Predicated region
      $region53: #{_lambda_.5} parent=43 // pred_check
        %p1768 = pneg %p271
      $region54: #{_lambda_.5} parent=43 // pred_check_branch
        %1770 = sbr.rel (%p1768) target = $region56
      $region55: #{_lambda_.5} parent=43 // pred_region
        _
      $region56: #{_lambda_.5} parent=43 // pred_fallthru
        _
    $region44: #{_lambda_.5} parent=5 // pred_fallthru
      _
    %p1771 = scmp.le.s32.totalorder 2, %s15
    // Predicated region
    $region57: #{_lambda_.5} parent=5 // pred_check
      %p1772 = pneg %p1771
    $region58: #{_lambda_.5} parent=5 // pred_check_branch
      %1774 = sbr.rel (%p1772) target = $region60
    $region59: #{_lambda_.5} parent=5 // pred_region
      %s1775 = ssub.s32 %s15, 2
      // Predicated region
      $region61: #{_lambda_.5} parent=59 // pred_check
        %p1776 = pneg %p221
      $region62: #{_lambda_.5} parent=59 // pred_check_branch
        %1778 = sbr.rel (%p1776) target = $region64
      $region63: #{_lambda_.5} parent=59 // pred_region
        %s1779 = smul.u32 8, %s27
        %p1780 = scmp.lt.s32.totalorder %s26, 1
        %s1781 = scalar_select %p1780, %s26, 1
        %p1782 = scmp.lt.s32.totalorder %s1779, 15
        %s1783 = scalar_select %p1782, %s1779, 15
        %s1784 = smul.addr %s1783, 2
        %s1785 = smul.addr %s1781, 32
        %s1786 = sadd.s32 %s1784, %s1785
        %s1787 = smul.addr %s1786, 8
        %s1788 = scalar_lea.vmem %s6, %s1787
      $region64: #{_lambda_.5} parent=59 // pred_fallthru
        _
      // Predicated region
      $region65: #{_lambda_.5} parent=59 // pred_check
        %p1789 = pneg %p249
      $region66: #{_lambda_.5} parent=59 // pred_check_branch
        %1791 = sbr.rel (%p1789) target = $region68
      $region67: #{_lambda_.5} parent=59 // pred_region
        %p1792 = scmp.lt.s32.totalorder %s26, 1
        %s1793 = scalar_select %p1792, %s26, 1
        %p1794 = scmp.lt.s32.totalorder %s27, 1
        %s1795 = scalar_select %p1794, %s27, 1
        %s1796 = smul.addr %s1793, 2
        %s1797 = sadd.s32 %s1795, %s1796
        %s1798 = scalar_lea.vmem %s7, %s1797
      $region68: #{_lambda_.5} parent=59 // pred_fallthru
        _
      // Predicated region
      $region69: #{_lambda_.5} parent=59 // pred_check
        %p1799 = pneg %p277
      $region70: #{_lambda_.5} parent=59 // pred_check_branch
        %1801 = sbr.rel (%p1799) target = $region72
      $region71: #{_lambda_.5} parent=59 // pred_region
        %p1802 = scmp.lt.s32.totalorder %s26, 1
        %s1803 = scalar_select %p1802, %s26, 1
        %p1804 = scmp.lt.s32.totalorder %s27, 1
        %s1805 = scalar_select %p1804, %s27, 1
        %s1806 = smul.addr %s1803, 2
        %s1807 = sadd.s32 %s1805, %s1806
        %s1808 = scalar_lea.vmem %s8, %s1807
      $region72: #{_lambda_.5} parent=59 // pred_fallthru
        _
    $region60: #{_lambda_.5} parent=5 // pred_fallthru
      _
  $region6: #{_lambda_.5} parent=0 // loop_footer
    %s19 = sadd.s32 1, %s15
  $region7: #{_lambda_.5} parent=0 // loop_footer_branch
    %14 = sbr.rel target = $region3
  $region8: #{_lambda_.5} parent=0 // loop_exit
    _

</llo_original>
